<compile_context>
chip_gen: v7x
topology: tpu7x:2x2x1
jax: 0.10.0
libtpu: 0.0.40
codegen_flags: <defaults>
</compile_context>

<pallas_src>
import numpy as np
import jax
import jax.numpy as jnp
from jax.experimental import pallas as pl
from jax.experimental.pallas import tpu as pltpu

NUM_CLASSES = 10
C_OUT = 3
K = 5
H_IN = 28
H_CONV = H_IN - K + 1        # 24
H_POOL = H_CONV // 2         # 12
S = H_POOL * H_POOL          # 144 pooled spatial positions
P_PIX = H_IN * H_IN          # 784 raw pixels per image
P_PAD = 896                  # 7 * 128 lanes (pixel axis, zero padded)
N_GEMM = C_OUT * S           # 432 real conv-GEMM outputs, index c*144 + s
N_PAD = 512                  # 4 * 128 lanes (conv-GEMM output, zero padded)
N_OUT = 128                  # fc output padded to a full lane tile (10 -> 128)


def lenet_kernel(x_ref, ws_ref, bc_ref, wf_ref, bf_ref, out_ref):
    # x_ref : (TB, 896)      bf16  raw images, lane = pixel r*28+c (zero padded)
    # ws_ref: (4, 896, 512)  bf16  per-pool-offset folded conv weights
    # bc_ref: (1, 512)       f32   conv bias broadcast over s (index c*144+s)
    # wf_ref: (512, 128)     bf16  fc1 weight^T, zero padded rows/cols
    # bf_ref: (1, 128)       f32   fc1 bias, zero padded
    # out_ref: (TB, 128)     f32
    x = x_ref[...]
    pooled = jnp.dot(x, ws_ref[0], preferred_element_type=jnp.float32)
    for d in range(1, 4):                                  # 2x2 max-pool offsets
        pooled = jnp.maximum(
            pooled, jnp.dot(x, ws_ref[d], preferred_element_type=jnp.float32))
    # conv bias + ReLU (both commute with the per-channel max over offsets)
    act = jnp.maximum(pooled + bc_ref[...], 0.0)           # (TB, 512) lane-dense
    y = jnp.dot(act.astype(jnp.bfloat16), wf_ref[...],
                preferred_element_type=jnp.float32) + bf_ref[...]   # (TB, 128)
    out_ref[...] = jnp.maximum(y, 0.0)                     # full-width unmasked store


def _fold_conv_weight(w_conv):
    """(3,1,5,5) conv weight -> (4, 896, 512) bf16, ws[d, p, c*144+s]."""
    ii, jj = np.meshgrid(np.arange(H_POOL), np.arange(H_POOL), indexing="ij")
    s_idx = (ii * H_POOL + jj).reshape(-1)                       # (144,)
    col_idx = (np.arange(C_OUT)[:, None, None] * S
               + s_idx[None, None, :])                            # (3, 1, 144)
    col_idx = np.broadcast_to(col_idx, (C_OUT, K * K, S)).reshape(-1)
    w2 = w_conv.reshape(C_OUT, K * K).astype(jnp.float32)        # (3, 25)
    vals = jnp.broadcast_to(w2[:, :, None], (C_OUT, K * K, S)).reshape(-1)
    mats = []
    for di in range(2):
        for dj in range(2):
            rows = np.zeros((K * K, S), np.int32)                # static index table
            for kh in range(K):
                for kw in range(K):
                    p = (2 * ii + di + kh) * H_IN + (2 * jj + dj + kw)
                    rows[kh * K + kw] = p.reshape(-1)
            row_idx = np.broadcast_to(rows[None], (C_OUT, K * K, S)).reshape(-1)
            ws = jnp.zeros((P_PAD, N_PAD), jnp.float32).at[row_idx, col_idx].add(vals)
            mats.append(ws)
    return jnp.stack(mats, axis=0).astype(jnp.bfloat16)          # (4, 896, 512)


def lenet_forward(x, w_conv, b_conv, w_fc, b_fc, *, tb=512):
    """x: (B, 1, 28, 28) float32 NCHW.  Returns (B, 10) float32."""
    B = x.shape[0]
    B_ceil = 16 * pl.cdiv(B, 16)                 # TB multiple of 16 (bf16 packing)
    TB = min(tb, B_ceil)
    if TB == B_ceil and TB >= 32:                # >=2 grid steps -> both v7x TCs busy
        TB = 16 * pl.cdiv(TB // 2, 16)
    B_pad = TB * pl.cdiv(B, TB)

    # glue (pure data movement): flatten, cast to bf16 BEFORE materializing, pad
    xi = x[:, 0].reshape(B, P_PIX).astype(jnp.bfloat16)
    xi = jnp.pad(xi, ((0, B_pad - B), (0, P_PAD - P_PIX)))       # (B_pad, 896)

    # parameter layout
    ws = _fold_conv_weight(w_conv)                                # (4, 896, 512) bf16
    bc = jnp.zeros((1, N_PAD), jnp.float32).at[0, :N_GEMM].set(
        jnp.repeat(b_conv.astype(jnp.float32), S))                # (1, 512)
    wf = jnp.zeros((N_PAD, N_OUT), jnp.float32).at[:N_GEMM, :NUM_CLASSES].set(
        w_fc.astype(jnp.float32).T).astype(jnp.bfloat16)          # (512, 128)
    bf = jnp.zeros((1, N_OUT), jnp.float32).at[0, :NUM_CLASSES].set(
        b_fc.astype(jnp.float32))                                 # (1, 128)

    out = pl.pallas_call(
        lenet_kernel,
        out_shape=jax.ShapeDtypeStruct((B_pad, N_OUT), jnp.float32),
        grid_spec=pltpu.PrefetchScalarGridSpec(
            num_scalar_prefetch=0,
            grid=(B_pad // TB,),
            in_specs=[
                pl.BlockSpec((TB, P_PAD), lambda i: (i, 0)),
                pl.BlockSpec((4, P_PAD, N_PAD), lambda i: (0, 0, 0)),
                pl.BlockSpec((1, N_PAD), lambda i: (0, 0)),
                pl.BlockSpec((N_PAD, N_OUT), lambda i: (0, 0)),
                pl.BlockSpec((1, N_OUT), lambda i: (0, 0)),
            ],
            out_specs=pl.BlockSpec((TB, N_OUT), lambda i: (i, 0)),
        ),
        compiler_params=pltpu.CompilerParams(
            dimension_semantics=("parallel",),
            vmem_limit_bytes=32 * 1024 * 1024,   # ~13 MiB working set + headroom; fits v7x
        ),
    )(xi, ws, bc, wf, bf)
    return out[:B, :NUM_CLASSES]


def lenet_reference(x, w_conv, b_conv, w_fc, b_fc):
    """Pure-JAX reference matching the PyTorch forward."""
    conv = jax.lax.conv_general_dilated(
        x, w_conv, window_strides=(1, 1), padding="VALID",
        dimension_numbers=("NCHW", "OIHW", "NCHW"))
    conv = jnp.maximum(conv + b_conv[None, :, None, None], 0.0)
    pooled = jax.lax.reduce_window(conv, -jnp.inf, jax.lax.max,
                                   (1, 1, 2, 2), (1, 1, 2, 2), "VALID")
    flat = pooled.reshape(x.shape[0], -1)                         # (B, 432)
    return jnp.maximum(flat @ w_fc.T + b_fc[None, :], 0.0)


if __name__ == "__main__":
    key = jax.random.PRNGKey(0)
    kx, kw1, kb1, kw2, kb2 = jax.random.split(key, 5)
    B = 2
    # input spatial size is fixed at 28x28 by fc1's in_features = 3*12*12
    x = jax.random.normal(kx, (B, 1, H_IN, H_IN), dtype=jnp.float32)

    # deterministic synthetic parameters (shapes from the module __init__)
    w_conv = jax.random.normal(kw1, (C_OUT, 1, K, K), dtype=jnp.float32) * 0.2
    b_conv = jax.random.normal(kb1, (C_OUT,), dtype=jnp.float32) * 0.1
    w_fc = jax.random.normal(kw2, (NUM_CLASSES, C_OUT * S), dtype=jnp.float32) * 0.05
    b_fc = jax.random.normal(kb2, (NUM_CLASSES,), dtype=jnp.float32) * 0.1

    out = jax.jit(lenet_forward)(x, w_conv, b_conv, w_fc, b_fc)
    out = jax.block_until_ready(out)

    ref = lenet_reference(x, w_conv, b_conv, w_fc, b_fc)
    assert out.shape == (B, NUM_CLASSES), out.shape
    if not jnp.allclose(out, ref, atol=3e-2, rtol=3e-2):
        raise AssertionError(
            f"kernel/reference mismatch, max abs diff = {jnp.max(jnp.abs(out - ref))}")
    print("KERNEL_OK")
</pallas_src>

<mosaic_0001>
module attributes {stable_mosaic.version = 11 : i64} {
  func.func private @main(%arg0: i32) attributes {dimension_semantics = [#tpu.dimension_semantics<core_parallel>], iteration_bounds = array<i64: 2>, tpu.core_type = #tpu.core_type<sc_scalar_subcore>, window_params = []} {
    return
  }
}

module attributes {stable_mosaic.version = 11 : i64} {
  func.func private @main(%arg0: i32) attributes {dimension_semantics = [#tpu.dimension_semantics<core_parallel>], iteration_bounds = array<i64: 2>, tpu.core_type = #tpu.core_type<sc_scalar_subcore>, window_params = []} {
    return
  }
}

module attributes {stable_mosaic.version = 11 : i64} {
  func.func @lenet_kernel(%arg0: i32, %arg1: memref<16x896xbf16, #tpu.memory_space<vmem>>, %arg2: memref<4x896x512xbf16, #tpu.memory_space<vmem>>, %arg3: memref<1x512xf32, #tpu.memory_space<vmem>>, %arg4: memref<512x128xbf16, #tpu.memory_space<vmem>>, %arg5: memref<1x128xf32, #tpu.memory_space<vmem>>, %arg6: memref<16x128xf32, #tpu.memory_space<vmem>>) attributes {dimension_semantics = [#tpu.dimension_semantics<parallel>], iteration_bounds = array<i64: 1>, scalar_prefetch = 0 : i64, scratch_operands = 0 : i64, tpu.core_type = #tpu.core_type<tc>, window_params = [{transform_indices = @transform_0, window_bounds = array<i64: 16, 896>}, {pipeline_mode = #tpu.pipeline_mode<synchronous>, transform_indices = @transform_1, window_bounds = array<i64: 4, 896, 512>}, {pipeline_mode = #tpu.pipeline_mode<synchronous>, transform_indices = @transform_2, window_bounds = array<i64: 1, 512>}, {pipeline_mode = #tpu.pipeline_mode<synchronous>, transform_indices = @transform_3, window_bounds = array<i64: 512, 128>}, {pipeline_mode = #tpu.pipeline_mode<synchronous>, transform_indices = @transform_4, window_bounds = array<i64: 1, 128>}, {transform_indices = @transform_5, window_bounds = array<i64: 16, 128>}]} {
    %c0 = arith.constant 0 : index
    %c0_0 = arith.constant 0 : index
    %0 = vector.load %arg1[%c0, %c0_0] : memref<16x896xbf16, #tpu.memory_space<vmem>>, vector<16x896xbf16>
    %c0_1 = arith.constant 0 : index
    %c0_2 = arith.constant 0 : index
    %c0_3 = arith.constant 0 : index
    %1 = vector.load %arg2[%c0_1, %c0_2, %c0_3] : memref<4x896x512xbf16, #tpu.memory_space<vmem>>, vector<1x896x512xbf16>
    %2 = vector.shape_cast %1 : vector<1x896x512xbf16> to vector<896x512xbf16>
    %cst = arith.constant dense<0.000000e+00> : vector<16x512xf32>
    %3 = tpu.matmul %0, %2, %cst {dimension_numbers = #tpu.dot_dimension_numbers<[1], [0], [0], [1], [0, 0, 1, 1], [], []>} : vector<16x896xbf16>, vector<896x512xbf16>, vector<16x512xf32> -> vector<16x512xf32>
    %c1 = arith.constant 1 : index
    %c0_4 = arith.constant 0 : index
    %c0_5 = arith.constant 0 : index
    %4 = vector.load %arg2[%c1, %c0_4, %c0_5] : memref<4x896x512xbf16, #tpu.memory_space<vmem>>, vector<1x896x512xbf16>
    %5 = vector.shape_cast %4 : vector<1x896x512xbf16> to vector<896x512xbf16>
    %cst_6 = arith.constant dense<0.000000e+00> : vector<16x512xf32>
    %6 = tpu.matmul %0, %5, %cst_6 {dimension_numbers = #tpu.dot_dimension_numbers<[1], [0], [0], [1], [0, 0, 1, 1], [], []>} : vector<16x896xbf16>, vector<896x512xbf16>, vector<16x512xf32> -> vector<16x512xf32>
    %7 = arith.maximumf %3, %6 : vector<16x512xf32>
    %c2 = arith.constant 2 : index
    %c0_7 = arith.constant 0 : index
    %c0_8 = arith.constant 0 : index
    %8 = vector.load %arg2[%c2, %c0_7, %c0_8] : memref<4x896x512xbf16, #tpu.memory_space<vmem>>, vector<1x896x512xbf16>
    %9 = vector.shape_cast %8 : vector<1x896x512xbf16> to vector<896x512xbf16>
    %cst_9 = arith.constant dense<0.000000e+00> : vector<16x512xf32>
    %10 = tpu.matmul %0, %9, %cst_9 {dimension_numbers = #tpu.dot_dimension_numbers<[1], [0], [0], [1], [0, 0, 1, 1], [], []>} : vector<16x896xbf16>, vector<896x512xbf16>, vector<16x512xf32> -> vector<16x512xf32>
    %11 = arith.maximumf %7, %10 : vector<16x512xf32>
    %c3 = arith.constant 3 : index
    %c0_10 = arith.constant 0 : index
    %c0_11 = arith.constant 0 : index
    %12 = vector.load %arg2[%c3, %c0_10, %c0_11] : memref<4x896x512xbf16, #tpu.memory_space<vmem>>, vector<1x896x512xbf16>
    %13 = vector.shape_cast %12 : vector<1x896x512xbf16> to vector<896x512xbf16>
    %cst_12 = arith.constant dense<0.000000e+00> : vector<16x512xf32>
    %14 = tpu.matmul %0, %13, %cst_12 {dimension_numbers = #tpu.dot_dimension_numbers<[1], [0], [0], [1], [0, 0, 1, 1], [], []>} : vector<16x896xbf16>, vector<896x512xbf16>, vector<16x512xf32> -> vector<16x512xf32>
    %15 = arith.maximumf %11, %14 : vector<16x512xf32>
    %c0_13 = arith.constant 0 : index
    %c0_14 = arith.constant 0 : index
    %16 = vector.load %arg3[%c0_13, %c0_14] : memref<1x512xf32, #tpu.memory_space<vmem>>, vector<1x512xf32>
    %17 = vector.broadcast %16 : vector<1x512xf32> to vector<16x512xf32>
    %18 = arith.addf %15, %17 : vector<16x512xf32>
    %cst_15 = arith.constant 0.000000e+00 : f32
    %19 = vector.broadcast %cst_15 : f32 to vector<16x512xf32>
    %20 = arith.maximumf %18, %19 : vector<16x512xf32>
    %21 = arith.truncf %20 : vector<16x512xf32> to vector<16x512xbf16>
    %c0_16 = arith.constant 0 : index
    %c0_17 = arith.constant 0 : index
    %22 = vector.load %arg4[%c0_16, %c0_17] : memref<512x128xbf16, #tpu.memory_space<vmem>>, vector<512x128xbf16>
    %cst_18 = arith.constant dense<0.000000e+00> : vector<16x128xf32>
    %23 = tpu.matmul %21, %22, %cst_18 {dimension_numbers = #tpu.dot_dimension_numbers<[1], [0], [0], [1], [0, 0, 1, 1], [], []>} : vector<16x512xbf16>, vector<512x128xbf16>, vector<16x128xf32> -> vector<16x128xf32>
    %c0_19 = arith.constant 0 : index
    %c0_20 = arith.constant 0 : index
    %24 = vector.load %arg5[%c0_19, %c0_20] : memref<1x128xf32, #tpu.memory_space<vmem>>, vector<1x128xf32>
    %25 = vector.broadcast %24 : vector<1x128xf32> to vector<16x128xf32>
    %26 = arith.addf %23, %25 : vector<16x128xf32>
    %cst_21 = arith.constant 0.000000e+00 : f32
    %27 = vector.broadcast %cst_21 : f32 to vector<16x128xf32>
    %28 = arith.maximumf %26, %27 : vector<16x128xf32>
    %c0_22 = arith.constant 0 : index
    %c0_23 = arith.constant 0 : index
    %29 = vector.load %arg6[%c0_22, %c0_23] : memref<16x128xf32, #tpu.memory_space<vmem>>, vector<16x128xf32>
    tpu.vector_store %arg6[%c0_22, %c0_23], %28 {strides = array<i32>} : memref<16x128xf32, #tpu.memory_space<vmem>>, vector<16x128xf32>,
    return
  }
  func.func @transform_0(%arg0: i32) -> (i32, i32) {
    %c0_i32 = arith.constant 0 : i32
    %c0_i32_0 = arith.constant 0 : i32
    return %arg0, %c0_i32 : i32, i32
  }
  func.func @transform_1(%arg0: i32) -> (i32, i32, i32) {
    %c0_i32 = arith.constant 0 : i32
    %c0_i32_0 = arith.constant 0 : i32
    %c0_i32_1 = arith.constant 0 : i32
    %c0_i32_2 = arith.constant 0 : i32
    return %c0_i32, %c0_i32_0, %c0_i32_1 : i32, i32, i32
  }
  func.func @transform_2(%arg0: i32) -> (i32, i32) {
    %c0_i32 = arith.constant 0 : i32
    %c0_i32_0 = arith.constant 0 : i32
    %c0_i32_1 = arith.constant 0 : i32
    return %c0_i32, %c0_i32_0 : i32, i32
  }
  func.func @transform_3(%arg0: i32) -> (i32, i32) {
    %c0_i32 = arith.constant 0 : i32
    %c0_i32_0 = arith.constant 0 : i32
    %c0_i32_1 = arith.constant 0 : i32
    return %c0_i32, %c0_i32_0 : i32, i32
  }
  func.func @transform_4(%arg0: i32) -> (i32, i32) {
    %c0_i32 = arith.constant 0 : i32
    %c0_i32_0 = arith.constant 0 : i32
    %c0_i32_1 = arith.constant 0 : i32
    return %c0_i32, %c0_i32_0 : i32, i32
  }
  func.func @transform_5(%arg0: i32) -> (i32, i32) {
    %c0_i32 = arith.constant 0 : i32
    %c0_i32_0 = arith.constant 0 : i32
    return %arg0, %c0_i32 : i32, i32
  }
}

</mosaic_0001>

<llo_original>
// kernel: lenet_forward.1
$region0: #{lenet_forward.1}
  #allocation0 [shape = 'u32[]', space=smem, size = 0x4, offset = 0x4, fixed_abs, tag = 'smem constant byte address 0x4 - core index']
  #allocation1 [shape = 'u32[144,128]{1,0:T(1,128)}', space=vmem, size = 0x12000, scoped, tag = 'internal scratch']
  %s0 = inlined_call_operand.vmem [shape: bf16[16,896], index: 0, kind: input, shape index: {}]
  %s1 = inlined_call_operand.vmem [shape: bf16[4,896,512], index: 1, kind: input, shape index: {}]
  %s2 = inlined_call_operand.vmem [shape: f32[1,512], index: 2, kind: input, shape index: {}]
  %s3 = inlined_call_operand.vmem [shape: bf16[512,128], index: 3, kind: input, shape index: {}]
  %s4 = inlined_call_operand.vmem [shape: f32[1,128], index: 4, kind: input, shape index: {}]
  %s5 = inlined_call_operand.vmem [shape: f32[16,128], index: 5, kind: output, shape index: {}]
  %s6 = sld [smem:[#allocation0]]
  $region30: #{lenet_forward.1} parent=0
    _
  %s8 = ssub.s32 1, %s6
  %s9 = scalar_select 0, %s8, %s6
  // Predicated region
  $region2: #{lenet_forward.1} parent=0 // pred_check
    _
  $region3: #{lenet_forward.1} parent=0 // pred_check_branch
    %11 = sbr.rel (0) target = $region5
  $region4: #{lenet_forward.1} parent=0 // pred_region
    _
  $region5: #{lenet_forward.1} parent=0 // pred_fallthru
    _
  // Predicated region
  $region6: #{lenet_forward.1} parent=0 // pred_check
    _
  $region7: #{lenet_forward.1} parent=0 // pred_check_branch
    %13 = sbr.rel (0) target = $region9
  $region8: #{lenet_forward.1} parent=0 // pred_region
    _
  $region9: #{lenet_forward.1} parent=0 // pred_fallthru
    _
  // Predicated region
  $region10: #{lenet_forward.1} parent=0 // pred_check
    _
  $region11: #{lenet_forward.1} parent=0 // pred_check_branch
    %15 = sbr.rel (0) target = $region13
  $region12: #{lenet_forward.1} parent=0 // pred_region
    _
  $region13: #{lenet_forward.1} parent=0 // pred_fallthru
    _
  // Predicated region
  $region14: #{lenet_forward.1} parent=0 // pred_check
    _
  $region15: #{lenet_forward.1} parent=0 // pred_check_branch
    %17 = sbr.rel (0) target = $region17
  $region16: #{lenet_forward.1} parent=0 // pred_region
    _
  $region17: #{lenet_forward.1} parent=0 // pred_fallthru
    _
  // Predicated region
  $region18: #{lenet_forward.1} parent=0 // pred_check
    _
  $region19: #{lenet_forward.1} parent=0 // pred_check_branch
    %19 = sbr.rel (0) target = $region21
  $region20: #{lenet_forward.1} parent=0 // pred_region
    _
  $region21: #{lenet_forward.1} parent=0 // pred_fallthru
    _
  %v21 = vld [vmem:[%s0] sm:$0xff]
  %v22 = vld [vmem:[%s0 + $0x8] sm:$0xff]
  %v23 = vld [vmem:[%s0 + $0x10] sm:$0xff]
  %v24 = vld [vmem:[%s0 + $0x18] sm:$0xf]
  %v25 = vld [vmem:[%s0 + $0x1c] sm:$0xff]
  %v26 = vld [vmem:[%s0 + $0x24] sm:$0xff]
  %v27 = vld [vmem:[%s0 + $0x2c] sm:$0xff]
  %v28 = vld [vmem:[%s0 + $0x34] sm:$0xf]
  %v29 = vld [vmem:[%s1] sm:$0xff]
  %v30 = vld [vmem:[%s1 + $0x8] sm:$0xff]
  %v31 = vld [vmem:[%s1 + $0x10] sm:$0xff]
  %v32 = vld [vmem:[%s1 + $0x18] sm:$0xff]
  %v33 = vld [vmem:[%s1 + $0x20] sm:$0xff]
  %v34 = vld [vmem:[%s1 + $0x28] sm:$0xff]
  %v35 = vld [vmem:[%s1 + $0x30] sm:$0xff]
  %v36 = vld [vmem:[%s1 + $0x38] sm:$0xff]
  %v37 = vld [vmem:[%s1 + $0x40] sm:$0xff]
  %v38 = vld [vmem:[%s1 + $0x48] sm:$0xff]
  %v39 = vld [vmem:[%s1 + $0x50] sm:$0xff]
  %v40 = vld [vmem:[%s1 + $0x58] sm:$0xff]
  %v41 = vld [vmem:[%s1 + $0x60] sm:$0xff]
  %v42 = vld [vmem:[%s1 + $0x68] sm:$0xff]
  %v43 = vld [vmem:[%s1 + $0x70] sm:$0xff]
  %v44 = vld [vmem:[%s1 + $0x78] sm:$0xff]
  %v45 = vld [vmem:[%s1 + $0x80] sm:$0xff]
  %v46 = vld [vmem:[%s1 + $0x88] sm:$0xff]
  %v47 = vld [vmem:[%s1 + $0x90] sm:$0xff]
  %v48 = vld [vmem:[%s1 + $0x98] sm:$0xff]
  %v49 = vld [vmem:[%s1 + $0xa0] sm:$0xff]
  %v50 = vld [vmem:[%s1 + $0xa8] sm:$0xff]
  %v51 = vld [vmem:[%s1 + $0xb0] sm:$0xff]
  %v52 = vld [vmem:[%s1 + $0xb8] sm:$0xff]
  %v53 = vld [vmem:[%s1 + $0xc0] sm:$0xff]
  %v54 = vld [vmem:[%s1 + $0xc8] sm:$0xff]
  %v55 = vld [vmem:[%s1 + $0xd0] sm:$0xff]
  %v56 = vld [vmem:[%s1 + $0xd8] sm:$0xff]
  %v57 = vld [vmem:[%s1 + $0xe0] sm:$0xff]
  %v58 = vld [vmem:[%s1 + $0xe8] sm:$0xff]
  %v59 = vld [vmem:[%s1 + $0xf0] sm:$0xff]
  %v60 = vld [vmem:[%s1 + $0xf8] sm:$0xff]
  %v61 = vld [vmem:[%s1 + $0x100] sm:$0xff]
  %v62 = vld [vmem:[%s1 + $0x108] sm:$0xff]
  %v63 = vld [vmem:[%s1 + $0x110] sm:$0xff]
  %v64 = vld [vmem:[%s1 + $0x118] sm:$0xff]
  %v65 = vld [vmem:[%s1 + $0x120] sm:$0xff]
  %v66 = vld [vmem:[%s1 + $0x128] sm:$0xff]
  %v67 = vld [vmem:[%s1 + $0x130] sm:$0xff]
  %v68 = vld [vmem:[%s1 + $0x138] sm:$0xff]
  %v69 = vld [vmem:[%s1 + $0x140] sm:$0xff]
  %v70 = vld [vmem:[%s1 + $0x148] sm:$0xff]
  %v71 = vld [vmem:[%s1 + $0x150] sm:$0xff]
  %v72 = vld [vmem:[%s1 + $0x158] sm:$0xff]
  %v73 = vld [vmem:[%s1 + $0x160] sm:$0xff]
  %v74 = vld [vmem:[%s1 + $0x168] sm:$0xff]
  %v75 = vld [vmem:[%s1 + $0x170] sm:$0xff]
  %v76 = vld [vmem:[%s1 + $0x178] sm:$0xff]
  %v77 = vld [vmem:[%s1 + $0x180] sm:$0xff]
  %v78 = vld [vmem:[%s1 + $0x188] sm:$0xff]
  %v79 = vld [vmem:[%s1 + $0x190] sm:$0xff]
  %v80 = vld [vmem:[%s1 + $0x198] sm:$0xff]
  %v81 = vld [vmem:[%s1 + $0x1a0] sm:$0xff]
  %v82 = vld [vmem:[%s1 + $0x1a8] sm:$0xff]
  %v83 = vld [vmem:[%s1 + $0x1b0] sm:$0xff]
  %v84 = vld [vmem:[%s1 + $0x1b8] sm:$0xff]
  %v85 = vld [vmem:[%s1 + $0x1c0] sm:$0xff]
  %v86 = vld [vmem:[%s1 + $0x1c8] sm:$0xff]
  %v87 = vld [vmem:[%s1 + $0x1d0] sm:$0xff]
  %v88 = vld [vmem:[%s1 + $0x1d8] sm:$0xff]
  %v89 = vld [vmem:[%s1 + $0x1e0] sm:$0xff]
  %v90 = vld [vmem:[%s1 + $0x1e8] sm:$0xff]
  %v91 = vld [vmem:[%s1 + $0x1f0] sm:$0xff]
  %v92 = vld [vmem:[%s1 + $0x1f8] sm:$0xff]
  %v93 = vld [vmem:[%s1 + $0x200] sm:$0xff]
  %v94 = vld [vmem:[%s1 + $0x208] sm:$0xff]
  %v95 = vld [vmem:[%s1 + $0x210] sm:$0xff]
  %v96 = vld [vmem:[%s1 + $0x218] sm:$0xff]
  %v97 = vld [vmem:[%s1 + $0x220] sm:$0xff]
  %v98 = vld [vmem:[%s1 + $0x228] sm:$0xff]
  %v99 = vld [vmem:[%s1 + $0x230] sm:$0xff]
  %v100 = vld [vmem:[%s1 + $0x238] sm:$0xff]
  %v101 = vld [vmem:[%s1 + $0x240] sm:$0xff]
  %v102 = vld [vmem:[%s1 + $0x248] sm:$0xff]
  %v103 = vld [vmem:[%s1 + $0x250] sm:$0xff]
  %v104 = vld [vmem:[%s1 + $0x258] sm:$0xff]
  %v105 = vld [vmem:[%s1 + $0x260] sm:$0xff]
  %v106 = vld [vmem:[%s1 + $0x268] sm:$0xff]
  %v107 = vld [vmem:[%s1 + $0x270] sm:$0xff]
  %v108 = vld [vmem:[%s1 + $0x278] sm:$0xff]
  %v109 = vld [vmem:[%s1 + $0x280] sm:$0xff]
  %v110 = vld [vmem:[%s1 + $0x288] sm:$0xff]
  %v111 = vld [vmem:[%s1 + $0x290] sm:$0xff]
  %v112 = vld [vmem:[%s1 + $0x298] sm:$0xff]
  %v113 = vld [vmem:[%s1 + $0x2a0] sm:$0xff]
  %v114 = vld [vmem:[%s1 + $0x2a8] sm:$0xff]
  %v115 = vld [vmem:[%s1 + $0x2b0] sm:$0xff]
  %v116 = vld [vmem:[%s1 + $0x2b8] sm:$0xff]
  %v117 = vld [vmem:[%s1 + $0x2c0] sm:$0xff]
  %v118 = vld [vmem:[%s1 + $0x2c8] sm:$0xff]
  %v119 = vld [vmem:[%s1 + $0x2d0] sm:$0xff]
  %v120 = vld [vmem:[%s1 + $0x2d8] sm:$0xff]
  %v121 = vld [vmem:[%s1 + $0x2e0] sm:$0xff]
  %v122 = vld [vmem:[%s1 + $0x2e8] sm:$0xff]
  %v123 = vld [vmem:[%s1 + $0x2f0] sm:$0xff]
  %v124 = vld [vmem:[%s1 + $0x2f8] sm:$0xff]
  %v125 = vld [vmem:[%s1 + $0x300] sm:$0xff]
  %v126 = vld [vmem:[%s1 + $0x308] sm:$0xff]
  %v127 = vld [vmem:[%s1 + $0x310] sm:$0xff]
  %v128 = vld [vmem:[%s1 + $0x318] sm:$0xff]
  %v129 = vld [vmem:[%s1 + $0x320] sm:$0xff]
  %v130 = vld [vmem:[%s1 + $0x328] sm:$0xff]
  %v131 = vld [vmem:[%s1 + $0x330] sm:$0xff]
  %v132 = vld [vmem:[%s1 + $0x338] sm:$0xff]
  %v133 = vld [vmem:[%s1 + $0x340] sm:$0xff]
  %v134 = vld [vmem:[%s1 + $0x348] sm:$0xff]
  %v135 = vld [vmem:[%s1 + $0x350] sm:$0xff]
  %v136 = vld [vmem:[%s1 + $0x358] sm:$0xff]
  %v137 = vld [vmem:[%s1 + $0x360] sm:$0xff]
  %v138 = vld [vmem:[%s1 + $0x368] sm:$0xff]
  %v139 = vld [vmem:[%s1 + $0x370] sm:$0xff]
  %v140 = vld [vmem:[%s1 + $0x378] sm:$0xff]
  %v141 = vld [vmem:[%s1 + $0x380] sm:$0xff]
  %v142 = vld [vmem:[%s1 + $0x388] sm:$0xff]
  %v143 = vld [vmem:[%s1 + $0x390] sm:$0xff]
  %v144 = vld [vmem:[%s1 + $0x398] sm:$0xff]
  %v145 = vld [vmem:[%s1 + $0x3a0] sm:$0xff]
  %v146 = vld [vmem:[%s1 + $0x3a8] sm:$0xff]
  %v147 = vld [vmem:[%s1 + $0x3b0] sm:$0xff]
  %v148 = vld [vmem:[%s1 + $0x3b8] sm:$0xff]
  %v149 = vld [vmem:[%s1 + $0x3c0] sm:$0xff]
  %v150 = vld [vmem:[%s1 + $0x3c8] sm:$0xff]
  %v151 = vld [vmem:[%s1 + $0x3d0] sm:$0xff]
  %v152 = vld [vmem:[%s1 + $0x3d8] sm:$0xff]
  %v153 = vld [vmem:[%s1 + $0x3e0] sm:$0xff]
  %v154 = vld [vmem:[%s1 + $0x3e8] sm:$0xff]
  %v155 = vld [vmem:[%s1 + $0x3f0] sm:$0xff]
  %v156 = vld [vmem:[%s1 + $0x3f8] sm:$0xff]
  %v157 = vld [vmem:[%s1 + $0x400] sm:$0xff]
  %v158 = vld [vmem:[%s1 + $0x408] sm:$0xff]
  %v159 = vld [vmem:[%s1 + $0x410] sm:$0xff]
  %v160 = vld [vmem:[%s1 + $0x418] sm:$0xff]
  %v161 = vld [vmem:[%s1 + $0x420] sm:$0xff]
  %v162 = vld [vmem:[%s1 + $0x428] sm:$0xff]
  %v163 = vld [vmem:[%s1 + $0x430] sm:$0xff]
  %v164 = vld [vmem:[%s1 + $0x438] sm:$0xff]
  %v165 = vld [vmem:[%s1 + $0x440] sm:$0xff]
  %v166 = vld [vmem:[%s1 + $0x448] sm:$0xff]
  %v167 = vld [vmem:[%s1 + $0x450] sm:$0xff]
  %v168 = vld [vmem:[%s1 + $0x458] sm:$0xff]
  %v169 = vld [vmem:[%s1 + $0x460] sm:$0xff]
  %v170 = vld [vmem:[%s1 + $0x468] sm:$0xff]
  %v171 = vld [vmem:[%s1 + $0x470] sm:$0xff]
  %v172 = vld [vmem:[%s1 + $0x478] sm:$0xff]
  %v173 = vld [vmem:[%s1 + $0x480] sm:$0xff]
  %v174 = vld [vmem:[%s1 + $0x488] sm:$0xff]
  %v175 = vld [vmem:[%s1 + $0x490] sm:$0xff]
  %v176 = vld [vmem:[%s1 + $0x498] sm:$0xff]
  %v177 = vld [vmem:[%s1 + $0x4a0] sm:$0xff]
  %v178 = vld [vmem:[%s1 + $0x4a8] sm:$0xff]
  %v179 = vld [vmem:[%s1 + $0x4b0] sm:$0xff]
  %v180 = vld [vmem:[%s1 + $0x4b8] sm:$0xff]
  %v181 = vld [vmem:[%s1 + $0x4c0] sm:$0xff]
  %v182 = vld [vmem:[%s1 + $0x4c8] sm:$0xff]
  %v183 = vld [vmem:[%s1 + $0x4d0] sm:$0xff]
  %v184 = vld [vmem:[%s1 + $0x4d8] sm:$0xff]
  %v185 = vld [vmem:[%s1 + $0x4e0] sm:$0xff]
  %v186 = vld [vmem:[%s1 + $0x4e8] sm:$0xff]
  %v187 = vld [vmem:[%s1 + $0x4f0] sm:$0xff]
  %v188 = vld [vmem:[%s1 + $0x4f8] sm:$0xff]
  %v189 = vld [vmem:[%s1 + $0x500] sm:$0xff]
  %v190 = vld [vmem:[%s1 + $0x508] sm:$0xff]
  %v191 = vld [vmem:[%s1 + $0x510] sm:$0xff]
  %v192 = vld [vmem:[%s1 + $0x518] sm:$0xff]
  %v193 = vld [vmem:[%s1 + $0x520] sm:$0xff]
  %v194 = vld [vmem:[%s1 + $0x528] sm:$0xff]
  %v195 = vld [vmem:[%s1 + $0x530] sm:$0xff]
  %v196 = vld [vmem:[%s1 + $0x538] sm:$0xff]
  %v197 = vld [vmem:[%s1 + $0x540] sm:$0xff]
  %v198 = vld [vmem:[%s1 + $0x548] sm:$0xff]
  %v199 = vld [vmem:[%s1 + $0x550] sm:$0xff]
  %v200 = vld [vmem:[%s1 + $0x558] sm:$0xff]
  %v201 = vld [vmem:[%s1 + $0x560] sm:$0xff]
  %v202 = vld [vmem:[%s1 + $0x568] sm:$0xff]
  %v203 = vld [vmem:[%s1 + $0x570] sm:$0xff]
  %v204 = vld [vmem:[%s1 + $0x578] sm:$0xff]
  %v205 = vld [vmem:[%s1 + $0x580] sm:$0xff]
  %v206 = vld [vmem:[%s1 + $0x588] sm:$0xff]
  %v207 = vld [vmem:[%s1 + $0x590] sm:$0xff]
  %v208 = vld [vmem:[%s1 + $0x598] sm:$0xff]
  %v209 = vld [vmem:[%s1 + $0x5a0] sm:$0xff]
  %v210 = vld [vmem:[%s1 + $0x5a8] sm:$0xff]
  %v211 = vld [vmem:[%s1 + $0x5b0] sm:$0xff]
  %v212 = vld [vmem:[%s1 + $0x5b8] sm:$0xff]
  %v213 = vld [vmem:[%s1 + $0x5c0] sm:$0xff]
  %v214 = vld [vmem:[%s1 + $0x5c8] sm:$0xff]
  %v215 = vld [vmem:[%s1 + $0x5d0] sm:$0xff]
  %v216 = vld [vmem:[%s1 + $0x5d8] sm:$0xff]
  %v217 = vld [vmem:[%s1 + $0x5e0] sm:$0xff]
  %v218 = vld [vmem:[%s1 + $0x5e8] sm:$0xff]
  %v219 = vld [vmem:[%s1 + $0x5f0] sm:$0xff]
  %v220 = vld [vmem:[%s1 + $0x5f8] sm:$0xff]
  %v221 = vld [vmem:[%s1 + $0x600] sm:$0xff]
  %v222 = vld [vmem:[%s1 + $0x608] sm:$0xff]
  %v223 = vld [vmem:[%s1 + $0x610] sm:$0xff]
  %v224 = vld [vmem:[%s1 + $0x618] sm:$0xff]
  %v225 = vld [vmem:[%s1 + $0x620] sm:$0xff]
  %v226 = vld [vmem:[%s1 + $0x628] sm:$0xff]
  %v227 = vld [vmem:[%s1 + $0x630] sm:$0xff]
  %v228 = vld [vmem:[%s1 + $0x638] sm:$0xff]
  %v229 = vld [vmem:[%s1 + $0x640] sm:$0xff]
  %v230 = vld [vmem:[%s1 + $0x648] sm:$0xff]
  %v231 = vld [vmem:[%s1 + $0x650] sm:$0xff]
  %v232 = vld [vmem:[%s1 + $0x658] sm:$0xff]
  %v233 = vld [vmem:[%s1 + $0x660] sm:$0xff]
  %v234 = vld [vmem:[%s1 + $0x668] sm:$0xff]
  %v235 = vld [vmem:[%s1 + $0x670] sm:$0xff]
  %v236 = vld [vmem:[%s1 + $0x678] sm:$0xff]
  %v237 = vld [vmem:[%s1 + $0x680] sm:$0xff]
  %v238 = vld [vmem:[%s1 + $0x688] sm:$0xff]
  %v239 = vld [vmem:[%s1 + $0x690] sm:$0xff]
  %v240 = vld [vmem:[%s1 + $0x698] sm:$0xff]
  %v241 = vld [vmem:[%s1 + $0x6a0] sm:$0xff]
  %v242 = vld [vmem:[%s1 + $0x6a8] sm:$0xff]
  %v243 = vld [vmem:[%s1 + $0x6b0] sm:$0xff]
  %v244 = vld [vmem:[%s1 + $0x6b8] sm:$0xff]
  %v245 = vld [vmem:[%s1 + $0x6c0] sm:$0xff]
  %v246 = vld [vmem:[%s1 + $0x6c8] sm:$0xff]
  %v247 = vld [vmem:[%s1 + $0x6d0] sm:$0xff]
  %v248 = vld [vmem:[%s1 + $0x6d8] sm:$0xff]
  %v249 = vld [vmem:[%s1 + $0x6e0] sm:$0xff]
  %v250 = vld [vmem:[%s1 + $0x6e8] sm:$0xff]
  %v251 = vld [vmem:[%s1 + $0x6f0] sm:$0xff]
  %v252 = vld [vmem:[%s1 + $0x6f8] sm:$0xff]
  %v261 = vunpack.c.l.b16 %v21
  %v262 = vunpack.c.h.b16 %v21
  %v263 = vunpack.c.l.b16 %v22
  %v264 = vunpack.c.h.b16 %v22
  %v265 = vunpack.c.l.b16 %v23
  %v266 = vunpack.c.h.b16 %v23
  %v267 = vunpack.c.l.b16 %v24
  %v268 = vunpack.c.l.b16 %v25
  %v269 = vunpack.c.h.b16 %v25
  %v270 = vunpack.c.l.b16 %v26
  %v271 = vunpack.c.h.b16 %v26
  %v272 = vunpack.c.l.b16 %v27
  %v273 = vunpack.c.h.b16 %v27
  %v274 = vunpack.c.l.b16 %v28
  %v275 = vpack.c.b16 %v268, %v261
  %v276 = vpack.c.b16 %v269, %v262
  %v277 = vpack.c.b16 %v270, %v263
  %v278 = vpack.c.b16 %v271, %v264
  %v279 = vpack.c.b16 %v272, %v265
  %v280 = vpack.c.b16 %v273, %v266
  %v281 = vpack.c.b16 %v274, %v267
  %v513 = vunpack.c.l.b16 %v29
  %v514 = vunpack.c.h.b16 %v29
  %v515 = vunpack.c.l.b16 %v30
  %v516 = vunpack.c.h.b16 %v30
  %v517 = vunpack.c.l.b16 %v31
  %v518 = vunpack.c.h.b16 %v31
  %v519 = vunpack.c.l.b16 %v32
  %v520 = vunpack.c.h.b16 %v32
  %v521 = vunpack.c.l.b16 %v33
  %v522 = vunpack.c.h.b16 %v33
  %v523 = vunpack.c.l.b16 %v34
  %v524 = vunpack.c.h.b16 %v34
  %v525 = vunpack.c.l.b16 %v35
  %v526 = vunpack.c.h.b16 %v35
  %v527 = vunpack.c.l.b16 %v36
  %v528 = vunpack.c.h.b16 %v36
  %v529 = vunpack.c.l.b16 %v37
  %v530 = vunpack.c.h.b16 %v37
  %v531 = vunpack.c.l.b16 %v38
  %v532 = vunpack.c.h.b16 %v38
  %v533 = vunpack.c.l.b16 %v39
  %v534 = vunpack.c.h.b16 %v39
  %v535 = vunpack.c.l.b16 %v40
  %v536 = vunpack.c.h.b16 %v40
  %v537 = vunpack.c.l.b16 %v41
  %v538 = vunpack.c.h.b16 %v41
  %v539 = vunpack.c.l.b16 %v42
  %v540 = vunpack.c.h.b16 %v42
  %v541 = vunpack.c.l.b16 %v43
  %v542 = vunpack.c.h.b16 %v43
  %v543 = vunpack.c.l.b16 %v44
  %v544 = vunpack.c.h.b16 %v44
  %v545 = vunpack.c.l.b16 %v45
  %v546 = vunpack.c.h.b16 %v45
  %v547 = vunpack.c.l.b16 %v46
  %v548 = vunpack.c.h.b16 %v46
  %v549 = vunpack.c.l.b16 %v47
  %v550 = vunpack.c.h.b16 %v47
  %v551 = vunpack.c.l.b16 %v48
  %v552 = vunpack.c.h.b16 %v48
  %v553 = vunpack.c.l.b16 %v49
  %v554 = vunpack.c.h.b16 %v49
  %v555 = vunpack.c.l.b16 %v50
  %v556 = vunpack.c.h.b16 %v50
  %v557 = vunpack.c.l.b16 %v51
  %v558 = vunpack.c.h.b16 %v51
  %v559 = vunpack.c.l.b16 %v52
  %v560 = vunpack.c.h.b16 %v52
  %v561 = vunpack.c.l.b16 %v53
  %v562 = vunpack.c.h.b16 %v53
  %v563 = vunpack.c.l.b16 %v54
  %v564 = vunpack.c.h.b16 %v54
  %v565 = vunpack.c.l.b16 %v55
  %v566 = vunpack.c.h.b16 %v55
  %v567 = vunpack.c.l.b16 %v56
  %v568 = vunpack.c.h.b16 %v56
  %v569 = vunpack.c.l.b16 %v57
  %v570 = vunpack.c.h.b16 %v57
  %v571 = vunpack.c.l.b16 %v58
  %v572 = vunpack.c.h.b16 %v58
  %v573 = vunpack.c.l.b16 %v59
  %v574 = vunpack.c.h.b16 %v59
  %v575 = vunpack.c.l.b16 %v60
  %v576 = vunpack.c.h.b16 %v60
  %v577 = vunpack.c.l.b16 %v61
  %v578 = vunpack.c.h.b16 %v61
  %v579 = vunpack.c.l.b16 %v62
  %v580 = vunpack.c.h.b16 %v62
  %v581 = vunpack.c.l.b16 %v63
  %v582 = vunpack.c.h.b16 %v63
  %v583 = vunpack.c.l.b16 %v64
  %v584 = vunpack.c.h.b16 %v64
  %v585 = vunpack.c.l.b16 %v65
  %v586 = vunpack.c.h.b16 %v65
  %v587 = vunpack.c.l.b16 %v66
  %v588 = vunpack.c.h.b16 %v66
  %v589 = vunpack.c.l.b16 %v67
  %v590 = vunpack.c.h.b16 %v67
  %v591 = vunpack.c.l.b16 %v68
  %v592 = vunpack.c.h.b16 %v68
  %v593 = vunpack.c.l.b16 %v69
  %v594 = vunpack.c.h.b16 %v69
  %v595 = vunpack.c.l.b16 %v70
  %v596 = vunpack.c.h.b16 %v70
  %v597 = vunpack.c.l.b16 %v71
  %v598 = vunpack.c.h.b16 %v71
  %v599 = vunpack.c.l.b16 %v72
  %v600 = vunpack.c.h.b16 %v72
  %v601 = vunpack.c.l.b16 %v73
  %v602 = vunpack.c.h.b16 %v73
  %v603 = vunpack.c.l.b16 %v74
  %v604 = vunpack.c.h.b16 %v74
  %v605 = vunpack.c.l.b16 %v75
  %v606 = vunpack.c.h.b16 %v75
  %v607 = vunpack.c.l.b16 %v76
  %v608 = vunpack.c.h.b16 %v76
  %v609 = vunpack.c.l.b16 %v77
  %v610 = vunpack.c.h.b16 %v77
  %v611 = vunpack.c.l.b16 %v78
  %v612 = vunpack.c.h.b16 %v78
  %v613 = vunpack.c.l.b16 %v79
  %v614 = vunpack.c.h.b16 %v79
  %v615 = vunpack.c.l.b16 %v80
  %v616 = vunpack.c.h.b16 %v80
  %v617 = vunpack.c.l.b16 %v81
  %v618 = vunpack.c.h.b16 %v81
  %v619 = vunpack.c.l.b16 %v82
  %v620 = vunpack.c.h.b16 %v82
  %v621 = vunpack.c.l.b16 %v83
  %v622 = vunpack.c.h.b16 %v83
  %v623 = vunpack.c.l.b16 %v84
  %v624 = vunpack.c.h.b16 %v84
  %v625 = vunpack.c.l.b16 %v85
  %v626 = vunpack.c.h.b16 %v85
  %v627 = vunpack.c.l.b16 %v86
  %v628 = vunpack.c.h.b16 %v86
  %v629 = vunpack.c.l.b16 %v87
  %v630 = vunpack.c.h.b16 %v87
  %v631 = vunpack.c.l.b16 %v88
  %v632 = vunpack.c.h.b16 %v88
  %v633 = vunpack.c.l.b16 %v89
  %v634 = vunpack.c.h.b16 %v89
  %v635 = vunpack.c.l.b16 %v90
  %v636 = vunpack.c.h.b16 %v90
  %v637 = vunpack.c.l.b16 %v91
  %v638 = vunpack.c.h.b16 %v91
  %v639 = vunpack.c.l.b16 %v92
  %v640 = vunpack.c.h.b16 %v92
  %v641 = vunpack.c.l.b16 %v93
  %v642 = vunpack.c.h.b16 %v93
  %v643 = vunpack.c.l.b16 %v94
  %v644 = vunpack.c.h.b16 %v94
  %v645 = vunpack.c.l.b16 %v95
  %v646 = vunpack.c.h.b16 %v95
  %v647 = vunpack.c.l.b16 %v96
  %v648 = vunpack.c.h.b16 %v96
  %v649 = vunpack.c.l.b16 %v97
  %v650 = vunpack.c.h.b16 %v97
  %v651 = vunpack.c.l.b16 %v98
  %v652 = vunpack.c.h.b16 %v98
  %v653 = vunpack.c.l.b16 %v99
  %v654 = vunpack.c.h.b16 %v99
  %v655 = vunpack.c.l.b16 %v100
  %v656 = vunpack.c.h.b16 %v100
  %v657 = vunpack.c.l.b16 %v101
  %v658 = vunpack.c.h.b16 %v101
  %v659 = vunpack.c.l.b16 %v102
  %v660 = vunpack.c.h.b16 %v102
  %v661 = vunpack.c.l.b16 %v103
  %v662 = vunpack.c.h.b16 %v103
  %v663 = vunpack.c.l.b16 %v104
  %v664 = vunpack.c.h.b16 %v104
  %v665 = vunpack.c.l.b16 %v105
  %v666 = vunpack.c.h.b16 %v105
  %v667 = vunpack.c.l.b16 %v106
  %v668 = vunpack.c.h.b16 %v106
  %v669 = vunpack.c.l.b16 %v107
  %v670 = vunpack.c.h.b16 %v107
  %v671 = vunpack.c.l.b16 %v108
  %v672 = vunpack.c.h.b16 %v108
  %v673 = vunpack.c.l.b16 %v109
  %v674 = vunpack.c.h.b16 %v109
  %v675 = vunpack.c.l.b16 %v110
  %v676 = vunpack.c.h.b16 %v110
  %v677 = vunpack.c.l.b16 %v111
  %v678 = vunpack.c.h.b16 %v111
  %v679 = vunpack.c.l.b16 %v112
  %v680 = vunpack.c.h.b16 %v112
  %v681 = vunpack.c.l.b16 %v113
  %v682 = vunpack.c.h.b16 %v113
  %v683 = vunpack.c.l.b16 %v114
  %v684 = vunpack.c.h.b16 %v114
  %v685 = vunpack.c.l.b16 %v115
  %v686 = vunpack.c.h.b16 %v115
  %v687 = vunpack.c.l.b16 %v116
  %v688 = vunpack.c.h.b16 %v116
  %v689 = vunpack.c.l.b16 %v117
  %v690 = vunpack.c.h.b16 %v117
  %v691 = vunpack.c.l.b16 %v118
  %v692 = vunpack.c.h.b16 %v118
  %v693 = vunpack.c.l.b16 %v119
  %v694 = vunpack.c.h.b16 %v119
  %v695 = vunpack.c.l.b16 %v120
  %v696 = vunpack.c.h.b16 %v120
  %v697 = vunpack.c.l.b16 %v121
  %v698 = vunpack.c.h.b16 %v121
  %v699 = vunpack.c.l.b16 %v122
  %v700 = vunpack.c.h.b16 %v122
  %v701 = vunpack.c.l.b16 %v123
  %v702 = vunpack.c.h.b16 %v123
  %v703 = vunpack.c.l.b16 %v124
  %v704 = vunpack.c.h.b16 %v124
  %v705 = vunpack.c.l.b16 %v125
  %v706 = vunpack.c.h.b16 %v125
  %v707 = vunpack.c.l.b16 %v126
  %v708 = vunpack.c.h.b16 %v126
  %v709 = vunpack.c.l.b16 %v127
  %v710 = vunpack.c.h.b16 %v127
  %v711 = vunpack.c.l.b16 %v128
  %v712 = vunpack.c.h.b16 %v128
  %v713 = vunpack.c.l.b16 %v129
  %v714 = vunpack.c.h.b16 %v129
  %v715 = vunpack.c.l.b16 %v130
  %v716 = vunpack.c.h.b16 %v130
  %v717 = vunpack.c.l.b16 %v131
  %v718 = vunpack.c.h.b16 %v131
  %v719 = vunpack.c.l.b16 %v132
  %v720 = vunpack.c.h.b16 %v132
  %v721 = vunpack.c.l.b16 %v133
  %v722 = vunpack.c.h.b16 %v133
  %v723 = vunpack.c.l.b16 %v134
  %v724 = vunpack.c.h.b16 %v134
  %v725 = vunpack.c.l.b16 %v135
  %v726 = vunpack.c.h.b16 %v135
  %v727 = vunpack.c.l.b16 %v136
  %v728 = vunpack.c.h.b16 %v136
  %v729 = vunpack.c.l.b16 %v137
  %v730 = vunpack.c.h.b16 %v137
  %v731 = vunpack.c.l.b16 %v138
  %v732 = vunpack.c.h.b16 %v138
  %v733 = vunpack.c.l.b16 %v139
  %v734 = vunpack.c.h.b16 %v139
  %v735 = vunpack.c.l.b16 %v140
  %v736 = vunpack.c.h.b16 %v140
  %v737 = vunpack.c.l.b16 %v141
  %v738 = vunpack.c.h.b16 %v141
  %v739 = vunpack.c.l.b16 %v142
  %v740 = vunpack.c.h.b16 %v142
  %v741 = vunpack.c.l.b16 %v143
  %v742 = vunpack.c.h.b16 %v143
  %v743 = vunpack.c.l.b16 %v144
  %v744 = vunpack.c.h.b16 %v144
  %v745 = vunpack.c.l.b16 %v145
  %v746 = vunpack.c.h.b16 %v145
  %v747 = vunpack.c.l.b16 %v146
  %v748 = vunpack.c.h.b16 %v146
  %v749 = vunpack.c.l.b16 %v147
  %v750 = vunpack.c.h.b16 %v147
  %v751 = vunpack.c.l.b16 %v148
  %v752 = vunpack.c.h.b16 %v148
  %v753 = vunpack.c.l.b16 %v149
  %v754 = vunpack.c.h.b16 %v149
  %v755 = vunpack.c.l.b16 %v150
  %v756 = vunpack.c.h.b16 %v150
  %v757 = vunpack.c.l.b16 %v151
  %v758 = vunpack.c.h.b16 %v151
  %v759 = vunpack.c.l.b16 %v152
  %v760 = vunpack.c.h.b16 %v152
  %v761 = vunpack.c.l.b16 %v153
  %v762 = vunpack.c.h.b16 %v153
  %v763 = vunpack.c.l.b16 %v154
  %v764 = vunpack.c.h.b16 %v154
  %v765 = vunpack.c.l.b16 %v155
  %v766 = vunpack.c.h.b16 %v155
  %v767 = vunpack.c.l.b16 %v156
  %v768 = vunpack.c.h.b16 %v156
  %v769 = vunpack.c.l.b16 %v157
  %v770 = vunpack.c.h.b16 %v157
  %v771 = vunpack.c.l.b16 %v158
  %v772 = vunpack.c.h.b16 %v158
  %v773 = vunpack.c.l.b16 %v159
  %v774 = vunpack.c.h.b16 %v159
  %v775 = vunpack.c.l.b16 %v160
  %v776 = vunpack.c.h.b16 %v160
  %v777 = vunpack.c.l.b16 %v161
  %v778 = vunpack.c.h.b16 %v161
  %v779 = vunpack.c.l.b16 %v162
  %v780 = vunpack.c.h.b16 %v162
  %v781 = vunpack.c.l.b16 %v163
  %v782 = vunpack.c.h.b16 %v163
  %v783 = vunpack.c.l.b16 %v164
  %v784 = vunpack.c.h.b16 %v164
  %v785 = vunpack.c.l.b16 %v165
  %v786 = vunpack.c.h.b16 %v165
  %v787 = vunpack.c.l.b16 %v166
  %v788 = vunpack.c.h.b16 %v166
  %v789 = vunpack.c.l.b16 %v167
  %v790 = vunpack.c.h.b16 %v167
  %v791 = vunpack.c.l.b16 %v168
  %v792 = vunpack.c.h.b16 %v168
  %v793 = vunpack.c.l.b16 %v169
  %v794 = vunpack.c.h.b16 %v169
  %v795 = vunpack.c.l.b16 %v170
  %v796 = vunpack.c.h.b16 %v170
  %v797 = vunpack.c.l.b16 %v171
  %v798 = vunpack.c.h.b16 %v171
  %v799 = vunpack.c.l.b16 %v172
  %v800 = vunpack.c.h.b16 %v172
  %v801 = vunpack.c.l.b16 %v173
  %v802 = vunpack.c.h.b16 %v173
  %v803 = vunpack.c.l.b16 %v174
  %v804 = vunpack.c.h.b16 %v174
  %v805 = vunpack.c.l.b16 %v175
  %v806 = vunpack.c.h.b16 %v175
  %v807 = vunpack.c.l.b16 %v176
  %v808 = vunpack.c.h.b16 %v176
  %v809 = vunpack.c.l.b16 %v177
  %v810 = vunpack.c.h.b16 %v177
  %v811 = vunpack.c.l.b16 %v178
  %v812 = vunpack.c.h.b16 %v178
  %v813 = vunpack.c.l.b16 %v179
  %v814 = vunpack.c.h.b16 %v179
  %v815 = vunpack.c.l.b16 %v180
  %v816 = vunpack.c.h.b16 %v180
  %v817 = vunpack.c.l.b16 %v181
  %v818 = vunpack.c.h.b16 %v181
  %v819 = vunpack.c.l.b16 %v182
  %v820 = vunpack.c.h.b16 %v182
  %v821 = vunpack.c.l.b16 %v183
  %v822 = vunpack.c.h.b16 %v183
  %v823 = vunpack.c.l.b16 %v184
  %v824 = vunpack.c.h.b16 %v184
  %v825 = vunpack.c.l.b16 %v185
  %v826 = vunpack.c.h.b16 %v185
  %v827 = vunpack.c.l.b16 %v186
  %v828 = vunpack.c.h.b16 %v186
  %v829 = vunpack.c.l.b16 %v187
  %v830 = vunpack.c.h.b16 %v187
  %v831 = vunpack.c.l.b16 %v188
  %v832 = vunpack.c.h.b16 %v188
  %v833 = vunpack.c.l.b16 %v189
  %v834 = vunpack.c.h.b16 %v189
  %v835 = vunpack.c.l.b16 %v190
  %v836 = vunpack.c.h.b16 %v190
  %v837 = vunpack.c.l.b16 %v191
  %v838 = vunpack.c.h.b16 %v191
  %v839 = vunpack.c.l.b16 %v192
  %v840 = vunpack.c.h.b16 %v192
  %v841 = vunpack.c.l.b16 %v193
  %v842 = vunpack.c.h.b16 %v193
  %v843 = vunpack.c.l.b16 %v194
  %v844 = vunpack.c.h.b16 %v194
  %v845 = vunpack.c.l.b16 %v195
  %v846 = vunpack.c.h.b16 %v195
  %v847 = vunpack.c.l.b16 %v196
  %v848 = vunpack.c.h.b16 %v196
  %v849 = vunpack.c.l.b16 %v197
  %v850 = vunpack.c.h.b16 %v197
  %v851 = vunpack.c.l.b16 %v198
  %v852 = vunpack.c.h.b16 %v198
  %v853 = vunpack.c.l.b16 %v199
  %v854 = vunpack.c.h.b16 %v199
  %v855 = vunpack.c.l.b16 %v200
  %v856 = vunpack.c.h.b16 %v200
  %v857 = vunpack.c.l.b16 %v201
  %v858 = vunpack.c.h.b16 %v201
  %v859 = vunpack.c.l.b16 %v202
  %v860 = vunpack.c.h.b16 %v202
  %v861 = vunpack.c.l.b16 %v203
  %v862 = vunpack.c.h.b16 %v203
  %v863 = vunpack.c.l.b16 %v204
  %v864 = vunpack.c.h.b16 %v204
  %v865 = vunpack.c.l.b16 %v205
  %v866 = vunpack.c.h.b16 %v205
  %v867 = vunpack.c.l.b16 %v206
  %v868 = vunpack.c.h.b16 %v206
  %v869 = vunpack.c.l.b16 %v207
  %v870 = vunpack.c.h.b16 %v207
  %v871 = vunpack.c.l.b16 %v208
  %v872 = vunpack.c.h.b16 %v208
  %v873 = vunpack.c.l.b16 %v209
  %v874 = vunpack.c.h.b16 %v209
  %v875 = vunpack.c.l.b16 %v210
  %v876 = vunpack.c.h.b16 %v210
  %v877 = vunpack.c.l.b16 %v211
  %v878 = vunpack.c.h.b16 %v211
  %v879 = vunpack.c.l.b16 %v212
  %v880 = vunpack.c.h.b16 %v212
  %v881 = vunpack.c.l.b16 %v213
  %v882 = vunpack.c.h.b16 %v213
  %v883 = vunpack.c.l.b16 %v214
  %v884 = vunpack.c.h.b16 %v214
  %v885 = vunpack.c.l.b16 %v215
  %v886 = vunpack.c.h.b16 %v215
  %v887 = vunpack.c.l.b16 %v216
  %v888 = vunpack.c.h.b16 %v216
  %v889 = vunpack.c.l.b16 %v217
  %v890 = vunpack.c.h.b16 %v217
  %v891 = vunpack.c.l.b16 %v218
  %v892 = vunpack.c.h.b16 %v218
  %v893 = vunpack.c.l.b16 %v219
  %v894 = vunpack.c.h.b16 %v219
  %v895 = vunpack.c.l.b16 %v220
  %v896 = vunpack.c.h.b16 %v220
  %v897 = vunpack.c.l.b16 %v221
  %v898 = vunpack.c.h.b16 %v221
  %v899 = vunpack.c.l.b16 %v222
  %v900 = vunpack.c.h.b16 %v222
  %v901 = vunpack.c.l.b16 %v223
  %v902 = vunpack.c.h.b16 %v223
  %v903 = vunpack.c.l.b16 %v224
  %v904 = vunpack.c.h.b16 %v224
  %v905 = vunpack.c.l.b16 %v225
  %v906 = vunpack.c.h.b16 %v225
  %v907 = vunpack.c.l.b16 %v226
  %v908 = vunpack.c.h.b16 %v226
  %v909 = vunpack.c.l.b16 %v227
  %v910 = vunpack.c.h.b16 %v227
  %v911 = vunpack.c.l.b16 %v228
  %v912 = vunpack.c.h.b16 %v228
  %v913 = vunpack.c.l.b16 %v229
  %v914 = vunpack.c.h.b16 %v229
  %v915 = vunpack.c.l.b16 %v230
  %v916 = vunpack.c.h.b16 %v230
  %v917 = vunpack.c.l.b16 %v231
  %v918 = vunpack.c.h.b16 %v231
  %v919 = vunpack.c.l.b16 %v232
  %v920 = vunpack.c.h.b16 %v232
  %v921 = vunpack.c.l.b16 %v233
  %v922 = vunpack.c.h.b16 %v233
  %v923 = vunpack.c.l.b16 %v234
  %v924 = vunpack.c.h.b16 %v234
  %v925 = vunpack.c.l.b16 %v235
  %v926 = vunpack.c.h.b16 %v235
  %v927 = vunpack.c.l.b16 %v236
  %v928 = vunpack.c.h.b16 %v236
  %v929 = vunpack.c.l.b16 %v237
  %v930 = vunpack.c.h.b16 %v237
  %v931 = vunpack.c.l.b16 %v238
  %v932 = vunpack.c.h.b16 %v238
  %v933 = vunpack.c.l.b16 %v239
  %v934 = vunpack.c.h.b16 %v239
  %v935 = vunpack.c.l.b16 %v240
  %v936 = vunpack.c.h.b16 %v240
  %v937 = vunpack.c.l.b16 %v241
  %v938 = vunpack.c.h.b16 %v241
  %v939 = vunpack.c.l.b16 %v242
  %v940 = vunpack.c.h.b16 %v242
  %v941 = vunpack.c.l.b16 %v243
  %v942 = vunpack.c.h.b16 %v243
  %v943 = vunpack.c.l.b16 %v244
  %v944 = vunpack.c.h.b16 %v244
  %v945 = vunpack.c.l.b16 %v245
  %v946 = vunpack.c.h.b16 %v245
  %v947 = vunpack.c.l.b16 %v246
  %v948 = vunpack.c.h.b16 %v246
  %v949 = vunpack.c.l.b16 %v247
  %v950 = vunpack.c.h.b16 %v247
  %v951 = vunpack.c.l.b16 %v248
  %v952 = vunpack.c.h.b16 %v248
  %v953 = vunpack.c.l.b16 %v249
  %v954 = vunpack.c.h.b16 %v249
  %v955 = vunpack.c.l.b16 %v250
  %v956 = vunpack.c.h.b16 %v250
  %v957 = vunpack.c.l.b16 %v251
  %v958 = vunpack.c.h.b16 %v251
  %v959 = vunpack.c.l.b16 %v252
  %v960 = vunpack.c.h.b16 %v252
  %v961 = vpack.c.b16 %v517, %v513
  %v962 = vpack.c.b16 %v518, %v514
  %v963 = vpack.c.b16 %v519, %v515
  %v964 = vpack.c.b16 %v520, %v516
  %v965 = vpack.c.b16 %v525, %v521
  %v966 = vpack.c.b16 %v526, %v522
  %v967 = vpack.c.b16 %v527, %v523
  %v968 = vpack.c.b16 %v528, %v524
  %v969 = vpack.c.b16 %v533, %v529
  %v970 = vpack.c.b16 %v534, %v530
  %v971 = vpack.c.b16 %v535, %v531
  %v972 = vpack.c.b16 %v536, %v532
  %v973 = vpack.c.b16 %v541, %v537
  %v974 = vpack.c.b16 %v542, %v538
  %v975 = vpack.c.b16 %v543, %v539
  %v976 = vpack.c.b16 %v544, %v540
  %v977 = vpack.c.b16 %v549, %v545
  %v978 = vpack.c.b16 %v550, %v546
  %v979 = vpack.c.b16 %v551, %v547
  %v980 = vpack.c.b16 %v552, %v548
  %v981 = vpack.c.b16 %v557, %v553
  %v982 = vpack.c.b16 %v558, %v554
  %v983 = vpack.c.b16 %v559, %v555
  %v984 = vpack.c.b16 %v560, %v556
  %v985 = vpack.c.b16 %v565, %v561
  %v986 = vpack.c.b16 %v566, %v562
  %v987 = vpack.c.b16 %v567, %v563
  %v988 = vpack.c.b16 %v568, %v564
  %v989 = vpack.c.b16 %v573, %v569
  %v990 = vpack.c.b16 %v574, %v570
  %v991 = vpack.c.b16 %v575, %v571
  %v992 = vpack.c.b16 %v576, %v572
  %v993 = vpack.c.b16 %v581, %v577
  %v994 = vpack.c.b16 %v582, %v578
  %v995 = vpack.c.b16 %v583, %v579
  %v996 = vpack.c.b16 %v584, %v580
  %v997 = vpack.c.b16 %v589, %v585
  %v998 = vpack.c.b16 %v590, %v586
  %v999 = vpack.c.b16 %v591, %v587
  %v1000 = vpack.c.b16 %v592, %v588
  %v1001 = vpack.c.b16 %v597, %v593
  %v1002 = vpack.c.b16 %v598, %v594
  %v1003 = vpack.c.b16 %v599, %v595
  %v1004 = vpack.c.b16 %v600, %v596
  %v1005 = vpack.c.b16 %v605, %v601
  %v1006 = vpack.c.b16 %v606, %v602
  %v1007 = vpack.c.b16 %v607, %v603
  %v1008 = vpack.c.b16 %v608, %v604
  %v1009 = vpack.c.b16 %v613, %v609
  %v1010 = vpack.c.b16 %v614, %v610
  %v1011 = vpack.c.b16 %v615, %v611
  %v1012 = vpack.c.b16 %v616, %v612
  %v1013 = vpack.c.b16 %v621, %v617
  %v1014 = vpack.c.b16 %v622, %v618
  %v1015 = vpack.c.b16 %v623, %v619
  %v1016 = vpack.c.b16 %v624, %v620
  %v1017 = vpack.c.b16 %v629, %v625
  %v1018 = vpack.c.b16 %v630, %v626
  %v1019 = vpack.c.b16 %v631, %v627
  %v1020 = vpack.c.b16 %v632, %v628
  %v1021 = vpack.c.b16 %v637, %v633
  %v1022 = vpack.c.b16 %v638, %v634
  %v1023 = vpack.c.b16 %v639, %v635
  %v1024 = vpack.c.b16 %v640, %v636
  %v1025 = vpack.c.b16 %v645, %v641
  %v1026 = vpack.c.b16 %v646, %v642
  %v1027 = vpack.c.b16 %v647, %v643
  %v1028 = vpack.c.b16 %v648, %v644
  %v1029 = vpack.c.b16 %v653, %v649
  %v1030 = vpack.c.b16 %v654, %v650
  %v1031 = vpack.c.b16 %v655, %v651
  %v1032 = vpack.c.b16 %v656, %v652
  %v1033 = vpack.c.b16 %v661, %v657
  %v1034 = vpack.c.b16 %v662, %v658
  %v1035 = vpack.c.b16 %v663, %v659
  %v1036 = vpack.c.b16 %v664, %v660
  %v1037 = vpack.c.b16 %v669, %v665
  %v1038 = vpack.c.b16 %v670, %v666
  %v1039 = vpack.c.b16 %v671, %v667
  %v1040 = vpack.c.b16 %v672, %v668
  %v1041 = vpack.c.b16 %v677, %v673
  %v1042 = vpack.c.b16 %v678, %v674
  %v1043 = vpack.c.b16 %v679, %v675
  %v1044 = vpack.c.b16 %v680, %v676
  %v1045 = vpack.c.b16 %v685, %v681
  %v1046 = vpack.c.b16 %v686, %v682
  %v1047 = vpack.c.b16 %v687, %v683
  %v1048 = vpack.c.b16 %v688, %v684
  %v1049 = vpack.c.b16 %v693, %v689
  %v1050 = vpack.c.b16 %v694, %v690
  %v1051 = vpack.c.b16 %v695, %v691
  %v1052 = vpack.c.b16 %v696, %v692
  %v1053 = vpack.c.b16 %v701, %v697
  %v1054 = vpack.c.b16 %v702, %v698
  %v1055 = vpack.c.b16 %v703, %v699
  %v1056 = vpack.c.b16 %v704, %v700
  %v1057 = vpack.c.b16 %v709, %v705
  %v1058 = vpack.c.b16 %v710, %v706
  %v1059 = vpack.c.b16 %v711, %v707
  %v1060 = vpack.c.b16 %v712, %v708
  %v1061 = vpack.c.b16 %v717, %v713
  %v1062 = vpack.c.b16 %v718, %v714
  %v1063 = vpack.c.b16 %v719, %v715
  %v1064 = vpack.c.b16 %v720, %v716
  %v1065 = vpack.c.b16 %v725, %v721
  %v1066 = vpack.c.b16 %v726, %v722
  %v1067 = vpack.c.b16 %v727, %v723
  %v1068 = vpack.c.b16 %v728, %v724
  %v1069 = vpack.c.b16 %v733, %v729
  %v1070 = vpack.c.b16 %v734, %v730
  %v1071 = vpack.c.b16 %v735, %v731
  %v1072 = vpack.c.b16 %v736, %v732
  %v1073 = vpack.c.b16 %v741, %v737
  %v1074 = vpack.c.b16 %v742, %v738
  %v1075 = vpack.c.b16 %v743, %v739
  %v1076 = vpack.c.b16 %v744, %v740
  %v1077 = vpack.c.b16 %v749, %v745
  %v1078 = vpack.c.b16 %v750, %v746
  %v1079 = vpack.c.b16 %v751, %v747
  %v1080 = vpack.c.b16 %v752, %v748
  %v1081 = vpack.c.b16 %v757, %v753
  %v1082 = vpack.c.b16 %v758, %v754
  %v1083 = vpack.c.b16 %v759, %v755
  %v1084 = vpack.c.b16 %v760, %v756
  %v1085 = vpack.c.b16 %v765, %v761
  %v1086 = vpack.c.b16 %v766, %v762
  %v1087 = vpack.c.b16 %v767, %v763
  %v1088 = vpack.c.b16 %v768, %v764
  %v1089 = vpack.c.b16 %v773, %v769
  %v1090 = vpack.c.b16 %v774, %v770
  %v1091 = vpack.c.b16 %v775, %v771
  %v1092 = vpack.c.b16 %v776, %v772
  %v1093 = vpack.c.b16 %v781, %v777
  %v1094 = vpack.c.b16 %v782, %v778
  %v1095 = vpack.c.b16 %v783, %v779
  %v1096 = vpack.c.b16 %v784, %v780
  %v1097 = vpack.c.b16 %v789, %v785
  %v1098 = vpack.c.b16 %v790, %v786
  %v1099 = vpack.c.b16 %v791, %v787
  %v1100 = vpack.c.b16 %v792, %v788
  %v1101 = vpack.c.b16 %v797, %v793
  %v1102 = vpack.c.b16 %v798, %v794
  %v1103 = vpack.c.b16 %v799, %v795
  %v1104 = vpack.c.b16 %v800, %v796
  %v1105 = vpack.c.b16 %v805, %v801
  %v1106 = vpack.c.b16 %v806, %v802
  %v1107 = vpack.c.b16 %v807, %v803
  %v1108 = vpack.c.b16 %v808, %v804
  %v1109 = vpack.c.b16 %v813, %v809
  %v1110 = vpack.c.b16 %v814, %v810
  %v1111 = vpack.c.b16 %v815, %v811
  %v1112 = vpack.c.b16 %v816, %v812
  %v1113 = vpack.c.b16 %v821, %v817
  %v1114 = vpack.c.b16 %v822, %v818
  %v1115 = vpack.c.b16 %v823, %v819
  %v1116 = vpack.c.b16 %v824, %v820
  %v1117 = vpack.c.b16 %v829, %v825
  %v1118 = vpack.c.b16 %v830, %v826
  %v1119 = vpack.c.b16 %v831, %v827
  %v1120 = vpack.c.b16 %v832, %v828
  %v1121 = vpack.c.b16 %v837, %v833
  %v1122 = vpack.c.b16 %v838, %v834
  %v1123 = vpack.c.b16 %v839, %v835
  %v1124 = vpack.c.b16 %v840, %v836
  %v1125 = vpack.c.b16 %v845, %v841
  %v1126 = vpack.c.b16 %v846, %v842
  %v1127 = vpack.c.b16 %v847, %v843
  %v1128 = vpack.c.b16 %v848, %v844
  %v1129 = vpack.c.b16 %v853, %v849
  %v1130 = vpack.c.b16 %v854, %v850
  %v1131 = vpack.c.b16 %v855, %v851
  %v1132 = vpack.c.b16 %v856, %v852
  %v1133 = vpack.c.b16 %v861, %v857
  %v1134 = vpack.c.b16 %v862, %v858
  %v1135 = vpack.c.b16 %v863, %v859
  %v1136 = vpack.c.b16 %v864, %v860
  %v1137 = vpack.c.b16 %v869, %v865
  %v1138 = vpack.c.b16 %v870, %v866
  %v1139 = vpack.c.b16 %v871, %v867
  %v1140 = vpack.c.b16 %v872, %v868
  %v1141 = vpack.c.b16 %v877, %v873
  %v1142 = vpack.c.b16 %v878, %v874
  %v1143 = vpack.c.b16 %v879, %v875
  %v1144 = vpack.c.b16 %v880, %v876
  %v1145 = vpack.c.b16 %v885, %v881
  %v1146 = vpack.c.b16 %v886, %v882
  %v1147 = vpack.c.b16 %v887, %v883
  %v1148 = vpack.c.b16 %v888, %v884
  %v1149 = vpack.c.b16 %v893, %v889
  %v1150 = vpack.c.b16 %v894, %v890
  %v1151 = vpack.c.b16 %v895, %v891
  %v1152 = vpack.c.b16 %v896, %v892
  %v1153 = vpack.c.b16 %v901, %v897
  %v1154 = vpack.c.b16 %v902, %v898
  %v1155 = vpack.c.b16 %v903, %v899
  %v1156 = vpack.c.b16 %v904, %v900
  %v1157 = vpack.c.b16 %v909, %v905
  %v1158 = vpack.c.b16 %v910, %v906
  %v1159 = vpack.c.b16 %v911, %v907
  %v1160 = vpack.c.b16 %v912, %v908
  %v1161 = vpack.c.b16 %v917, %v913
  %v1162 = vpack.c.b16 %v918, %v914
  %v1163 = vpack.c.b16 %v919, %v915
  %v1164 = vpack.c.b16 %v920, %v916
  %v1165 = vpack.c.b16 %v925, %v921
  %v1166 = vpack.c.b16 %v926, %v922
  %v1167 = vpack.c.b16 %v927, %v923
  %v1168 = vpack.c.b16 %v928, %v924
  %v1169 = vpack.c.b16 %v933, %v929
  %v1170 = vpack.c.b16 %v934, %v930
  %v1171 = vpack.c.b16 %v935, %v931
  %v1172 = vpack.c.b16 %v936, %v932
  %v1173 = vpack.c.b16 %v941, %v937
  %v1174 = vpack.c.b16 %v942, %v938
  %v1175 = vpack.c.b16 %v943, %v939
  %v1176 = vpack.c.b16 %v944, %v940
  %v1177 = vpack.c.b16 %v949, %v945
  %v1178 = vpack.c.b16 %v950, %v946
  %v1179 = vpack.c.b16 %v951, %v947
  %v1180 = vpack.c.b16 %v952, %v948
  %v1181 = vpack.c.b16 %v957, %v953
  %v1182 = vpack.c.b16 %v958, %v954
  %v1183 = vpack.c.b16 %v959, %v955
  %v1184 = vpack.c.b16 %v960, %v956
  %1409 = vmatprep.subr.bf16.mxu0 %v962
  %1410 = vmatpush1.bf16.msra.mxu0 %v961
  %1411 = vmatprep.subr.bf16.mxu0 %v966
  %1412 = vmatpush1.bf16.msra.mxu0 %v965
  %1413 = vmatprep.subr.bf16.mxu0 %v970
  %1414 = vmatpush1.bf16.msra.mxu0 %v969
  %1415 = vmatprep.subr.bf16.mxu0 %v974
  %1416 = vmatpush1.bf16.msra.mxu0 %v973
  %1417 = vmatprep.subr.bf16.mxu0 %v978
  %1418 = vmatpush1.bf16.msra.mxu0 %v977
  %1419 = vmatprep.subr.bf16.mxu0 %v982
  %1420 = vmatpush1.bf16.msra.mxu0 %v981
  %1421 = vmatprep.subr.bf16.mxu0 %v986
  %1422 = vmatpush1.bf16.msra.mxu0 %v985
  %1423 = vmatprep.subr.bf16.mxu0 %v990
  %1424 = vmatpush1.bf16.msra.mxu0 %v989
  %1425 = vmatprep.subr.bf16.mxu0 %v994
  %1426 = vmatpush1.bf16.msra.mxu0 %v993
  %1427 = vmatprep.subr.bf16.mxu0 %v998
  %1428 = vmatpush1.bf16.msra.mxu0 %v997
  %1429 = vmatprep.subr.bf16.mxu0 %v1002
  %1430 = vmatpush1.bf16.msra.mxu0 %v1001
  %1431 = vmatprep.subr.bf16.mxu0 %v1006
  %1432 = vmatpush1.bf16.msra.mxu0 %v1005
  %1433 = vmatprep.subr.bf16.mxu0 %v1010
  %1434 = vmatpush1.bf16.msra.mxu0 %v1009
  %1435 = vmatprep.subr.bf16.mxu0 %v1014
  %1436 = vmatpush1.bf16.msra.mxu0 %v1013
  %1437 = vmatprep.subr.bf16.mxu0 %v1018
  %1438 = vmatpush1.bf16.msra.mxu0 %v1017
  %1439 = vmatprep.subr.bf16.mxu0 %v1022
  %1440 = vmatpush1.bf16.msra.mxu0 %v1021
  %1441 = vmatprep.mubr.bf16.mxu0 %v276
  %1442 = vmatmul.mubr.bf16.gmra.mrb[0].mxu0 %v275
  %v1443 = vpop.f32.mrb[0].mxu0
  %v1444 = vadd.f32 0.0, %v1443
  %v1445 = vpop.f32.mrb[0].mxu0
  %v1446 = vadd.f32 0.0, %v1445
  %v1447 = vpop.f32.mrb[0].mxu0
  %v1448 = vadd.f32 0.0, %v1447
  %v1449 = vpop.f32.mrb[0].mxu0
  %v1450 = vadd.f32 0.0, %v1449
  %1451 = vdwg.mxu0
  %1452 = vmatprep.subr.bf16.mxu0 %v1026
  %1453 = vmatpush1.bf16.msra.mxu0 %v1025
  %1454 = vmatprep.subr.bf16.mxu0 %v1030
  %1455 = vmatpush1.bf16.msra.mxu0 %v1029
  %1456 = vmatprep.subr.bf16.mxu0 %v1034
  %1457 = vmatpush1.bf16.msra.mxu0 %v1033
  %1458 = vmatprep.subr.bf16.mxu0 %v1038
  %1459 = vmatpush1.bf16.msra.mxu0 %v1037
  %1460 = vmatprep.subr.bf16.mxu0 %v1042
  %1461 = vmatpush1.bf16.msra.mxu0 %v1041
  %1462 = vmatprep.subr.bf16.mxu0 %v1046
  %1463 = vmatpush1.bf16.msra.mxu0 %v1045
  %1464 = vmatprep.subr.bf16.mxu0 %v1050
  %1465 = vmatpush1.bf16.msra.mxu0 %v1049
  %1466 = vmatprep.subr.bf16.mxu0 %v1054
  %1467 = vmatpush1.bf16.msra.mxu0 %v1053
  %1468 = vmatprep.subr.bf16.mxu0 %v1058
  %1469 = vmatpush1.bf16.msra.mxu0 %v1057
  %1470 = vmatprep.subr.bf16.mxu0 %v1062
  %1471 = vmatpush1.bf16.msra.mxu0 %v1061
  %1472 = vmatprep.subr.bf16.mxu0 %v1066
  %1473 = vmatpush1.bf16.msra.mxu0 %v1065
  %1474 = vmatprep.subr.bf16.mxu0 %v1070
  %1475 = vmatpush1.bf16.msra.mxu0 %v1069
  %1476 = vmatprep.subr.bf16.mxu0 %v1074
  %1477 = vmatpush1.bf16.msra.mxu0 %v1073
  %1478 = vmatprep.subr.bf16.mxu0 %v1078
  %1479 = vmatpush1.bf16.msra.mxu0 %v1077
  %1480 = vmatprep.subr.bf16.mxu0 %v1082
  %1481 = vmatpush1.bf16.msra.mxu0 %v1081
  %1482 = vmatprep.subr.bf16.mxu0 %v1086
  %1483 = vmatpush1.bf16.msra.mxu0 %v1085
  %1484 = vmatprep.mubr.bf16.mxu0 %v278
  %1485 = vmatmul.mubr.bf16.gmra.mrb[0].mxu0 %v277
  %v1486 = vpop.f32.mrb[0].mxu0
  %v1487 = vadd.f32 %v1444, %v1486
  %v1488 = vpop.f32.mrb[0].mxu0
  %v1489 = vadd.f32 %v1446, %v1488
  %v1490 = vpop.f32.mrb[0].mxu0
  %v1491 = vadd.f32 %v1448, %v1490
  %v1492 = vpop.f32.mrb[0].mxu0
  %v1493 = vadd.f32 %v1450, %v1492
  %1494 = vdwg.mxu0
  %1495 = vmatprep.subr.bf16.mxu0 %v1090
  %1496 = vmatpush1.bf16.msra.mxu0 %v1089
  %1497 = vmatprep.subr.bf16.mxu0 %v1094
  %1498 = vmatpush1.bf16.msra.mxu0 %v1093
  %1499 = vmatprep.subr.bf16.mxu0 %v1098
  %1500 = vmatpush1.bf16.msra.mxu0 %v1097
  %1501 = vmatprep.subr.bf16.mxu0 %v1102
  %1502 = vmatpush1.bf16.msra.mxu0 %v1101
  %1503 = vmatprep.subr.bf16.mxu0 %v1106
  %1504 = vmatpush1.bf16.msra.mxu0 %v1105
  %1505 = vmatprep.subr.bf16.mxu0 %v1110
  %1506 = vmatpush1.bf16.msra.mxu0 %v1109
  %1507 = vmatprep.subr.bf16.mxu0 %v1114
  %1508 = vmatpush1.bf16.msra.mxu0 %v1113
  %1509 = vmatprep.subr.bf16.mxu0 %v1118
  %1510 = vmatpush1.bf16.msra.mxu0 %v1117
  %1511 = vmatprep.subr.bf16.mxu0 %v1122
  %1512 = vmatpush1.bf16.msra.mxu0 %v1121
  %1513 = vmatprep.subr.bf16.mxu0 %v1126
  %1514 = vmatpush1.bf16.msra.mxu0 %v1125
  %1515 = vmatprep.subr.bf16.mxu0 %v1130
  %1516 = vmatpush1.bf16.msra.mxu0 %v1129
  %1517 = vmatprep.subr.bf16.mxu0 %v1134
  %1518 = vmatpush1.bf16.msra.mxu0 %v1133
  %1519 = vmatprep.subr.bf16.mxu0 %v1138
  %1520 = vmatpush1.bf16.msra.mxu0 %v1137
  %1521 = vmatprep.subr.bf16.mxu0 %v1142
  %1522 = vmatpush1.bf16.msra.mxu0 %v1141
  %1523 = vmatprep.subr.bf16.mxu0 %v1146
  %1524 = vmatpush1.bf16.msra.mxu0 %v1145
  %1525 = vmatprep.subr.bf16.mxu0 %v1150
  %1526 = vmatpush1.bf16.msra.mxu0 %v1149
  %1527 = vmatprep.mubr.bf16.mxu0 %v280
  %1528 = vmatmul.mubr.bf16.gmra.mrb[0].mxu0 %v279
  %v1529 = vpop.f32.mrb[0].mxu0
  %v1530 = vadd.f32 %v1487, %v1529
  %v1531 = vpop.f32.mrb[0].mxu0
  %v1532 = vadd.f32 %v1489, %v1531
  %v1533 = vpop.f32.mrb[0].mxu0
  %v1534 = vadd.f32 %v1491, %v1533
  %v1535 = vpop.f32.mrb[0].mxu0
  %v1536 = vadd.f32 %v1493, %v1535
  %1537 = vdwg.mxu0
  %1538 = vmatprep.subr.bf16.mxu0 %v1154
  %1539 = vmatpush1.bf16.msra.mxu0 %v1153
  %1540 = vmatprep.subr.bf16.mxu0 %v1158
  %1541 = vmatpush1.bf16.msra.mxu0 %v1157
  %1542 = vmatprep.subr.bf16.mxu0 %v1162
  %1543 = vmatpush1.bf16.msra.mxu0 %v1161
  %1544 = vmatprep.subr.bf16.mxu0 %v1166
  %1545 = vmatpush1.bf16.msra.mxu0 %v1165
  %1546 = vmatprep.subr.bf16.mxu0 %v1170
  %1547 = vmatpush1.bf16.msra.mxu0 %v1169
  %1548 = vmatprep.subr.bf16.mxu0 %v1174
  %1549 = vmatpush1.bf16.msra.mxu0 %v1173
  %1550 = vmatprep.subr.bf16.mxu0 %v1178
  %1551 = vmatpush1.bf16.msra.mxu0 %v1177
  %1552 = vmatprep.subr.bf16.mxu0 %v1182
  %1553 = vmatpush1.bf16.msra.mxu0 %v1181
  %1554 = vmatprep.subr.bf16.mxu0 0
  %1555 = vmatpush1.bf16.msra.mxu0 0
  %1556 = vmatprep.subr.bf16.mxu0 0
  %1557 = vmatpush1.bf16.msra.mxu0 0
  %1558 = vmatprep.subr.bf16.mxu0 0
  %1559 = vmatpush1.bf16.msra.mxu0 0
  %1560 = vmatprep.subr.bf16.mxu0 0
  %1561 = vmatpush1.bf16.msra.mxu0 0
  %1562 = vmatprep.subr.bf16.mxu0 0
  %1563 = vmatpush1.bf16.msra.mxu0 0
  %1564 = vmatprep.subr.bf16.mxu0 0
  %1565 = vmatpush1.bf16.msra.mxu0 0
  %1566 = vmatprep.subr.bf16.mxu0 0
  %1567 = vmatpush1.bf16.msra.mxu0 0
  %1568 = vmatprep.subr.bf16.mxu0 0
  %1569 = vmatpush1.bf16.msra.mxu0 0
  %1570 = vmatprep.mubr.bf16.mxu0 0
  %1571 = vmatmul.mubr.bf16.gmra.mrb[0].mxu0 %v281
  %v1572 = vpop.f32.mrb[0].mxu0
  %v1573 = vadd.f32 %v1530, %v1572
  %v1574 = vpop.f32.mrb[0].mxu0
  %v1575 = vadd.f32 %v1532, %v1574
  %v1576 = vpop.f32.mrb[0].mxu0
  %v1577 = vadd.f32 %v1534, %v1576
  %v1578 = vpop.f32.mrb[0].mxu0
  %v1579 = vadd.f32 %v1536, %v1578
  %1580 = vdwg.mxu0
  %1581 = vmatprep.subr.bf16.mxu0 %v964
  %1582 = vmatpush1.bf16.msra.mxu0 %v963
  %1583 = vmatprep.subr.bf16.mxu0 %v968
  %1584 = vmatpush1.bf16.msra.mxu0 %v967
  %1585 = vmatprep.subr.bf16.mxu0 %v972
  %1586 = vmatpush1.bf16.msra.mxu0 %v971
  %1587 = vmatprep.subr.bf16.mxu0 %v976
  %1588 = vmatpush1.bf16.msra.mxu0 %v975
  %1589 = vmatprep.subr.bf16.mxu0 %v980
  %1590 = vmatpush1.bf16.msra.mxu0 %v979
  %1591 = vmatprep.subr.bf16.mxu0 %v984
  %1592 = vmatpush1.bf16.msra.mxu0 %v983
  %1593 = vmatprep.subr.bf16.mxu0 %v988
  %1594 = vmatpush1.bf16.msra.mxu0 %v987
  %1595 = vmatprep.subr.bf16.mxu0 %v992
  %1596 = vmatpush1.bf16.msra.mxu0 %v991
  %1597 = vmatprep.subr.bf16.mxu0 %v996
  %1598 = vmatpush1.bf16.msra.mxu0 %v995
  %1599 = vmatprep.subr.bf16.mxu0 %v1000
  %1600 = vmatpush1.bf16.msra.mxu0 %v999
  %1601 = vmatprep.subr.bf16.mxu0 %v1004
  %1602 = vmatpush1.bf16.msra.mxu0 %v1003
  %1603 = vmatprep.subr.bf16.mxu0 %v1008
  %1604 = vmatpush1.bf16.msra.mxu0 %v1007
  %1605 = vmatprep.subr.bf16.mxu0 %v1012
  %1606 = vmatpush1.bf16.msra.mxu0 %v1011
  %1607 = vmatprep.subr.bf16.mxu0 %v1016
  %1608 = vmatpush1.bf16.msra.mxu0 %v1015
  %1609 = vmatprep.subr.bf16.mxu0 %v1020
  %1610 = vmatpush1.bf16.msra.mxu0 %v1019
  %1611 = vmatprep.subr.bf16.mxu0 %v1024
  %1612 = vmatpush1.bf16.msra.mxu0 %v1023
  %1613 = vmatprep.mubr.bf16.mxu0 %v276
  %1614 = vmatmul.mubr.bf16.gmra.mrb[0].mxu0 %v275
  %v1615 = vpop.f32.mrb[0].mxu0
  %v1616 = vadd.f32 0.0, %v1615
  %v1617 = vpop.f32.mrb[0].mxu0
  %v1618 = vadd.f32 0.0, %v1617
  %v1619 = vpop.f32.mrb[0].mxu0
  %v1620 = vadd.f32 0.0, %v1619
  %v1621 = vpop.f32.mrb[0].mxu0
  %v1622 = vadd.f32 0.0, %v1621
  %1623 = vdwg.mxu0
  %1624 = vmatprep.subr.bf16.mxu0 %v1028
  %1625 = vmatpush1.bf16.msra.mxu0 %v1027
  %1626 = vmatprep.subr.bf16.mxu0 %v1032
  %1627 = vmatpush1.bf16.msra.mxu0 %v1031
  %1628 = vmatprep.subr.bf16.mxu0 %v1036
  %1629 = vmatpush1.bf16.msra.mxu0 %v1035
  %1630 = vmatprep.subr.bf16.mxu0 %v1040
  %1631 = vmatpush1.bf16.msra.mxu0 %v1039
  %1632 = vmatprep.subr.bf16.mxu0 %v1044
  %1633 = vmatpush1.bf16.msra.mxu0 %v1043
  %1634 = vmatprep.subr.bf16.mxu0 %v1048
  %1635 = vmatpush1.bf16.msra.mxu0 %v1047
  %1636 = vmatprep.subr.bf16.mxu0 %v1052
  %1637 = vmatpush1.bf16.msra.mxu0 %v1051
  %1638 = vmatprep.subr.bf16.mxu0 %v1056
  %1639 = vmatpush1.bf16.msra.mxu0 %v1055
  %1640 = vmatprep.subr.bf16.mxu0 %v1060
  %1641 = vmatpush1.bf16.msra.mxu0 %v1059
  %1642 = vmatprep.subr.bf16.mxu0 %v1064
  %1643 = vmatpush1.bf16.msra.mxu0 %v1063
  %1644 = vmatprep.subr.bf16.mxu0 %v1068
  %1645 = vmatpush1.bf16.msra.mxu0 %v1067
  %1646 = vmatprep.subr.bf16.mxu0 %v1072
  %1647 = vmatpush1.bf16.msra.mxu0 %v1071
  %1648 = vmatprep.subr.bf16.mxu0 %v1076
  %1649 = vmatpush1.bf16.msra.mxu0 %v1075
  %1650 = vmatprep.subr.bf16.mxu0 %v1080
  %1651 = vmatpush1.bf16.msra.mxu0 %v1079
  %1652 = vmatprep.subr.bf16.mxu0 %v1084
  %1653 = vmatpush1.bf16.msra.mxu0 %v1083
  %1654 = vmatprep.subr.bf16.mxu0 %v1088
  %1655 = vmatpush1.bf16.msra.mxu0 %v1087
  %1656 = vmatprep.mubr.bf16.mxu0 %v278
  %1657 = vmatmul.mubr.bf16.gmra.mrb[0].mxu0 %v277
  %v1658 = vpop.f32.mrb[0].mxu0
  %v1659 = vadd.f32 %v1616, %v1658
  %v1660 = vpop.f32.mrb[0].mxu0
  %v1661 = vadd.f32 %v1618, %v1660
  %v1662 = vpop.f32.mrb[0].mxu0
  %v1663 = vadd.f32 %v1620, %v1662
  %v1664 = vpop.f32.mrb[0].mxu0
  %v1665 = vadd.f32 %v1622, %v1664
  %1666 = vdwg.mxu0
  %1667 = vmatprep.subr.bf16.mxu0 %v1092
  %1668 = vmatpush1.bf16.msra.mxu0 %v1091
  %1669 = vmatprep.subr.bf16.mxu0 %v1096
  %1670 = vmatpush1.bf16.msra.mxu0 %v1095
  %1671 = vmatprep.subr.bf16.mxu0 %v1100
  %1672 = vmatpush1.bf16.msra.mxu0 %v1099
  %1673 = vmatprep.subr.bf16.mxu0 %v1104
  %1674 = vmatpush1.bf16.msra.mxu0 %v1103
  %1675 = vmatprep.subr.bf16.mxu0 %v1108
  %1676 = vmatpush1.bf16.msra.mxu0 %v1107
  %1677 = vmatprep.subr.bf16.mxu0 %v1112
  %1678 = vmatpush1.bf16.msra.mxu0 %v1111
  %1679 = vmatprep.subr.bf16.mxu0 %v1116
  %1680 = vmatpush1.bf16.msra.mxu0 %v1115
  %1681 = vmatprep.subr.bf16.mxu0 %v1120
  %1682 = vmatpush1.bf16.msra.mxu0 %v1119
  %1683 = vmatprep.subr.bf16.mxu0 %v1124
  %1684 = vmatpush1.bf16.msra.mxu0 %v1123
  %1685 = vmatprep.subr.bf16.mxu0 %v1128
  %1686 = vmatpush1.bf16.msra.mxu0 %v1127
  %1687 = vmatprep.subr.bf16.mxu0 %v1132
  %1688 = vmatpush1.bf16.msra.mxu0 %v1131
  %1689 = vmatprep.subr.bf16.mxu0 %v1136
  %1690 = vmatpush1.bf16.msra.mxu0 %v1135
  %1691 = vmatprep.subr.bf16.mxu0 %v1140
  %1692 = vmatpush1.bf16.msra.mxu0 %v1139
  %1693 = vmatprep.subr.bf16.mxu0 %v1144
  %1694 = vmatpush1.bf16.msra.mxu0 %v1143
  %1695 = vmatprep.subr.bf16.mxu0 %v1148
  %1696 = vmatpush1.bf16.msra.mxu0 %v1147
  %1697 = vmatprep.subr.bf16.mxu0 %v1152
  %1698 = vmatpush1.bf16.msra.mxu0 %v1151
  %1699 = vmatprep.mubr.bf16.mxu0 %v280
  %1700 = vmatmul.mubr.bf16.gmra.mrb[0].mxu0 %v279
  %v1701 = vpop.f32.mrb[0].mxu0
  %v1702 = vadd.f32 %v1659, %v1701
  %v1703 = vpop.f32.mrb[0].mxu0
  %v1704 = vadd.f32 %v1661, %v1703
  %v1705 = vpop.f32.mrb[0].mxu0
  %v1706 = vadd.f32 %v1663, %v1705
  %v1707 = vpop.f32.mrb[0].mxu0
  %v1708 = vadd.f32 %v1665, %v1707
  %1709 = vdwg.mxu0
  %1710 = vmatprep.subr.bf16.mxu0 %v1156
  %1711 = vmatpush1.bf16.msra.mxu0 %v1155
  %1712 = vmatprep.subr.bf16.mxu0 %v1160
  %1713 = vmatpush1.bf16.msra.mxu0 %v1159
  %1714 = vmatprep.subr.bf16.mxu0 %v1164
  %1715 = vmatpush1.bf16.msra.mxu0 %v1163
  %1716 = vmatprep.subr.bf16.mxu0 %v1168
  %1717 = vmatpush1.bf16.msra.mxu0 %v1167
  %1718 = vmatprep.subr.bf16.mxu0 %v1172
  %1719 = vmatpush1.bf16.msra.mxu0 %v1171
  %1720 = vmatprep.subr.bf16.mxu0 %v1176
  %1721 = vmatpush1.bf16.msra.mxu0 %v1175
  %1722 = vmatprep.subr.bf16.mxu0 %v1180
  %1723 = vmatpush1.bf16.msra.mxu0 %v1179
  %1724 = vmatprep.subr.bf16.mxu0 %v1184
  %1725 = vmatpush1.bf16.msra.mxu0 %v1183
  %1726 = vmatprep.subr.bf16.mxu0 0
  %1727 = vmatpush1.bf16.msra.mxu0 0
  %1728 = vmatprep.subr.bf16.mxu0 0
  %1729 = vmatpush1.bf16.msra.mxu0 0
  %1730 = vmatprep.subr.bf16.mxu0 0
  %1731 = vmatpush1.bf16.msra.mxu0 0
  %1732 = vmatprep.subr.bf16.mxu0 0
  %1733 = vmatpush1.bf16.msra.mxu0 0
  %1734 = vmatprep.subr.bf16.mxu0 0
  %1735 = vmatpush1.bf16.msra.mxu0 0
  %1736 = vmatprep.subr.bf16.mxu0 0
  %1737 = vmatpush1.bf16.msra.mxu0 0
  %1738 = vmatprep.subr.bf16.mxu0 0
  %1739 = vmatpush1.bf16.msra.mxu0 0
  %1740 = vmatprep.subr.bf16.mxu0 0
  %1741 = vmatpush1.bf16.msra.mxu0 0
  %1742 = vmatprep.mubr.bf16.mxu0 0
  %1743 = vmatmul.mubr.bf16.gmra.mrb[0].mxu0 %v281
  %v1744 = vpop.f32.mrb[0].mxu0
  %v1745 = vadd.f32 %v1702, %v1744
  %v1746 = vpop.f32.mrb[0].mxu0
  %v1747 = vadd.f32 %v1704, %v1746
  %v1748 = vpop.f32.mrb[0].mxu0
  %v1749 = vadd.f32 %v1706, %v1748
  %v1750 = vpop.f32.mrb[0].mxu0
  %v1751 = vadd.f32 %v1708, %v1750
  %1752 = vdwg.mxu0
  %s1753 = scalar_lea.vmem %s1, 1792
  %v1754 = vld [vmem:[%s1753] sm:$0xff]
  %v1755 = vld [vmem:[%s1753 + $0x8] sm:$0xff]
  %v1756 = vld [vmem:[%s1753 + $0x10] sm:$0xff]
  %v1757 = vld [vmem:[%s1753 + $0x18] sm:$0xff]
  %v1758 = vld [vmem:[%s1753 + $0x20] sm:$0xff]
  %v1759 = vld [vmem:[%s1753 + $0x28] sm:$0xff]
  %v1760 = vld [vmem:[%s1753 + $0x30] sm:$0xff]
  %v1761 = vld [vmem:[%s1753 + $0x38] sm:$0xff]
  %v1762 = vld [vmem:[%s1753 + $0x40] sm:$0xff]
  %v1763 = vld [vmem:[%s1753 + $0x48] sm:$0xff]
  %v1764 = vld [vmem:[%s1753 + $0x50] sm:$0xff]
  %v1765 = vld [vmem:[%s1753 + $0x58] sm:$0xff]
  %v1766 = vld [vmem:[%s1753 + $0x60] sm:$0xff]
  %v1767 = vld [vmem:[%s1753 + $0x68] sm:$0xff]
  %v1768 = vld [vmem:[%s1753 + $0x70] sm:$0xff]
  %v1769 = vld [vmem:[%s1753 + $0x78] sm:$0xff]
  %v1770 = vld [vmem:[%s1753 + $0x80] sm:$0xff]
  %v1771 = vld [vmem:[%s1753 + $0x88] sm:$0xff]
  %v1772 = vld [vmem:[%s1753 + $0x90] sm:$0xff]
  %v1773 = vld [vmem:[%s1753 + $0x98] sm:$0xff]
  %v1774 = vld [vmem:[%s1753 + $0xa0] sm:$0xff]
  %v1775 = vld [vmem:[%s1753 + $0xa8] sm:$0xff]
  %v1776 = vld [vmem:[%s1753 + $0xb0] sm:$0xff]
  %v1777 = vld [vmem:[%s1753 + $0xb8] sm:$0xff]
  %v1778 = vld [vmem:[%s1753 + $0xc0] sm:$0xff]
  %v1779 = vld [vmem:[%s1753 + $0xc8] sm:$0xff]
  %v1780 = vld [vmem:[%s1753 + $0xd0] sm:$0xff]
  %v1781 = vld [vmem:[%s1753 + $0xd8] sm:$0xff]
  %v1782 = vld [vmem:[%s1753 + $0xe0] sm:$0xff]
  %v1783 = vld [vmem:[%s1753 + $0xe8] sm:$0xff]
  %v1784 = vld [vmem:[%s1753 + $0xf0] sm:$0xff]
  %v1785 = vld [vmem:[%s1753 + $0xf8] sm:$0xff]
  %v1786 = vld [vmem:[%s1753 + $0x100] sm:$0xff]
  %v1787 = vld [vmem:[%s1753 + $0x108] sm:$0xff]
  %v1788 = vld [vmem:[%s1753 + $0x110] sm:$0xff]
  %v1789 = vld [vmem:[%s1753 + $0x118] sm:$0xff]
  %v1790 = vld [vmem:[%s1753 + $0x120] sm:$0xff]
  %v1791 = vld [vmem:[%s1753 + $0x128] sm:$0xff]
  %v1792 = vld [vmem:[%s1753 + $0x130] sm:$0xff]
  %v1793 = vld [vmem:[%s1753 + $0x138] sm:$0xff]
  %v1794 = vld [vmem:[%s1753 + $0x140] sm:$0xff]
  %v1795 = vld [vmem:[%s1753 + $0x148] sm:$0xff]
  %v1796 = vld [vmem:[%s1753 + $0x150] sm:$0xff]
  %v1797 = vld [vmem:[%s1753 + $0x158] sm:$0xff]
  %v1798 = vld [vmem:[%s1753 + $0x160] sm:$0xff]
  %v1799 = vld [vmem:[%s1753 + $0x168] sm:$0xff]
  %v1800 = vld [vmem:[%s1753 + $0x170] sm:$0xff]
  %v1801 = vld [vmem:[%s1753 + $0x178] sm:$0xff]
  %v1802 = vld [vmem:[%s1753 + $0x180] sm:$0xff]
  %v1803 = vld [vmem:[%s1753 + $0x188] sm:$0xff]
  %v1804 = vld [vmem:[%s1753 + $0x190] sm:$0xff]
  %v1805 = vld [vmem:[%s1753 + $0x198] sm:$0xff]
  %v1806 = vld [vmem:[%s1753 + $0x1a0] sm:$0xff]
  %v1807 = vld [vmem:[%s1753 + $0x1a8] sm:$0xff]
  %v1808 = vld [vmem:[%s1753 + $0x1b0] sm:$0xff]
  %v1809 = vld [vmem:[%s1753 + $0x1b8] sm:$0xff]
  %v1810 = vld [vmem:[%s1753 + $0x1c0] sm:$0xff]
  %v1811 = vld [vmem:[%s1753 + $0x1c8] sm:$0xff]
  %v1812 = vld [vmem:[%s1753 + $0x1d0] sm:$0xff]
  %v1813 = vld [vmem:[%s1753 + $0x1d8] sm:$0xff]
  %v1814 = vld [vmem:[%s1753 + $0x1e0] sm:$0xff]
  %v1815 = vld [vmem:[%s1753 + $0x1e8] sm:$0xff]
  %v1816 = vld [vmem:[%s1753 + $0x1f0] sm:$0xff]
  %v1817 = vld [vmem:[%s1753 + $0x1f8] sm:$0xff]
  %v1818 = vld [vmem:[%s1753 + $0x200] sm:$0xff]
  %v1819 = vld [vmem:[%s1753 + $0x208] sm:$0xff]
  %v1820 = vld [vmem:[%s1753 + $0x210] sm:$0xff]
  %v1821 = vld [vmem:[%s1753 + $0x218] sm:$0xff]
  %v1822 = vld [vmem:[%s1753 + $0x220] sm:$0xff]
  %v1823 = vld [vmem:[%s1753 + $0x228] sm:$0xff]
  %v1824 = vld [vmem:[%s1753 + $0x230] sm:$0xff]
  %v1825 = vld [vmem:[%s1753 + $0x238] sm:$0xff]
  %v1826 = vld [vmem:[%s1753 + $0x240] sm:$0xff]
  %v1827 = vld [vmem:[%s1753 + $0x248] sm:$0xff]
  %v1828 = vld [vmem:[%s1753 + $0x250] sm:$0xff]
  %v1829 = vld [vmem:[%s1753 + $0x258] sm:$0xff]
  %v1830 = vld [vmem:[%s1753 + $0x260] sm:$0xff]
  %v1831 = vld [vmem:[%s1753 + $0x268] sm:$0xff]
  %v1832 = vld [vmem:[%s1753 + $0x270] sm:$0xff]
  %v1833 = vld [vmem:[%s1753 + $0x278] sm:$0xff]
  %v1834 = vld [vmem:[%s1753 + $0x280] sm:$0xff]
  %v1835 = vld [vmem:[%s1753 + $0x288] sm:$0xff]
  %v1836 = vld [vmem:[%s1753 + $0x290] sm:$0xff]
  %v1837 = vld [vmem:[%s1753 + $0x298] sm:$0xff]
  %v1838 = vld [vmem:[%s1753 + $0x2a0] sm:$0xff]
  %v1839 = vld [vmem:[%s1753 + $0x2a8] sm:$0xff]
  %v1840 = vld [vmem:[%s1753 + $0x2b0] sm:$0xff]
  %v1841 = vld [vmem:[%s1753 + $0x2b8] sm:$0xff]
  %v1842 = vld [vmem:[%s1753 + $0x2c0] sm:$0xff]
  %v1843 = vld [vmem:[%s1753 + $0x2c8] sm:$0xff]
  %v1844 = vld [vmem:[%s1753 + $0x2d0] sm:$0xff]
  %v1845 = vld [vmem:[%s1753 + $0x2d8] sm:$0xff]
  %v1846 = vld [vmem:[%s1753 + $0x2e0] sm:$0xff]
  %v1847 = vld [vmem:[%s1753 + $0x2e8] sm:$0xff]
  %v1848 = vld [vmem:[%s1753 + $0x2f0] sm:$0xff]
  %v1849 = vld [vmem:[%s1753 + $0x2f8] sm:$0xff]
  %v1850 = vld [vmem:[%s1753 + $0x300] sm:$0xff]
  %v1851 = vld [vmem:[%s1753 + $0x308] sm:$0xff]
  %v1852 = vld [vmem:[%s1753 + $0x310] sm:$0xff]
  %v1853 = vld [vmem:[%s1753 + $0x318] sm:$0xff]
  %v1854 = vld [vmem:[%s1753 + $0x320] sm:$0xff]
  %v1855 = vld [vmem:[%s1753 + $0x328] sm:$0xff]
  %v1856 = vld [vmem:[%s1753 + $0x330] sm:$0xff]
  %v1857 = vld [vmem:[%s1753 + $0x338] sm:$0xff]
  %v1858 = vld [vmem:[%s1753 + $0x340] sm:$0xff]
  %v1859 = vld [vmem:[%s1753 + $0x348] sm:$0xff]
  %v1860 = vld [vmem:[%s1753 + $0x350] sm:$0xff]
  %v1861 = vld [vmem:[%s1753 + $0x358] sm:$0xff]
  %v1862 = vld [vmem:[%s1753 + $0x360] sm:$0xff]
  %v1863 = vld [vmem:[%s1753 + $0x368] sm:$0xff]
  %v1864 = vld [vmem:[%s1753 + $0x370] sm:$0xff]
  %v1865 = vld [vmem:[%s1753 + $0x378] sm:$0xff]
  %v1866 = vld [vmem:[%s1753 + $0x380] sm:$0xff]
  %v1867 = vld [vmem:[%s1753 + $0x388] sm:$0xff]
  %v1868 = vld [vmem:[%s1753 + $0x390] sm:$0xff]
  %v1869 = vld [vmem:[%s1753 + $0x398] sm:$0xff]
  %v1870 = vld [vmem:[%s1753 + $0x3a0] sm:$0xff]
  %v1871 = vld [vmem:[%s1753 + $0x3a8] sm:$0xff]
  %v1872 = vld [vmem:[%s1753 + $0x3b0] sm:$0xff]
  %v1873 = vld [vmem:[%s1753 + $0x3b8] sm:$0xff]
  %v1874 = vld [vmem:[%s1753 + $0x3c0] sm:$0xff]
  %v1875 = vld [vmem:[%s1753 + $0x3c8] sm:$0xff]
  %v1876 = vld [vmem:[%s1753 + $0x3d0] sm:$0xff]
  %v1877 = vld [vmem:[%s1753 + $0x3d8] sm:$0xff]
  %v1878 = vld [vmem:[%s1753 + $0x3e0] sm:$0xff]
  %v1879 = vld [vmem:[%s1753 + $0x3e8] sm:$0xff]
  %v1880 = vld [vmem:[%s1753 + $0x3f0] sm:$0xff]
  %v1881 = vld [vmem:[%s1753 + $0x3f8] sm:$0xff]
  %v1882 = vld [vmem:[%s1753 + $0x400] sm:$0xff]
  %v1883 = vld [vmem:[%s1753 + $0x408] sm:$0xff]
  %v1884 = vld [vmem:[%s1753 + $0x410] sm:$0xff]
  %v1885 = vld [vmem:[%s1753 + $0x418] sm:$0xff]
  %v1886 = vld [vmem:[%s1753 + $0x420] sm:$0xff]
  %v1887 = vld [vmem:[%s1753 + $0x428] sm:$0xff]
  %v1888 = vld [vmem:[%s1753 + $0x430] sm:$0xff]
  %v1889 = vld [vmem:[%s1753 + $0x438] sm:$0xff]
  %v1890 = vld [vmem:[%s1753 + $0x440] sm:$0xff]
  %v1891 = vld [vmem:[%s1753 + $0x448] sm:$0xff]
  %v1892 = vld [vmem:[%s1753 + $0x450] sm:$0xff]
  %v1893 = vld [vmem:[%s1753 + $0x458] sm:$0xff]
  %v1894 = vld [vmem:[%s1753 + $0x460] sm:$0xff]
  %v1895 = vld [vmem:[%s1753 + $0x468] sm:$0xff]
  %v1896 = vld [vmem:[%s1753 + $0x470] sm:$0xff]
  %v1897 = vld [vmem:[%s1753 + $0x478] sm:$0xff]
  %v1898 = vld [vmem:[%s1753 + $0x480] sm:$0xff]
  %v1899 = vld [vmem:[%s1753 + $0x488] sm:$0xff]
  %v1900 = vld [vmem:[%s1753 + $0x490] sm:$0xff]
  %v1901 = vld [vmem:[%s1753 + $0x498] sm:$0xff]
  %v1902 = vld [vmem:[%s1753 + $0x4a0] sm:$0xff]
  %v1903 = vld [vmem:[%s1753 + $0x4a8] sm:$0xff]
  %v1904 = vld [vmem:[%s1753 + $0x4b0] sm:$0xff]
  %v1905 = vld [vmem:[%s1753 + $0x4b8] sm:$0xff]
  %v1906 = vld [vmem:[%s1753 + $0x4c0] sm:$0xff]
  %v1907 = vld [vmem:[%s1753 + $0x4c8] sm:$0xff]
  %v1908 = vld [vmem:[%s1753 + $0x4d0] sm:$0xff]
  %v1909 = vld [vmem:[%s1753 + $0x4d8] sm:$0xff]
  %v1910 = vld [vmem:[%s1753 + $0x4e0] sm:$0xff]
  %v1911 = vld [vmem:[%s1753 + $0x4e8] sm:$0xff]
  %v1912 = vld [vmem:[%s1753 + $0x4f0] sm:$0xff]
  %v1913 = vld [vmem:[%s1753 + $0x4f8] sm:$0xff]
  %v1914 = vld [vmem:[%s1753 + $0x500] sm:$0xff]
  %v1915 = vld [vmem:[%s1753 + $0x508] sm:$0xff]
  %v1916 = vld [vmem:[%s1753 + $0x510] sm:$0xff]
  %v1917 = vld [vmem:[%s1753 + $0x518] sm:$0xff]
  %v1918 = vld [vmem:[%s1753 + $0x520] sm:$0xff]
  %v1919 = vld [vmem:[%s1753 + $0x528] sm:$0xff]
  %v1920 = vld [vmem:[%s1753 + $0x530] sm:$0xff]
  %v1921 = vld [vmem:[%s1753 + $0x538] sm:$0xff]
  %v1922 = vld [vmem:[%s1753 + $0x540] sm:$0xff]
  %v1923 = vld [vmem:[%s1753 + $0x548] sm:$0xff]
  %v1924 = vld [vmem:[%s1753 + $0x550] sm:$0xff]
  %v1925 = vld [vmem:[%s1753 + $0x558] sm:$0xff]
  %v1926 = vld [vmem:[%s1753 + $0x560] sm:$0xff]
  %v1927 = vld [vmem:[%s1753 + $0x568] sm:$0xff]
  %v1928 = vld [vmem:[%s1753 + $0x570] sm:$0xff]
  %v1929 = vld [vmem:[%s1753 + $0x578] sm:$0xff]
  %v1930 = vld [vmem:[%s1753 + $0x580] sm:$0xff]
  %v1931 = vld [vmem:[%s1753 + $0x588] sm:$0xff]
  %v1932 = vld [vmem:[%s1753 + $0x590] sm:$0xff]
  %v1933 = vld [vmem:[%s1753 + $0x598] sm:$0xff]
  %v1934 = vld [vmem:[%s1753 + $0x5a0] sm:$0xff]
  %v1935 = vld [vmem:[%s1753 + $0x5a8] sm:$0xff]
  %v1936 = vld [vmem:[%s1753 + $0x5b0] sm:$0xff]
  %v1937 = vld [vmem:[%s1753 + $0x5b8] sm:$0xff]
  %v1938 = vld [vmem:[%s1753 + $0x5c0] sm:$0xff]
  %v1939 = vld [vmem:[%s1753 + $0x5c8] sm:$0xff]
  %v1940 = vld [vmem:[%s1753 + $0x5d0] sm:$0xff]
  %v1941 = vld [vmem:[%s1753 + $0x5d8] sm:$0xff]
  %v1942 = vld [vmem:[%s1753 + $0x5e0] sm:$0xff]
  %v1943 = vld [vmem:[%s1753 + $0x5e8] sm:$0xff]
  %v1944 = vld [vmem:[%s1753 + $0x5f0] sm:$0xff]
  %v1945 = vld [vmem:[%s1753 + $0x5f8] sm:$0xff]
  %v1946 = vld [vmem:[%s1753 + $0x600] sm:$0xff]
  %v1947 = vld [vmem:[%s1753 + $0x608] sm:$0xff]
  %v1948 = vld [vmem:[%s1753 + $0x610] sm:$0xff]
  %v1949 = vld [vmem:[%s1753 + $0x618] sm:$0xff]
  %v1950 = vld [vmem:[%s1753 + $0x620] sm:$0xff]
  %v1951 = vld [vmem:[%s1753 + $0x628] sm:$0xff]
  %v1952 = vld [vmem:[%s1753 + $0x630] sm:$0xff]
  %v1953 = vld [vmem:[%s1753 + $0x638] sm:$0xff]
  %v1954 = vld [vmem:[%s1753 + $0x640] sm:$0xff]
  %v1955 = vld [vmem:[%s1753 + $0x648] sm:$0xff]
  %v1956 = vld [vmem:[%s1753 + $0x650] sm:$0xff]
  %v1957 = vld [vmem:[%s1753 + $0x658] sm:$0xff]
  %v1958 = vld [vmem:[%s1753 + $0x660] sm:$0xff]
  %v1959 = vld [vmem:[%s1753 + $0x668] sm:$0xff]
  %v1960 = vld [vmem:[%s1753 + $0x670] sm:$0xff]
  %v1961 = vld [vmem:[%s1753 + $0x678] sm:$0xff]
  %v1962 = vld [vmem:[%s1753 + $0x680] sm:$0xff]
  %v1963 = vld [vmem:[%s1753 + $0x688] sm:$0xff]
  %v1964 = vld [vmem:[%s1753 + $0x690] sm:$0xff]
  %v1965 = vld [vmem:[%s1753 + $0x698] sm:$0xff]
  %v1966 = vld [vmem:[%s1753 + $0x6a0] sm:$0xff]
  %v1967 = vld [vmem:[%s1753 + $0x6a8] sm:$0xff]
  %v1968 = vld [vmem:[%s1753 + $0x6b0] sm:$0xff]
  %v1969 = vld [vmem:[%s1753 + $0x6b8] sm:$0xff]
  %v1970 = vld [vmem:[%s1753 + $0x6c0] sm:$0xff]
  %v1971 = vld [vmem:[%s1753 + $0x6c8] sm:$0xff]
  %v1972 = vld [vmem:[%s1753 + $0x6d0] sm:$0xff]
  %v1973 = vld [vmem:[%s1753 + $0x6d8] sm:$0xff]
  %v1974 = vld [vmem:[%s1753 + $0x6e0] sm:$0xff]
  %v1975 = vld [vmem:[%s1753 + $0x6e8] sm:$0xff]
  %v1976 = vld [vmem:[%s1753 + $0x6f0] sm:$0xff]
  %v1977 = vld [vmem:[%s1753 + $0x6f8] sm:$0xff]
  %v2202 = vunpack.c.l.b16 %v1754
  %v2203 = vunpack.c.h.b16 %v1754
  %v2204 = vunpack.c.l.b16 %v1755
  %v2205 = vunpack.c.h.b16 %v1755
  %v2206 = vunpack.c.l.b16 %v1756
  %v2207 = vunpack.c.h.b16 %v1756
  %v2208 = vunpack.c.l.b16 %v1757
  %v2209 = vunpack.c.h.b16 %v1757
  %v2210 = vunpack.c.l.b16 %v1758
  %v2211 = vunpack.c.h.b16 %v1758
  %v2212 = vunpack.c.l.b16 %v1759
  %v2213 = vunpack.c.h.b16 %v1759
  %v2214 = vunpack.c.l.b16 %v1760
  %v2215 = vunpack.c.h.b16 %v1760
  %v2216 = vunpack.c.l.b16 %v1761
  %v2217 = vunpack.c.h.b16 %v1761
  %v2218 = vunpack.c.l.b16 %v1762
  %v2219 = vunpack.c.h.b16 %v1762
  %v2220 = vunpack.c.l.b16 %v1763
  %v2221 = vunpack.c.h.b16 %v1763
  %v2222 = vunpack.c.l.b16 %v1764
  %v2223 = vunpack.c.h.b16 %v1764
  %v2224 = vunpack.c.l.b16 %v1765
  %v2225 = vunpack.c.h.b16 %v1765
  %v2226 = vunpack.c.l.b16 %v1766
  %v2227 = vunpack.c.h.b16 %v1766
  %v2228 = vunpack.c.l.b16 %v1767
  %v2229 = vunpack.c.h.b16 %v1767
  %v2230 = vunpack.c.l.b16 %v1768
  %v2231 = vunpack.c.h.b16 %v1768
  %v2232 = vunpack.c.l.b16 %v1769
  %v2233 = vunpack.c.h.b16 %v1769
  %v2234 = vunpack.c.l.b16 %v1770
  %v2235 = vunpack.c.h.b16 %v1770
  %v2236 = vunpack.c.l.b16 %v1771
  %v2237 = vunpack.c.h.b16 %v1771
  %v2238 = vunpack.c.l.b16 %v1772
  %v2239 = vunpack.c.h.b16 %v1772
  %v2240 = vunpack.c.l.b16 %v1773
  %v2241 = vunpack.c.h.b16 %v1773
  %v2242 = vunpack.c.l.b16 %v1774
  %v2243 = vunpack.c.h.b16 %v1774
  %v2244 = vunpack.c.l.b16 %v1775
  %v2245 = vunpack.c.h.b16 %v1775
  %v2246 = vunpack.c.l.b16 %v1776
  %v2247 = vunpack.c.h.b16 %v1776
  %v2248 = vunpack.c.l.b16 %v1777
  %v2249 = vunpack.c.h.b16 %v1777
  %v2250 = vunpack.c.l.b16 %v1778
  %v2251 = vunpack.c.h.b16 %v1778
  %v2252 = vunpack.c.l.b16 %v1779
  %v2253 = vunpack.c.h.b16 %v1779
  %v2254 = vunpack.c.l.b16 %v1780
  %v2255 = vunpack.c.h.b16 %v1780
  %v2256 = vunpack.c.l.b16 %v1781
  %v2257 = vunpack.c.h.b16 %v1781
  %v2258 = vunpack.c.l.b16 %v1782
  %v2259 = vunpack.c.h.b16 %v1782
  %v2260 = vunpack.c.l.b16 %v1783
  %v2261 = vunpack.c.h.b16 %v1783
  %v2262 = vunpack.c.l.b16 %v1784
  %v2263 = vunpack.c.h.b16 %v1784
  %v2264 = vunpack.c.l.b16 %v1785
  %v2265 = vunpack.c.h.b16 %v1785
  %v2266 = vunpack.c.l.b16 %v1786
  %v2267 = vunpack.c.h.b16 %v1786
  %v2268 = vunpack.c.l.b16 %v1787
  %v2269 = vunpack.c.h.b16 %v1787
  %v2270 = vunpack.c.l.b16 %v1788
  %v2271 = vunpack.c.h.b16 %v1788
  %v2272 = vunpack.c.l.b16 %v1789
  %v2273 = vunpack.c.h.b16 %v1789
  %v2274 = vunpack.c.l.b16 %v1790
  %v2275 = vunpack.c.h.b16 %v1790
  %v2276 = vunpack.c.l.b16 %v1791
  %v2277 = vunpack.c.h.b16 %v1791
  %v2278 = vunpack.c.l.b16 %v1792
  %v2279 = vunpack.c.h.b16 %v1792
  %v2280 = vunpack.c.l.b16 %v1793
  %v2281 = vunpack.c.h.b16 %v1793
  %v2282 = vunpack.c.l.b16 %v1794
  %v2283 = vunpack.c.h.b16 %v1794
  %v2284 = vunpack.c.l.b16 %v1795
  %v2285 = vunpack.c.h.b16 %v1795
  %v2286 = vunpack.c.l.b16 %v1796
  %v2287 = vunpack.c.h.b16 %v1796
  %v2288 = vunpack.c.l.b16 %v1797
  %v2289 = vunpack.c.h.b16 %v1797
  %v2290 = vunpack.c.l.b16 %v1798
  %v2291 = vunpack.c.h.b16 %v1798
  %v2292 = vunpack.c.l.b16 %v1799
  %v2293 = vunpack.c.h.b16 %v1799
  %v2294 = vunpack.c.l.b16 %v1800
  %v2295 = vunpack.c.h.b16 %v1800
  %v2296 = vunpack.c.l.b16 %v1801
  %v2297 = vunpack.c.h.b16 %v1801
  %v2298 = vunpack.c.l.b16 %v1802
  %v2299 = vunpack.c.h.b16 %v1802
  %v2300 = vunpack.c.l.b16 %v1803
  %v2301 = vunpack.c.h.b16 %v1803
  %v2302 = vunpack.c.l.b16 %v1804
  %v2303 = vunpack.c.h.b16 %v1804
  %v2304 = vunpack.c.l.b16 %v1805
  %v2305 = vunpack.c.h.b16 %v1805
  %v2306 = vunpack.c.l.b16 %v1806
  %v2307 = vunpack.c.h.b16 %v1806
  %v2308 = vunpack.c.l.b16 %v1807
  %v2309 = vunpack.c.h.b16 %v1807
  %v2310 = vunpack.c.l.b16 %v1808
  %v2311 = vunpack.c.h.b16 %v1808
  %v2312 = vunpack.c.l.b16 %v1809
  %v2313 = vunpack.c.h.b16 %v1809
  %v2314 = vunpack.c.l.b16 %v1810
  %v2315 = vunpack.c.h.b16 %v1810
  %v2316 = vunpack.c.l.b16 %v1811
  %v2317 = vunpack.c.h.b16 %v1811
  %v2318 = vunpack.c.l.b16 %v1812
  %v2319 = vunpack.c.h.b16 %v1812
  %v2320 = vunpack.c.l.b16 %v1813
  %v2321 = vunpack.c.h.b16 %v1813
  %v2322 = vunpack.c.l.b16 %v1814
  %v2323 = vunpack.c.h.b16 %v1814
  %v2324 = vunpack.c.l.b16 %v1815
  %v2325 = vunpack.c.h.b16 %v1815
  %v2326 = vunpack.c.l.b16 %v1816
  %v2327 = vunpack.c.h.b16 %v1816
  %v2328 = vunpack.c.l.b16 %v1817
  %v2329 = vunpack.c.h.b16 %v1817
  %v2330 = vunpack.c.l.b16 %v1818
  %v2331 = vunpack.c.h.b16 %v1818
  %v2332 = vunpack.c.l.b16 %v1819
  %v2333 = vunpack.c.h.b16 %v1819
  %v2334 = vunpack.c.l.b16 %v1820
  %v2335 = vunpack.c.h.b16 %v1820
  %v2336 = vunpack.c.l.b16 %v1821
  %v2337 = vunpack.c.h.b16 %v1821
  %v2338 = vunpack.c.l.b16 %v1822
  %v2339 = vunpack.c.h.b16 %v1822
  %v2340 = vunpack.c.l.b16 %v1823
  %v2341 = vunpack.c.h.b16 %v1823
  %v2342 = vunpack.c.l.b16 %v1824
  %v2343 = vunpack.c.h.b16 %v1824
  %v2344 = vunpack.c.l.b16 %v1825
  %v2345 = vunpack.c.h.b16 %v1825
  %v2346 = vunpack.c.l.b16 %v1826
  %v2347 = vunpack.c.h.b16 %v1826
  %v2348 = vunpack.c.l.b16 %v1827
  %v2349 = vunpack.c.h.b16 %v1827
  %v2350 = vunpack.c.l.b16 %v1828
  %v2351 = vunpack.c.h.b16 %v1828
  %v2352 = vunpack.c.l.b16 %v1829
  %v2353 = vunpack.c.h.b16 %v1829
  %v2354 = vunpack.c.l.b16 %v1830
  %v2355 = vunpack.c.h.b16 %v1830
  %v2356 = vunpack.c.l.b16 %v1831
  %v2357 = vunpack.c.h.b16 %v1831
  %v2358 = vunpack.c.l.b16 %v1832
  %v2359 = vunpack.c.h.b16 %v1832
  %v2360 = vunpack.c.l.b16 %v1833
  %v2361 = vunpack.c.h.b16 %v1833
  %v2362 = vunpack.c.l.b16 %v1834
  %v2363 = vunpack.c.h.b16 %v1834
  %v2364 = vunpack.c.l.b16 %v1835
  %v2365 = vunpack.c.h.b16 %v1835
  %v2366 = vunpack.c.l.b16 %v1836
  %v2367 = vunpack.c.h.b16 %v1836
  %v2368 = vunpack.c.l.b16 %v1837
  %v2369 = vunpack.c.h.b16 %v1837
  %v2370 = vunpack.c.l.b16 %v1838
  %v2371 = vunpack.c.h.b16 %v1838
  %v2372 = vunpack.c.l.b16 %v1839
  %v2373 = vunpack.c.h.b16 %v1839
  %v2374 = vunpack.c.l.b16 %v1840
  %v2375 = vunpack.c.h.b16 %v1840
  %v2376 = vunpack.c.l.b16 %v1841
  %v2377 = vunpack.c.h.b16 %v1841
  %v2378 = vunpack.c.l.b16 %v1842
  %v2379 = vunpack.c.h.b16 %v1842
  %v2380 = vunpack.c.l.b16 %v1843
  %v2381 = vunpack.c.h.b16 %v1843
  %v2382 = vunpack.c.l.b16 %v1844
  %v2383 = vunpack.c.h.b16 %v1844
  %v2384 = vunpack.c.l.b16 %v1845
  %v2385 = vunpack.c.h.b16 %v1845
  %v2386 = vunpack.c.l.b16 %v1846
  %v2387 = vunpack.c.h.b16 %v1846
  %v2388 = vunpack.c.l.b16 %v1847
  %v2389 = vunpack.c.h.b16 %v1847
  %v2390 = vunpack.c.l.b16 %v1848
  %v2391 = vunpack.c.h.b16 %v1848
  %v2392 = vunpack.c.l.b16 %v1849
  %v2393 = vunpack.c.h.b16 %v1849
  %v2394 = vunpack.c.l.b16 %v1850
  %v2395 = vunpack.c.h.b16 %v1850
  %v2396 = vunpack.c.l.b16 %v1851
  %v2397 = vunpack.c.h.b16 %v1851
  %v2398 = vunpack.c.l.b16 %v1852
  %v2399 = vunpack.c.h.b16 %v1852
  %v2400 = vunpack.c.l.b16 %v1853
  %v2401 = vunpack.c.h.b16 %v1853
  %v2402 = vunpack.c.l.b16 %v1854
  %v2403 = vunpack.c.h.b16 %v1854
  %v2404 = vunpack.c.l.b16 %v1855
  %v2405 = vunpack.c.h.b16 %v1855
  %v2406 = vunpack.c.l.b16 %v1856
  %v2407 = vunpack.c.h.b16 %v1856
  %v2408 = vunpack.c.l.b16 %v1857
  %v2409 = vunpack.c.h.b16 %v1857
  %v2410 = vunpack.c.l.b16 %v1858
  %v2411 = vunpack.c.h.b16 %v1858
  %v2412 = vunpack.c.l.b16 %v1859
  %v2413 = vunpack.c.h.b16 %v1859
  %v2414 = vunpack.c.l.b16 %v1860
  %v2415 = vunpack.c.h.b16 %v1860
  %v2416 = vunpack.c.l.b16 %v1861
  %v2417 = vunpack.c.h.b16 %v1861
  %v2418 = vunpack.c.l.b16 %v1862
  %v2419 = vunpack.c.h.b16 %v1862
  %v2420 = vunpack.c.l.b16 %v1863
  %v2421 = vunpack.c.h.b16 %v1863
  %v2422 = vunpack.c.l.b16 %v1864
  %v2423 = vunpack.c.h.b16 %v1864
  %v2424 = vunpack.c.l.b16 %v1865
  %v2425 = vunpack.c.h.b16 %v1865
  %v2426 = vunpack.c.l.b16 %v1866
  %v2427 = vunpack.c.h.b16 %v1866
  %v2428 = vunpack.c.l.b16 %v1867
  %v2429 = vunpack.c.h.b16 %v1867
  %v2430 = vunpack.c.l.b16 %v1868
  %v2431 = vunpack.c.h.b16 %v1868
  %v2432 = vunpack.c.l.b16 %v1869
  %v2433 = vunpack.c.h.b16 %v1869
  %v2434 = vunpack.c.l.b16 %v1870
  %v2435 = vunpack.c.h.b16 %v1870
  %v2436 = vunpack.c.l.b16 %v1871
  %v2437 = vunpack.c.h.b16 %v1871
  %v2438 = vunpack.c.l.b16 %v1872
  %v2439 = vunpack.c.h.b16 %v1872
  %v2440 = vunpack.c.l.b16 %v1873
  %v2441 = vunpack.c.h.b16 %v1873
  %v2442 = vunpack.c.l.b16 %v1874
  %v2443 = vunpack.c.h.b16 %v1874
  %v2444 = vunpack.c.l.b16 %v1875
  %v2445 = vunpack.c.h.b16 %v1875
  %v2446 = vunpack.c.l.b16 %v1876
  %v2447 = vunpack.c.h.b16 %v1876
  %v2448 = vunpack.c.l.b16 %v1877
  %v2449 = vunpack.c.h.b16 %v1877
  %v2450 = vunpack.c.l.b16 %v1878
  %v2451 = vunpack.c.h.b16 %v1878
  %v2452 = vunpack.c.l.b16 %v1879
  %v2453 = vunpack.c.h.b16 %v1879
  %v2454 = vunpack.c.l.b16 %v1880
  %v2455 = vunpack.c.h.b16 %v1880
  %v2456 = vunpack.c.l.b16 %v1881
  %v2457 = vunpack.c.h.b16 %v1881
  %v2458 = vunpack.c.l.b16 %v1882
  %v2459 = vunpack.c.h.b16 %v1882
  %v2460 = vunpack.c.l.b16 %v1883
  %v2461 = vunpack.c.h.b16 %v1883
  %v2462 = vunpack.c.l.b16 %v1884
  %v2463 = vunpack.c.h.b16 %v1884
  %v2464 = vunpack.c.l.b16 %v1885
  %v2465 = vunpack.c.h.b16 %v1885
  %v2466 = vunpack.c.l.b16 %v1886
  %v2467 = vunpack.c.h.b16 %v1886
  %v2468 = vunpack.c.l.b16 %v1887
  %v2469 = vunpack.c.h.b16 %v1887
  %v2470 = vunpack.c.l.b16 %v1888
  %v2471 = vunpack.c.h.b16 %v1888
  %v2472 = vunpack.c.l.b16 %v1889
  %v2473 = vunpack.c.h.b16 %v1889
  %v2474 = vunpack.c.l.b16 %v1890
  %v2475 = vunpack.c.h.b16 %v1890
  %v2476 = vunpack.c.l.b16 %v1891
  %v2477 = vunpack.c.h.b16 %v1891
  %v2478 = vunpack.c.l.b16 %v1892
  %v2479 = vunpack.c.h.b16 %v1892
  %v2480 = vunpack.c.l.b16 %v1893
  %v2481 = vunpack.c.h.b16 %v1893
  %v2482 = vunpack.c.l.b16 %v1894
  %v2483 = vunpack.c.h.b16 %v1894
  %v2484 = vunpack.c.l.b16 %v1895
  %v2485 = vunpack.c.h.b16 %v1895
  %v2486 = vunpack.c.l.b16 %v1896
  %v2487 = vunpack.c.h.b16 %v1896
  %v2488 = vunpack.c.l.b16 %v1897
  %v2489 = vunpack.c.h.b16 %v1897
  %v2490 = vunpack.c.l.b16 %v1898
  %v2491 = vunpack.c.h.b16 %v1898
  %v2492 = vunpack.c.l.b16 %v1899
  %v2493 = vunpack.c.h.b16 %v1899
  %v2494 = vunpack.c.l.b16 %v1900
  %v2495 = vunpack.c.h.b16 %v1900
  %v2496 = vunpack.c.l.b16 %v1901
  %v2497 = vunpack.c.h.b16 %v1901
  %v2498 = vunpack.c.l.b16 %v1902
  %v2499 = vunpack.c.h.b16 %v1902
  %v2500 = vunpack.c.l.b16 %v1903
  %v2501 = vunpack.c.h.b16 %v1903
  %v2502 = vunpack.c.l.b16 %v1904
  %v2503 = vunpack.c.h.b16 %v1904
  %v2504 = vunpack.c.l.b16 %v1905
  %v2505 = vunpack.c.h.b16 %v1905
  %v2506 = vunpack.c.l.b16 %v1906
  %v2507 = vunpack.c.h.b16 %v1906
  %v2508 = vunpack.c.l.b16 %v1907
  %v2509 = vunpack.c.h.b16 %v1907
  %v2510 = vunpack.c.l.b16 %v1908
  %v2511 = vunpack.c.h.b16 %v1908
  %v2512 = vunpack.c.l.b16 %v1909
  %v2513 = vunpack.c.h.b16 %v1909
  %v2514 = vunpack.c.l.b16 %v1910
  %v2515 = vunpack.c.h.b16 %v1910
  %v2516 = vunpack.c.l.b16 %v1911
  %v2517 = vunpack.c.h.b16 %v1911
  %v2518 = vunpack.c.l.b16 %v1912
  %v2519 = vunpack.c.h.b16 %v1912
  %v2520 = vunpack.c.l.b16 %v1913
  %v2521 = vunpack.c.h.b16 %v1913
  %v2522 = vunpack.c.l.b16 %v1914
  %v2523 = vunpack.c.h.b16 %v1914
  %v2524 = vunpack.c.l.b16 %v1915
  %v2525 = vunpack.c.h.b16 %v1915
  %v2526 = vunpack.c.l.b16 %v1916
  %v2527 = vunpack.c.h.b16 %v1916
  %v2528 = vunpack.c.l.b16 %v1917
  %v2529 = vunpack.c.h.b16 %v1917
  %v2530 = vunpack.c.l.b16 %v1918
  %v2531 = vunpack.c.h.b16 %v1918
  %v2532 = vunpack.c.l.b16 %v1919
  %v2533 = vunpack.c.h.b16 %v1919
  %v2534 = vunpack.c.l.b16 %v1920
  %v2535 = vunpack.c.h.b16 %v1920
  %v2536 = vunpack.c.l.b16 %v1921
  %v2537 = vunpack.c.h.b16 %v1921
  %v2538 = vunpack.c.l.b16 %v1922
  %v2539 = vunpack.c.h.b16 %v1922
  %v2540 = vunpack.c.l.b16 %v1923
  %v2541 = vunpack.c.h.b16 %v1923
  %v2542 = vunpack.c.l.b16 %v1924
  %v2543 = vunpack.c.h.b16 %v1924
  %v2544 = vunpack.c.l.b16 %v1925
  %v2545 = vunpack.c.h.b16 %v1925
  %v2546 = vunpack.c.l.b16 %v1926
  %v2547 = vunpack.c.h.b16 %v1926
  %v2548 = vunpack.c.l.b16 %v1927
  %v2549 = vunpack.c.h.b16 %v1927
  %v2550 = vunpack.c.l.b16 %v1928
  %v2551 = vunpack.c.h.b16 %v1928
  %v2552 = vunpack.c.l.b16 %v1929
  %v2553 = vunpack.c.h.b16 %v1929
  %v2554 = vunpack.c.l.b16 %v1930
  %v2555 = vunpack.c.h.b16 %v1930
  %v2556 = vunpack.c.l.b16 %v1931
  %v2557 = vunpack.c.h.b16 %v1931
  %v2558 = vunpack.c.l.b16 %v1932
  %v2559 = vunpack.c.h.b16 %v1932
  %v2560 = vunpack.c.l.b16 %v1933
  %v2561 = vunpack.c.h.b16 %v1933
  %v2562 = vunpack.c.l.b16 %v1934
  %v2563 = vunpack.c.h.b16 %v1934
  %v2564 = vunpack.c.l.b16 %v1935
  %v2565 = vunpack.c.h.b16 %v1935
  %v2566 = vunpack.c.l.b16 %v1936
  %v2567 = vunpack.c.h.b16 %v1936
  %v2568 = vunpack.c.l.b16 %v1937
  %v2569 = vunpack.c.h.b16 %v1937
  %v2570 = vunpack.c.l.b16 %v1938
  %v2571 = vunpack.c.h.b16 %v1938
  %v2572 = vunpack.c.l.b16 %v1939
  %v2573 = vunpack.c.h.b16 %v1939
  %v2574 = vunpack.c.l.b16 %v1940
  %v2575 = vunpack.c.h.b16 %v1940
  %v2576 = vunpack.c.l.b16 %v1941
  %v2577 = vunpack.c.h.b16 %v1941
  %v2578 = vunpack.c.l.b16 %v1942
  %v2579 = vunpack.c.h.b16 %v1942
  %v2580 = vunpack.c.l.b16 %v1943
  %v2581 = vunpack.c.h.b16 %v1943
  %v2582 = vunpack.c.l.b16 %v1944
  %v2583 = vunpack.c.h.b16 %v1944
  %v2584 = vunpack.c.l.b16 %v1945
  %v2585 = vunpack.c.h.b16 %v1945
  %v2586 = vunpack.c.l.b16 %v1946
  %v2587 = vunpack.c.h.b16 %v1946
  %v2588 = vunpack.c.l.b16 %v1947
  %v2589 = vunpack.c.h.b16 %v1947
  %v2590 = vunpack.c.l.b16 %v1948
  %v2591 = vunpack.c.h.b16 %v1948
  %v2592 = vunpack.c.l.b16 %v1949
  %v2593 = vunpack.c.h.b16 %v1949
  %v2594 = vunpack.c.l.b16 %v1950
  %v2595 = vunpack.c.h.b16 %v1950
  %v2596 = vunpack.c.l.b16 %v1951
  %v2597 = vunpack.c.h.b16 %v1951
  %v2598 = vunpack.c.l.b16 %v1952
  %v2599 = vunpack.c.h.b16 %v1952
  %v2600 = vunpack.c.l.b16 %v1953
  %v2601 = vunpack.c.h.b16 %v1953
  %v2602 = vunpack.c.l.b16 %v1954
  %v2603 = vunpack.c.h.b16 %v1954
  %v2604 = vunpack.c.l.b16 %v1955
  %v2605 = vunpack.c.h.b16 %v1955
  %v2606 = vunpack.c.l.b16 %v1956
  %v2607 = vunpack.c.h.b16 %v1956
  %v2608 = vunpack.c.l.b16 %v1957
  %v2609 = vunpack.c.h.b16 %v1957
  %v2610 = vunpack.c.l.b16 %v1958
  %v2611 = vunpack.c.h.b16 %v1958
  %v2612 = vunpack.c.l.b16 %v1959
  %v2613 = vunpack.c.h.b16 %v1959
  %v2614 = vunpack.c.l.b16 %v1960
  %v2615 = vunpack.c.h.b16 %v1960
  %v2616 = vunpack.c.l.b16 %v1961
  %v2617 = vunpack.c.h.b16 %v1961
  %v2618 = vunpack.c.l.b16 %v1962
  %v2619 = vunpack.c.h.b16 %v1962
  %v2620 = vunpack.c.l.b16 %v1963
  %v2621 = vunpack.c.h.b16 %v1963
  %v2622 = vunpack.c.l.b16 %v1964
  %v2623 = vunpack.c.h.b16 %v1964
  %v2624 = vunpack.c.l.b16 %v1965
  %v2625 = vunpack.c.h.b16 %v1965
  %v2626 = vunpack.c.l.b16 %v1966
  %v2627 = vunpack.c.h.b16 %v1966
  %v2628 = vunpack.c.l.b16 %v1967
  %v2629 = vunpack.c.h.b16 %v1967
  %v2630 = vunpack.c.l.b16 %v1968
  %v2631 = vunpack.c.h.b16 %v1968
  %v2632 = vunpack.c.l.b16 %v1969
  %v2633 = vunpack.c.h.b16 %v1969
  %v2634 = vunpack.c.l.b16 %v1970
  %v2635 = vunpack.c.h.b16 %v1970
  %v2636 = vunpack.c.l.b16 %v1971
  %v2637 = vunpack.c.h.b16 %v1971
  %v2638 = vunpack.c.l.b16 %v1972
  %v2639 = vunpack.c.h.b16 %v1972
  %v2640 = vunpack.c.l.b16 %v1973
  %v2641 = vunpack.c.h.b16 %v1973
  %v2642 = vunpack.c.l.b16 %v1974
  %v2643 = vunpack.c.h.b16 %v1974
  %v2644 = vunpack.c.l.b16 %v1975
  %v2645 = vunpack.c.h.b16 %v1975
  %v2646 = vunpack.c.l.b16 %v1976
  %v2647 = vunpack.c.h.b16 %v1976
  %v2648 = vunpack.c.l.b16 %v1977
  %v2649 = vunpack.c.h.b16 %v1977
  %v2650 = vpack.c.b16 %v2206, %v2202
  %v2651 = vpack.c.b16 %v2207, %v2203
  %v2652 = vpack.c.b16 %v2208, %v2204
  %v2653 = vpack.c.b16 %v2209, %v2205
  %v2654 = vpack.c.b16 %v2214, %v2210
  %v2655 = vpack.c.b16 %v2215, %v2211
  %v2656 = vpack.c.b16 %v2216, %v2212
  %v2657 = vpack.c.b16 %v2217, %v2213
  %v2658 = vpack.c.b16 %v2222, %v2218
  %v2659 = vpack.c.b16 %v2223, %v2219
  %v2660 = vpack.c.b16 %v2224, %v2220
  %v2661 = vpack.c.b16 %v2225, %v2221
  %v2662 = vpack.c.b16 %v2230, %v2226
  %v2663 = vpack.c.b16 %v2231, %v2227
  %v2664 = vpack.c.b16 %v2232, %v2228
  %v2665 = vpack.c.b16 %v2233, %v2229
  %v2666 = vpack.c.b16 %v2238, %v2234
  %v2667 = vpack.c.b16 %v2239, %v2235
  %v2668 = vpack.c.b16 %v2240, %v2236
  %v2669 = vpack.c.b16 %v2241, %v2237
  %v2670 = vpack.c.b16 %v2246, %v2242
  %v2671 = vpack.c.b16 %v2247, %v2243
  %v2672 = vpack.c.b16 %v2248, %v2244
  %v2673 = vpack.c.b16 %v2249, %v2245
  %v2674 = vpack.c.b16 %v2254, %v2250
  %v2675 = vpack.c.b16 %v2255, %v2251
  %v2676 = vpack.c.b16 %v2256, %v2252
  %v2677 = vpack.c.b16 %v2257, %v2253
  %v2678 = vpack.c.b16 %v2262, %v2258
  %v2679 = vpack.c.b16 %v2263, %v2259
  %v2680 = vpack.c.b16 %v2264, %v2260
  %v2681 = vpack.c.b16 %v2265, %v2261
  %v2682 = vpack.c.b16 %v2270, %v2266
  %v2683 = vpack.c.b16 %v2271, %v2267
  %v2684 = vpack.c.b16 %v2272, %v2268
  %v2685 = vpack.c.b16 %v2273, %v2269
  %v2686 = vpack.c.b16 %v2278, %v2274
  %v2687 = vpack.c.b16 %v2279, %v2275
  %v2688 = vpack.c.b16 %v2280, %v2276
  %v2689 = vpack.c.b16 %v2281, %v2277
  %v2690 = vpack.c.b16 %v2286, %v2282
  %v2691 = vpack.c.b16 %v2287, %v2283
  %v2692 = vpack.c.b16 %v2288, %v2284
  %v2693 = vpack.c.b16 %v2289, %v2285
  %v2694 = vpack.c.b16 %v2294, %v2290
  %v2695 = vpack.c.b16 %v2295, %v2291
  %v2696 = vpack.c.b16 %v2296, %v2292
  %v2697 = vpack.c.b16 %v2297, %v2293
  %v2698 = vpack.c.b16 %v2302, %v2298
  %v2699 = vpack.c.b16 %v2303, %v2299
  %v2700 = vpack.c.b16 %v2304, %v2300
  %v2701 = vpack.c.b16 %v2305, %v2301
  %v2702 = vpack.c.b16 %v2310, %v2306
  %v2703 = vpack.c.b16 %v2311, %v2307
  %v2704 = vpack.c.b16 %v2312, %v2308
  %v2705 = vpack.c.b16 %v2313, %v2309
  %v2706 = vpack.c.b16 %v2318, %v2314
  %v2707 = vpack.c.b16 %v2319, %v2315
  %v2708 = vpack.c.b16 %v2320, %v2316
  %v2709 = vpack.c.b16 %v2321, %v2317
  %v2710 = vpack.c.b16 %v2326, %v2322
  %v2711 = vpack.c.b16 %v2327, %v2323
  %v2712 = vpack.c.b16 %v2328, %v2324
  %v2713 = vpack.c.b16 %v2329, %v2325
  %v2714 = vpack.c.b16 %v2334, %v2330
  %v2715 = vpack.c.b16 %v2335, %v2331
  %v2716 = vpack.c.b16 %v2336, %v2332
  %v2717 = vpack.c.b16 %v2337, %v2333
  %v2718 = vpack.c.b16 %v2342, %v2338
  %v2719 = vpack.c.b16 %v2343, %v2339
  %v2720 = vpack.c.b16 %v2344, %v2340
  %v2721 = vpack.c.b16 %v2345, %v2341
  %v2722 = vpack.c.b16 %v2350, %v2346
  %v2723 = vpack.c.b16 %v2351, %v2347
  %v2724 = vpack.c.b16 %v2352, %v2348
  %v2725 = vpack.c.b16 %v2353, %v2349
  %v2726 = vpack.c.b16 %v2358, %v2354
  %v2727 = vpack.c.b16 %v2359, %v2355
  %v2728 = vpack.c.b16 %v2360, %v2356
  %v2729 = vpack.c.b16 %v2361, %v2357
  %v2730 = vpack.c.b16 %v2366, %v2362
  %v2731 = vpack.c.b16 %v2367, %v2363
  %v2732 = vpack.c.b16 %v2368, %v2364
  %v2733 = vpack.c.b16 %v2369, %v2365
  %v2734 = vpack.c.b16 %v2374, %v2370
  %v2735 = vpack.c.b16 %v2375, %v2371
  %v2736 = vpack.c.b16 %v2376, %v2372
  %v2737 = vpack.c.b16 %v2377, %v2373
  %v2738 = vpack.c.b16 %v2382, %v2378
  %v2739 = vpack.c.b16 %v2383, %v2379
  %v2740 = vpack.c.b16 %v2384, %v2380
  %v2741 = vpack.c.b16 %v2385, %v2381
  %v2742 = vpack.c.b16 %v2390, %v2386
  %v2743 = vpack.c.b16 %v2391, %v2387
  %v2744 = vpack.c.b16 %v2392, %v2388
  %v2745 = vpack.c.b16 %v2393, %v2389
  %v2746 = vpack.c.b16 %v2398, %v2394
  %v2747 = vpack.c.b16 %v2399, %v2395
  %v2748 = vpack.c.b16 %v2400, %v2396
  %v2749 = vpack.c.b16 %v2401, %v2397
  %v2750 = vpack.c.b16 %v2406, %v2402
  %v2751 = vpack.c.b16 %v2407, %v2403
  %v2752 = vpack.c.b16 %v2408, %v2404
  %v2753 = vpack.c.b16 %v2409, %v2405
  %v2754 = vpack.c.b16 %v2414, %v2410
  %v2755 = vpack.c.b16 %v2415, %v2411
  %v2756 = vpack.c.b16 %v2416, %v2412
  %v2757 = vpack.c.b16 %v2417, %v2413
  %v2758 = vpack.c.b16 %v2422, %v2418
  %v2759 = vpack.c.b16 %v2423, %v2419
  %v2760 = vpack.c.b16 %v2424, %v2420
  %v2761 = vpack.c.b16 %v2425, %v2421
  %v2762 = vpack.c.b16 %v2430, %v2426
  %v2763 = vpack.c.b16 %v2431, %v2427
  %v2764 = vpack.c.b16 %v2432, %v2428
  %v2765 = vpack.c.b16 %v2433, %v2429
  %v2766 = vpack.c.b16 %v2438, %v2434
  %v2767 = vpack.c.b16 %v2439, %v2435
  %v2768 = vpack.c.b16 %v2440, %v2436
  %v2769 = vpack.c.b16 %v2441, %v2437
  %v2770 = vpack.c.b16 %v2446, %v2442
  %v2771 = vpack.c.b16 %v2447, %v2443
  %v2772 = vpack.c.b16 %v2448, %v2444
  %v2773 = vpack.c.b16 %v2449, %v2445
  %v2774 = vpack.c.b16 %v2454, %v2450
  %v2775 = vpack.c.b16 %v2455, %v2451
  %v2776 = vpack.c.b16 %v2456, %v2452
  %v2777 = vpack.c.b16 %v2457, %v2453
  %v2778 = vpack.c.b16 %v2462, %v2458
  %v2779 = vpack.c.b16 %v2463, %v2459
  %v2780 = vpack.c.b16 %v2464, %v2460
  %v2781 = vpack.c.b16 %v2465, %v2461
  %v2782 = vpack.c.b16 %v2470, %v2466
  %v2783 = vpack.c.b16 %v2471, %v2467
  %v2784 = vpack.c.b16 %v2472, %v2468
  %v2785 = vpack.c.b16 %v2473, %v2469
  %v2786 = vpack.c.b16 %v2478, %v2474
  %v2787 = vpack.c.b16 %v2479, %v2475
  %v2788 = vpack.c.b16 %v2480, %v2476
  %v2789 = vpack.c.b16 %v2481, %v2477
  %v2790 = vpack.c.b16 %v2486, %v2482
  %v2791 = vpack.c.b16 %v2487, %v2483
  %v2792 = vpack.c.b16 %v2488, %v2484
  %v2793 = vpack.c.b16 %v2489, %v2485
  %v2794 = vpack.c.b16 %v2494, %v2490
  %v2795 = vpack.c.b16 %v2495, %v2491
  %v2796 = vpack.c.b16 %v2496, %v2492
  %v2797 = vpack.c.b16 %v2497, %v2493
  %v2798 = vpack.c.b16 %v2502, %v2498
  %v2799 = vpack.c.b16 %v2503, %v2499
  %v2800 = vpack.c.b16 %v2504, %v2500
  %v2801 = vpack.c.b16 %v2505, %v2501
  %v2802 = vpack.c.b16 %v2510, %v2506
  %v2803 = vpack.c.b16 %v2511, %v2507
  %v2804 = vpack.c.b16 %v2512, %v2508
  %v2805 = vpack.c.b16 %v2513, %v2509
  %v2806 = vpack.c.b16 %v2518, %v2514
  %v2807 = vpack.c.b16 %v2519, %v2515
  %v2808 = vpack.c.b16 %v2520, %v2516
  %v2809 = vpack.c.b16 %v2521, %v2517
  %v2810 = vpack.c.b16 %v2526, %v2522
  %v2811 = vpack.c.b16 %v2527, %v2523
  %v2812 = vpack.c.b16 %v2528, %v2524
  %v2813 = vpack.c.b16 %v2529, %v2525
  %v2814 = vpack.c.b16 %v2534, %v2530
  %v2815 = vpack.c.b16 %v2535, %v2531
  %v2816 = vpack.c.b16 %v2536, %v2532
  %v2817 = vpack.c.b16 %v2537, %v2533
  %v2818 = vpack.c.b16 %v2542, %v2538
  %v2819 = vpack.c.b16 %v2543, %v2539
  %v2820 = vpack.c.b16 %v2544, %v2540
  %v2821 = vpack.c.b16 %v2545, %v2541
  %v2822 = vpack.c.b16 %v2550, %v2546
  %v2823 = vpack.c.b16 %v2551, %v2547
  %v2824 = vpack.c.b16 %v2552, %v2548
  %v2825 = vpack.c.b16 %v2553, %v2549
  %v2826 = vpack.c.b16 %v2558, %v2554
  %v2827 = vpack.c.b16 %v2559, %v2555
  %v2828 = vpack.c.b16 %v2560, %v2556
  %v2829 = vpack.c.b16 %v2561, %v2557
  %v2830 = vpack.c.b16 %v2566, %v2562
  %v2831 = vpack.c.b16 %v2567, %v2563
  %v2832 = vpack.c.b16 %v2568, %v2564
  %v2833 = vpack.c.b16 %v2569, %v2565
  %v2834 = vpack.c.b16 %v2574, %v2570
  %v2835 = vpack.c.b16 %v2575, %v2571
  %v2836 = vpack.c.b16 %v2576, %v2572
  %v2837 = vpack.c.b16 %v2577, %v2573
  %v2838 = vpack.c.b16 %v2582, %v2578
  %v2839 = vpack.c.b16 %v2583, %v2579
  %v2840 = vpack.c.b16 %v2584, %v2580
  %v2841 = vpack.c.b16 %v2585, %v2581
  %v2842 = vpack.c.b16 %v2590, %v2586
  %v2843 = vpack.c.b16 %v2591, %v2587
  %v2844 = vpack.c.b16 %v2592, %v2588
  %v2845 = vpack.c.b16 %v2593, %v2589
  %v2846 = vpack.c.b16 %v2598, %v2594
  %v2847 = vpack.c.b16 %v2599, %v2595
  %v2848 = vpack.c.b16 %v2600, %v2596
  %v2849 = vpack.c.b16 %v2601, %v2597
  %v2850 = vpack.c.b16 %v2606, %v2602
  %v2851 = vpack.c.b16 %v2607, %v2603
  %v2852 = vpack.c.b16 %v2608, %v2604
  %v2853 = vpack.c.b16 %v2609, %v2605
  %v2854 = vpack.c.b16 %v2614, %v2610
  %v2855 = vpack.c.b16 %v2615, %v2611
  %v2856 = vpack.c.b16 %v2616, %v2612
  %v2857 = vpack.c.b16 %v2617, %v2613
  %v2858 = vpack.c.b16 %v2622, %v2618
  %v2859 = vpack.c.b16 %v2623, %v2619
  %v2860 = vpack.c.b16 %v2624, %v2620
  %v2861 = vpack.c.b16 %v2625, %v2621
  %v2862 = vpack.c.b16 %v2630, %v2626
  %v2863 = vpack.c.b16 %v2631, %v2627
  %v2864 = vpack.c.b16 %v2632, %v2628
  %v2865 = vpack.c.b16 %v2633, %v2629
  %v2866 = vpack.c.b16 %v2638, %v2634
  %v2867 = vpack.c.b16 %v2639, %v2635
  %v2868 = vpack.c.b16 %v2640, %v2636
  %v2869 = vpack.c.b16 %v2641, %v2637
  %v2870 = vpack.c.b16 %v2646, %v2642
  %v2871 = vpack.c.b16 %v2647, %v2643
  %v2872 = vpack.c.b16 %v2648, %v2644
  %v2873 = vpack.c.b16 %v2649, %v2645
  %3098 = vmatprep.subr.bf16.mxu0 %v2651
  %3099 = vmatpush1.bf16.msra.mxu0 %v2650
  %3100 = vmatprep.subr.bf16.mxu0 %v2655
  %3101 = vmatpush1.bf16.msra.mxu0 %v2654
  %3102 = vmatprep.subr.bf16.mxu0 %v2659
  %3103 = vmatpush1.bf16.msra.mxu0 %v2658
  %3104 = vmatprep.subr.bf16.mxu0 %v2663
  %3105 = vmatpush1.bf16.msra.mxu0 %v2662
  %3106 = vmatprep.subr.bf16.mxu0 %v2667
  %3107 = vmatpush1.bf16.msra.mxu0 %v2666
  %3108 = vmatprep.subr.bf16.mxu0 %v2671
  %3109 = vmatpush1.bf16.msra.mxu0 %v2670
  %3110 = vmatprep.subr.bf16.mxu0 %v2675
  %3111 = vmatpush1.bf16.msra.mxu0 %v2674
  %3112 = vmatprep.subr.bf16.mxu0 %v2679
  %3113 = vmatpush1.bf16.msra.mxu0 %v2678
  %3114 = vmatprep.subr.bf16.mxu0 %v2683
  %3115 = vmatpush1.bf16.msra.mxu0 %v2682
  %3116 = vmatprep.subr.bf16.mxu0 %v2687
  %3117 = vmatpush1.bf16.msra.mxu0 %v2686
  %3118 = vmatprep.subr.bf16.mxu0 %v2691
  %3119 = vmatpush1.bf16.msra.mxu0 %v2690
  %3120 = vmatprep.subr.bf16.mxu0 %v2695
  %3121 = vmatpush1.bf16.msra.mxu0 %v2694
  %3122 = vmatprep.subr.bf16.mxu0 %v2699
  %3123 = vmatpush1.bf16.msra.mxu0 %v2698
  %3124 = vmatprep.subr.bf16.mxu0 %v2703
  %3125 = vmatpush1.bf16.msra.mxu0 %v2702
  %3126 = vmatprep.subr.bf16.mxu0 %v2707
  %3127 = vmatpush1.bf16.msra.mxu0 %v2706
  %3128 = vmatprep.subr.bf16.mxu0 %v2711
  %3129 = vmatpush1.bf16.msra.mxu0 %v2710
  %3130 = vmatprep.mubr.bf16.mxu0 %v276
  %3131 = vmatmul.mubr.bf16.gmra.mrb[0].mxu0 %v275
  %v3132 = vpop.f32.mrb[0].mxu0
  %v3133 = vadd.f32 0.0, %v3132
  %v3134 = vpop.f32.mrb[0].mxu0
  %v3135 = vadd.f32 0.0, %v3134
  %v3136 = vpop.f32.mrb[0].mxu0
  %v3137 = vadd.f32 0.0, %v3136
  %v3138 = vpop.f32.mrb[0].mxu0
  %v3139 = vadd.f32 0.0, %v3138
  %3140 = vdwg.mxu0
  %3141 = vmatprep.subr.bf16.mxu0 %v2715
  %3142 = vmatpush1.bf16.msra.mxu0 %v2714
  %3143 = vmatprep.subr.bf16.mxu0 %v2719
  %3144 = vmatpush1.bf16.msra.mxu0 %v2718
  %3145 = vmatprep.subr.bf16.mxu0 %v2723
  %3146 = vmatpush1.bf16.msra.mxu0 %v2722
  %3147 = vmatprep.subr.bf16.mxu0 %v2727
  %3148 = vmatpush1.bf16.msra.mxu0 %v2726
  %3149 = vmatprep.subr.bf16.mxu0 %v2731
  %3150 = vmatpush1.bf16.msra.mxu0 %v2730
  %3151 = vmatprep.subr.bf16.mxu0 %v2735
  %3152 = vmatpush1.bf16.msra.mxu0 %v2734
  %3153 = vmatprep.subr.bf16.mxu0 %v2739
  %3154 = vmatpush1.bf16.msra.mxu0 %v2738
  %3155 = vmatprep.subr.bf16.mxu0 %v2743
  %3156 = vmatpush1.bf16.msra.mxu0 %v2742
  %3157 = vmatprep.subr.bf16.mxu0 %v2747
  %3158 = vmatpush1.bf16.msra.mxu0 %v2746
  %3159 = vmatprep.subr.bf16.mxu0 %v2751
  %3160 = vmatpush1.bf16.msra.mxu0 %v2750
  %3161 = vmatprep.subr.bf16.mxu0 %v2755
  %3162 = vmatpush1.bf16.msra.mxu0 %v2754
  %3163 = vmatprep.subr.bf16.mxu0 %v2759
  %3164 = vmatpush1.bf16.msra.mxu0 %v2758
  %3165 = vmatprep.subr.bf16.mxu0 %v2763
  %3166 = vmatpush1.bf16.msra.mxu0 %v2762
  %3167 = vmatprep.subr.bf16.mxu0 %v2767
  %3168 = vmatpush1.bf16.msra.mxu0 %v2766
  %3169 = vmatprep.subr.bf16.mxu0 %v2771
  %3170 = vmatpush1.bf16.msra.mxu0 %v2770
  %3171 = vmatprep.subr.bf16.mxu0 %v2775
  %3172 = vmatpush1.bf16.msra.mxu0 %v2774
  %3173 = vmatprep.mubr.bf16.mxu0 %v278
  %3174 = vmatmul.mubr.bf16.gmra.mrb[0].mxu0 %v277
  %v3175 = vpop.f32.mrb[0].mxu0
  %v3176 = vadd.f32 %v3133, %v3175
  %v3177 = vpop.f32.mrb[0].mxu0
  %v3178 = vadd.f32 %v3135, %v3177
  %v3179 = vpop.f32.mrb[0].mxu0
  %v3180 = vadd.f32 %v3137, %v3179
  %v3181 = vpop.f32.mrb[0].mxu0
  %v3182 = vadd.f32 %v3139, %v3181
  %3183 = vdwg.mxu0
  %3184 = vmatprep.subr.bf16.mxu0 %v2779
  %3185 = vmatpush1.bf16.msra.mxu0 %v2778
  %3186 = vmatprep.subr.bf16.mxu0 %v2783
  %3187 = vmatpush1.bf16.msra.mxu0 %v2782
  %3188 = vmatprep.subr.bf16.mxu0 %v2787
  %3189 = vmatpush1.bf16.msra.mxu0 %v2786
  %3190 = vmatprep.subr.bf16.mxu0 %v2791
  %3191 = vmatpush1.bf16.msra.mxu0 %v2790
  %3192 = vmatprep.subr.bf16.mxu0 %v2795
  %3193 = vmatpush1.bf16.msra.mxu0 %v2794
  %3194 = vmatprep.subr.bf16.mxu0 %v2799
  %3195 = vmatpush1.bf16.msra.mxu0 %v2798
  %3196 = vmatprep.subr.bf16.mxu0 %v2803
  %3197 = vmatpush1.bf16.msra.mxu0 %v2802
  %3198 = vmatprep.subr.bf16.mxu0 %v2807
  %3199 = vmatpush1.bf16.msra.mxu0 %v2806
  %3200 = vmatprep.subr.bf16.mxu0 %v2811
  %3201 = vmatpush1.bf16.msra.mxu0 %v2810
  %3202 = vmatprep.subr.bf16.mxu0 %v2815
  %3203 = vmatpush1.bf16.msra.mxu0 %v2814
  %3204 = vmatprep.subr.bf16.mxu0 %v2819
  %3205 = vmatpush1.bf16.msra.mxu0 %v2818
  %3206 = vmatprep.subr.bf16.mxu0 %v2823
  %3207 = vmatpush1.bf16.msra.mxu0 %v2822
  %3208 = vmatprep.subr.bf16.mxu0 %v2827
  %3209 = vmatpush1.bf16.msra.mxu0 %v2826
  %3210 = vmatprep.subr.bf16.mxu0 %v2831
  %3211 = vmatpush1.bf16.msra.mxu0 %v2830
  %3212 = vmatprep.subr.bf16.mxu0 %v2835
  %3213 = vmatpush1.bf16.msra.mxu0 %v2834
  %3214 = vmatprep.subr.bf16.mxu0 %v2839
  %3215 = vmatpush1.bf16.msra.mxu0 %v2838
  %3216 = vmatprep.mubr.bf16.mxu0 %v280
  %3217 = vmatmul.mubr.bf16.gmra.mrb[0].mxu0 %v279
  %v3218 = vpop.f32.mrb[0].mxu0
  %v3219 = vadd.f32 %v3176, %v3218
  %v3220 = vpop.f32.mrb[0].mxu0
  %v3221 = vadd.f32 %v3178, %v3220
  %v3222 = vpop.f32.mrb[0].mxu0
  %v3223 = vadd.f32 %v3180, %v3222
  %v3224 = vpop.f32.mrb[0].mxu0
  %v3225 = vadd.f32 %v3182, %v3224
  %3226 = vdwg.mxu0
  %3227 = vmatprep.subr.bf16.mxu0 %v2843
  %3228 = vmatpush1.bf16.msra.mxu0 %v2842
  %3229 = vmatprep.subr.bf16.mxu0 %v2847
  %3230 = vmatpush1.bf16.msra.mxu0 %v2846
  %3231 = vmatprep.subr.bf16.mxu0 %v2851
  %3232 = vmatpush1.bf16.msra.mxu0 %v2850
  %3233 = vmatprep.subr.bf16.mxu0 %v2855
  %3234 = vmatpush1.bf16.msra.mxu0 %v2854
  %3235 = vmatprep.subr.bf16.mxu0 %v2859
  %3236 = vmatpush1.bf16.msra.mxu0 %v2858
  %3237 = vmatprep.subr.bf16.mxu0 %v2863
  %3238 = vmatpush1.bf16.msra.mxu0 %v2862
  %3239 = vmatprep.subr.bf16.mxu0 %v2867
  %3240 = vmatpush1.bf16.msra.mxu0 %v2866
  %3241 = vmatprep.subr.bf16.mxu0 %v2871
  %3242 = vmatpush1.bf16.msra.mxu0 %v2870
  %3243 = vmatprep.subr.bf16.mxu0 0
  %3244 = vmatpush1.bf16.msra.mxu0 0
  %3245 = vmatprep.subr.bf16.mxu0 0
  %3246 = vmatpush1.bf16.msra.mxu0 0
  %3247 = vmatprep.subr.bf16.mxu0 0
  %3248 = vmatpush1.bf16.msra.mxu0 0
  %3249 = vmatprep.subr.bf16.mxu0 0
  %3250 = vmatpush1.bf16.msra.mxu0 0
  %3251 = vmatprep.subr.bf16.mxu0 0
  %3252 = vmatpush1.bf16.msra.mxu0 0
  %3253 = vmatprep.subr.bf16.mxu0 0
  %3254 = vmatpush1.bf16.msra.mxu0 0
  %3255 = vmatprep.subr.bf16.mxu0 0
  %3256 = vmatpush1.bf16.msra.mxu0 0
  %3257 = vmatprep.subr.bf16.mxu0 0
  %3258 = vmatpush1.bf16.msra.mxu0 0
  %3259 = vmatprep.mubr.bf16.mxu0 0
  %3260 = vmatmul.mubr.bf16.gmra.mrb[0].mxu0 %v281
  %v3261 = vpop.f32.mrb[0].mxu0
  %v3262 = vadd.f32 %v3219, %v3261
  %v3263 = vpop.f32.mrb[0].mxu0
  %v3264 = vadd.f32 %v3221, %v3263
  %v3265 = vpop.f32.mrb[0].mxu0
  %v3266 = vadd.f32 %v3223, %v3265
  %v3267 = vpop.f32.mrb[0].mxu0
  %v3268 = vadd.f32 %v3225, %v3267
  %3269 = vdwg.mxu0
  %3270 = vmatprep.subr.bf16.mxu0 %v2653
  %3271 = vmatpush1.bf16.msra.mxu0 %v2652
  %3272 = vmatprep.subr.bf16.mxu0 %v2657
  %3273 = vmatpush1.bf16.msra.mxu0 %v2656
  %3274 = vmatprep.subr.bf16.mxu0 %v2661
  %3275 = vmatpush1.bf16.msra.mxu0 %v2660
  %3276 = vmatprep.subr.bf16.mxu0 %v2665
  %3277 = vmatpush1.bf16.msra.mxu0 %v2664
  %3278 = vmatprep.subr.bf16.mxu0 %v2669
  %3279 = vmatpush1.bf16.msra.mxu0 %v2668
  %3280 = vmatprep.subr.bf16.mxu0 %v2673
  %3281 = vmatpush1.bf16.msra.mxu0 %v2672
  %3282 = vmatprep.subr.bf16.mxu0 %v2677
  %3283 = vmatpush1.bf16.msra.mxu0 %v2676
  %3284 = vmatprep.subr.bf16.mxu0 %v2681
  %3285 = vmatpush1.bf16.msra.mxu0 %v2680
  %3286 = vmatprep.subr.bf16.mxu0 %v2685
  %3287 = vmatpush1.bf16.msra.mxu0 %v2684
  %3288 = vmatprep.subr.bf16.mxu0 %v2689
  %3289 = vmatpush1.bf16.msra.mxu0 %v2688
  %3290 = vmatprep.subr.bf16.mxu0 %v2693
  %3291 = vmatpush1.bf16.msra.mxu0 %v2692
  %3292 = vmatprep.subr.bf16.mxu0 %v2697
  %3293 = vmatpush1.bf16.msra.mxu0 %v2696
  %3294 = vmatprep.subr.bf16.mxu0 %v2701
  %3295 = vmatpush1.bf16.msra.mxu0 %v2700
  %3296 = vmatprep.subr.bf16.mxu0 %v2705
  %3297 = vmatpush1.bf16.msra.mxu0 %v2704
  %3298 = vmatprep.subr.bf16.mxu0 %v2709
  %3299 = vmatpush1.bf16.msra.mxu0 %v2708
  %3300 = vmatprep.subr.bf16.mxu0 %v2713
  %3301 = vmatpush1.bf16.msra.mxu0 %v2712
  %3302 = vmatprep.mubr.bf16.mxu0 %v276
  %3303 = vmatmul.mubr.bf16.gmra.mrb[0].mxu0 %v275
  %v3304 = vpop.f32.mrb[0].mxu0
  %v3305 = vadd.f32 0.0, %v3304
  %v3306 = vpop.f32.mrb[0].mxu0
  %v3307 = vadd.f32 0.0, %v3306
  %v3308 = vpop.f32.mrb[0].mxu0
  %v3309 = vadd.f32 0.0, %v3308
  %v3310 = vpop.f32.mrb[0].mxu0
  %v3311 = vadd.f32 0.0, %v3310
  %3312 = vdwg.mxu0
  %3313 = vmatprep.subr.bf16.mxu0 %v2717
  %3314 = vmatpush1.bf16.msra.mxu0 %v2716
  %3315 = vmatprep.subr.bf16.mxu0 %v2721
  %3316 = vmatpush1.bf16.msra.mxu0 %v2720
  %3317 = vmatprep.subr.bf16.mxu0 %v2725
  %3318 = vmatpush1.bf16.msra.mxu0 %v2724
  %3319 = vmatprep.subr.bf16.mxu0 %v2729
  %3320 = vmatpush1.bf16.msra.mxu0 %v2728
  %3321 = vmatprep.subr.bf16.mxu0 %v2733
  %3322 = vmatpush1.bf16.msra.mxu0 %v2732
  %3323 = vmatprep.subr.bf16.mxu0 %v2737
  %3324 = vmatpush1.bf16.msra.mxu0 %v2736
  %3325 = vmatprep.subr.bf16.mxu0 %v2741
  %3326 = vmatpush1.bf16.msra.mxu0 %v2740
  %3327 = vmatprep.subr.bf16.mxu0 %v2745
  %3328 = vmatpush1.bf16.msra.mxu0 %v2744
  %3329 = vmatprep.subr.bf16.mxu0 %v2749
  %3330 = vmatpush1.bf16.msra.mxu0 %v2748
  %3331 = vmatprep.subr.bf16.mxu0 %v2753
  %3332 = vmatpush1.bf16.msra.mxu0 %v2752
  %3333 = vmatprep.subr.bf16.mxu0 %v2757
  %3334 = vmatpush1.bf16.msra.mxu0 %v2756
  %3335 = vmatprep.subr.bf16.mxu0 %v2761
  %3336 = vmatpush1.bf16.msra.mxu0 %v2760
  %3337 = vmatprep.subr.bf16.mxu0 %v2765
  %3338 = vmatpush1.bf16.msra.mxu0 %v2764
  %3339 = vmatprep.subr.bf16.mxu0 %v2769
  %3340 = vmatpush1.bf16.msra.mxu0 %v2768
  %3341 = vmatprep.subr.bf16.mxu0 %v2773
  %3342 = vmatpush1.bf16.msra.mxu0 %v2772
  %3343 = vmatprep.subr.bf16.mxu0 %v2777
  %3344 = vmatpush1.bf16.msra.mxu0 %v2776
  %3345 = vmatprep.mubr.bf16.mxu0 %v278
  %3346 = vmatmul.mubr.bf16.gmra.mrb[0].mxu0 %v277
  %v3347 = vpop.f32.mrb[0].mxu0
  %v3348 = vadd.f32 %v3305, %v3347
  %v3349 = vpop.f32.mrb[0].mxu0
  %v3350 = vadd.f32 %v3307, %v3349
  %v3351 = vpop.f32.mrb[0].mxu0
  %v3352 = vadd.f32 %v3309, %v3351
  %v3353 = vpop.f32.mrb[0].mxu0
  %v3354 = vadd.f32 %v3311, %v3353
  %3355 = vdwg.mxu0
  %3356 = vmatprep.subr.bf16.mxu0 %v2781
  %3357 = vmatpush1.bf16.msra.mxu0 %v2780
  %3358 = vmatprep.subr.bf16.mxu0 %v2785
  %3359 = vmatpush1.bf16.msra.mxu0 %v2784
  %3360 = vmatprep.subr.bf16.mxu0 %v2789
  %3361 = vmatpush1.bf16.msra.mxu0 %v2788
  %3362 = vmatprep.subr.bf16.mxu0 %v2793
  %3363 = vmatpush1.bf16.msra.mxu0 %v2792
  %3364 = vmatprep.subr.bf16.mxu0 %v2797
  %3365 = vmatpush1.bf16.msra.mxu0 %v2796
  %3366 = vmatprep.subr.bf16.mxu0 %v2801
  %3367 = vmatpush1.bf16.msra.mxu0 %v2800
  %3368 = vmatprep.subr.bf16.mxu0 %v2805
  %3369 = vmatpush1.bf16.msra.mxu0 %v2804
  %3370 = vmatprep.subr.bf16.mxu0 %v2809
  %3371 = vmatpush1.bf16.msra.mxu0 %v2808
  %3372 = vmatprep.subr.bf16.mxu0 %v2813
  %3373 = vmatpush1.bf16.msra.mxu0 %v2812
  %3374 = vmatprep.subr.bf16.mxu0 %v2817
  %3375 = vmatpush1.bf16.msra.mxu0 %v2816
  %3376 = vmatprep.subr.bf16.mxu0 %v2821
  %3377 = vmatpush1.bf16.msra.mxu0 %v2820
  %3378 = vmatprep.subr.bf16.mxu0 %v2825
  %3379 = vmatpush1.bf16.msra.mxu0 %v2824
  %3380 = vmatprep.subr.bf16.mxu0 %v2829
  %3381 = vmatpush1.bf16.msra.mxu0 %v2828
  %3382 = vmatprep.subr.bf16.mxu0 %v2833
  %3383 = vmatpush1.bf16.msra.mxu0 %v2832
  %3384 = vmatprep.subr.bf16.mxu0 %v2837
  %3385 = vmatpush1.bf16.msra.mxu0 %v2836
  %3386 = vmatprep.subr.bf16.mxu0 %v2841
  %3387 = vmatpush1.bf16.msra.mxu0 %v2840
  %3388 = vmatprep.mubr.bf16.mxu0 %v280
  %3389 = vmatmul.mubr.bf16.gmra.mrb[0].mxu0 %v279
  %v3390 = vpop.f32.mrb[0].mxu0
  %v3391 = vadd.f32 %v3348, %v3390
  %v3392 = vpop.f32.mrb[0].mxu0
  %v3393 = vadd.f32 %v3350, %v3392
  %v3394 = vpop.f32.mrb[0].mxu0
  %v3395 = vadd.f32 %v3352, %v3394
  %v3396 = vpop.f32.mrb[0].mxu0
  %v3397 = vadd.f32 %v3354, %v3396
  %3398 = vdwg.mxu0
  %3399 = vmatprep.subr.bf16.mxu0 %v2845
  %3400 = vmatpush1.bf16.msra.mxu0 %v2844
  %3401 = vmatprep.subr.bf16.mxu0 %v2849
  %3402 = vmatpush1.bf16.msra.mxu0 %v2848
  %3403 = vmatprep.subr.bf16.mxu0 %v2853
  %3404 = vmatpush1.bf16.msra.mxu0 %v2852
  %3405 = vmatprep.subr.bf16.mxu0 %v2857
  %3406 = vmatpush1.bf16.msra.mxu0 %v2856
  %3407 = vmatprep.subr.bf16.mxu0 %v2861
  %3408 = vmatpush1.bf16.msra.mxu0 %v2860
  %3409 = vmatprep.subr.bf16.mxu0 %v2865
  %3410 = vmatpush1.bf16.msra.mxu0 %v2864
  %3411 = vmatprep.subr.bf16.mxu0 %v2869
  %3412 = vmatpush1.bf16.msra.mxu0 %v2868
  %3413 = vmatprep.subr.bf16.mxu0 %v2873
  %3414 = vmatpush1.bf16.msra.mxu0 %v2872
  %3415 = vmatprep.subr.bf16.mxu0 0
  %3416 = vmatpush1.bf16.msra.mxu0 0
  %3417 = vmatprep.subr.bf16.mxu0 0
  %3418 = vmatpush1.bf16.msra.mxu0 0
  %3419 = vmatprep.subr.bf16.mxu0 0
  %3420 = vmatpush1.bf16.msra.mxu0 0
  %3421 = vmatprep.subr.bf16.mxu0 0
  %3422 = vmatpush1.bf16.msra.mxu0 0
  %3423 = vmatprep.subr.bf16.mxu0 0
  %3424 = vmatpush1.bf16.msra.mxu0 0
  %3425 = vmatprep.subr.bf16.mxu0 0
  %3426 = vmatpush1.bf16.msra.mxu0 0
  %3427 = vmatprep.subr.bf16.mxu0 0
  %3428 = vmatpush1.bf16.msra.mxu0 0
  %3429 = vmatprep.subr.bf16.mxu0 0
  %3430 = vmatpush1.bf16.msra.mxu0 0
  %3431 = vmatprep.mubr.bf16.mxu0 0
  %3432 = vmatmul.mubr.bf16.gmra.mrb[0].mxu0 %v281
  %v3433 = vpop.f32.mrb[0].mxu0
  %v3434 = vadd.f32 %v3391, %v3433
  %v3435 = vpop.f32.mrb[0].mxu0
  %v3436 = vadd.f32 %v3393, %v3435
  %v3437 = vpop.f32.mrb[0].mxu0
  %v3438 = vadd.f32 %v3395, %v3437
  %v3439 = vpop.f32.mrb[0].mxu0
  %v3440 = vadd.f32 %v3397, %v3439
  %3441 = vdwg.mxu0
  %v3442 = vmax.f32 %v1573, %v3262
  %v3443 = vmax.f32 %v1575, %v3264
  %v3444 = vmax.f32 %v1745, %v3434
  %v3445 = vmax.f32 %v1747, %v3436
  %v3446 = vmax.f32 %v1577, %v3266
  %v3447 = vmax.f32 %v1579, %v3268
  %v3448 = vmax.f32 %v1749, %v3438
  %v3449 = vmax.f32 %v1751, %v3440
  %s3450 = scalar_lea.vmem %s1, 3584
  %v3451 = vld [vmem:[%s3450] sm:$0xff]
  %v3452 = vld [vmem:[%s3450 + $0x8] sm:$0xff]
  %v3453 = vld [vmem:[%s3450 + $0x10] sm:$0xff]
  %v3454 = vld [vmem:[%s3450 + $0x18] sm:$0xff]
  %v3455 = vld [vmem:[%s3450 + $0x20] sm:$0xff]
  %v3456 = vld [vmem:[%s3450 + $0x28] sm:$0xff]
  %v3457 = vld [vmem:[%s3450 + $0x30] sm:$0xff]
  %v3458 = vld [vmem:[%s3450 + $0x38] sm:$0xff]
  %v3459 = vld [vmem:[%s3450 + $0x40] sm:$0xff]
  %v3460 = vld [vmem:[%s3450 + $0x48] sm:$0xff]
  %v3461 = vld [vmem:[%s3450 + $0x50] sm:$0xff]
  %v3462 = vld [vmem:[%s3450 + $0x58] sm:$0xff]
  %v3463 = vld [vmem:[%s3450 + $0x60] sm:$0xff]
  %v3464 = vld [vmem:[%s3450 + $0x68] sm:$0xff]
  %v3465 = vld [vmem:[%s3450 + $0x70] sm:$0xff]
  %v3466 = vld [vmem:[%s3450 + $0x78] sm:$0xff]
  %v3467 = vld [vmem:[%s3450 + $0x80] sm:$0xff]
  %v3468 = vld [vmem:[%s3450 + $0x88] sm:$0xff]
  %v3469 = vld [vmem:[%s3450 + $0x90] sm:$0xff]
  %v3470 = vld [vmem:[%s3450 + $0x98] sm:$0xff]
  %v3471 = vld [vmem:[%s3450 + $0xa0] sm:$0xff]
  %v3472 = vld [vmem:[%s3450 + $0xa8] sm:$0xff]
  %v3473 = vld [vmem:[%s3450 + $0xb0] sm:$0xff]
  %v3474 = vld [vmem:[%s3450 + $0xb8] sm:$0xff]
  %v3475 = vld [vmem:[%s3450 + $0xc0] sm:$0xff]
  %v3476 = vld [vmem:[%s3450 + $0xc8] sm:$0xff]
  %v3477 = vld [vmem:[%s3450 + $0xd0] sm:$0xff]
  %v3478 = vld [vmem:[%s3450 + $0xd8] sm:$0xff]
  %v3479 = vld [vmem:[%s3450 + $0xe0] sm:$0xff]
  %v3480 = vld [vmem:[%s3450 + $0xe8] sm:$0xff]
  %v3481 = vld [vmem:[%s3450 + $0xf0] sm:$0xff]
  %v3482 = vld [vmem:[%s3450 + $0xf8] sm:$0xff]
  %v3483 = vld [vmem:[%s3450 + $0x100] sm:$0xff]
  %v3484 = vld [vmem:[%s3450 + $0x108] sm:$0xff]
  %v3485 = vld [vmem:[%s3450 + $0x110] sm:$0xff]
  %v3486 = vld [vmem:[%s3450 + $0x118] sm:$0xff]
  %v3487 = vld [vmem:[%s3450 + $0x120] sm:$0xff]
  %v3488 = vld [vmem:[%s3450 + $0x128] sm:$0xff]
  %v3489 = vld [vmem:[%s3450 + $0x130] sm:$0xff]
  %v3490 = vld [vmem:[%s3450 + $0x138] sm:$0xff]
  %v3491 = vld [vmem:[%s3450 + $0x140] sm:$0xff]
  %v3492 = vld [vmem:[%s3450 + $0x148] sm:$0xff]
  %v3493 = vld [vmem:[%s3450 + $0x150] sm:$0xff]
  %v3494 = vld [vmem:[%s3450 + $0x158] sm:$0xff]
  %v3495 = vld [vmem:[%s3450 + $0x160] sm:$0xff]
  %v3496 = vld [vmem:[%s3450 + $0x168] sm:$0xff]
  %v3497 = vld [vmem:[%s3450 + $0x170] sm:$0xff]
  %v3498 = vld [vmem:[%s3450 + $0x178] sm:$0xff]
  %v3499 = vld [vmem:[%s3450 + $0x180] sm:$0xff]
  %v3500 = vld [vmem:[%s3450 + $0x188] sm:$0xff]
  %v3501 = vld [vmem:[%s3450 + $0x190] sm:$0xff]
  %v3502 = vld [vmem:[%s3450 + $0x198] sm:$0xff]
  %v3503 = vld [vmem:[%s3450 + $0x1a0] sm:$0xff]
  %v3504 = vld [vmem:[%s3450 + $0x1a8] sm:$0xff]
  %v3505 = vld [vmem:[%s3450 + $0x1b0] sm:$0xff]
  %v3506 = vld [vmem:[%s3450 + $0x1b8] sm:$0xff]
  %v3507 = vld [vmem:[%s3450 + $0x1c0] sm:$0xff]
  %v3508 = vld [vmem:[%s3450 + $0x1c8] sm:$0xff]
  %v3509 = vld [vmem:[%s3450 + $0x1d0] sm:$0xff]
  %v3510 = vld [vmem:[%s3450 + $0x1d8] sm:$0xff]
  %v3511 = vld [vmem:[%s3450 + $0x1e0] sm:$0xff]
  %v3512 = vld [vmem:[%s3450 + $0x1e8] sm:$0xff]
  %v3513 = vld [vmem:[%s3450 + $0x1f0] sm:$0xff]
  %v3514 = vld [vmem:[%s3450 + $0x1f8] sm:$0xff]
  %v3515 = vld [vmem:[%s3450 + $0x200] sm:$0xff]
  %v3516 = vld [vmem:[%s3450 + $0x208] sm:$0xff]
  %v3517 = vld [vmem:[%s3450 + $0x210] sm:$0xff]
  %v3518 = vld [vmem:[%s3450 + $0x218] sm:$0xff]
  %v3519 = vld [vmem:[%s3450 + $0x220] sm:$0xff]
  %v3520 = vld [vmem:[%s3450 + $0x228] sm:$0xff]
  %v3521 = vld [vmem:[%s3450 + $0x230] sm:$0xff]
  %v3522 = vld [vmem:[%s3450 + $0x238] sm:$0xff]
  %v3523 = vld [vmem:[%s3450 + $0x240] sm:$0xff]
  %v3524 = vld [vmem:[%s3450 + $0x248] sm:$0xff]
  %v3525 = vld [vmem:[%s3450 + $0x250] sm:$0xff]
  %v3526 = vld [vmem:[%s3450 + $0x258] sm:$0xff]
  %v3527 = vld [vmem:[%s3450 + $0x260] sm:$0xff]
  %v3528 = vld [vmem:[%s3450 + $0x268] sm:$0xff]
  %v3529 = vld [vmem:[%s3450 + $0x270] sm:$0xff]
  %v3530 = vld [vmem:[%s3450 + $0x278] sm:$0xff]
  %v3531 = vld [vmem:[%s3450 + $0x280] sm:$0xff]
  %v3532 = vld [vmem:[%s3450 + $0x288] sm:$0xff]
  %v3533 = vld [vmem:[%s3450 + $0x290] sm:$0xff]
  %v3534 = vld [vmem:[%s3450 + $0x298] sm:$0xff]
  %v3535 = vld [vmem:[%s3450 + $0x2a0] sm:$0xff]
  %v3536 = vld [vmem:[%s3450 + $0x2a8] sm:$0xff]
  %v3537 = vld [vmem:[%s3450 + $0x2b0] sm:$0xff]
  %v3538 = vld [vmem:[%s3450 + $0x2b8] sm:$0xff]
  %v3539 = vld [vmem:[%s3450 + $0x2c0] sm:$0xff]
  %v3540 = vld [vmem:[%s3450 + $0x2c8] sm:$0xff]
  %v3541 = vld [vmem:[%s3450 + $0x2d0] sm:$0xff]
  %v3542 = vld [vmem:[%s3450 + $0x2d8] sm:$0xff]
  %v3543 = vld [vmem:[%s3450 + $0x2e0] sm:$0xff]
  %v3544 = vld [vmem:[%s3450 + $0x2e8] sm:$0xff]
  %v3545 = vld [vmem:[%s3450 + $0x2f0] sm:$0xff]
  %v3546 = vld [vmem:[%s3450 + $0x2f8] sm:$0xff]
  %v3547 = vld [vmem:[%s3450 + $0x300] sm:$0xff]
  %v3548 = vld [vmem:[%s3450 + $0x308] sm:$0xff]
  %v3549 = vld [vmem:[%s3450 + $0x310] sm:$0xff]
  %v3550 = vld [vmem:[%s3450 + $0x318] sm:$0xff]
  %v3551 = vld [vmem:[%s3450 + $0x320] sm:$0xff]
  %v3552 = vld [vmem:[%s3450 + $0x328] sm:$0xff]
  %v3553 = vld [vmem:[%s3450 + $0x330] sm:$0xff]
  %v3554 = vld [vmem:[%s3450 + $0x338] sm:$0xff]
  %v3555 = vld [vmem:[%s3450 + $0x340] sm:$0xff]
  %v3556 = vld [vmem:[%s3450 + $0x348] sm:$0xff]
  %v3557 = vld [vmem:[%s3450 + $0x350] sm:$0xff]
  %v3558 = vld [vmem:[%s3450 + $0x358] sm:$0xff]
  %v3559 = vld [vmem:[%s3450 + $0x360] sm:$0xff]
  %v3560 = vld [vmem:[%s3450 + $0x368] sm:$0xff]
  %v3561 = vld [vmem:[%s3450 + $0x370] sm:$0xff]
  %v3562 = vld [vmem:[%s3450 + $0x378] sm:$0xff]
  %v3563 = vld [vmem:[%s3450 + $0x380] sm:$0xff]
  %v3564 = vld [vmem:[%s3450 + $0x388] sm:$0xff]
  %v3565 = vld [vmem:[%s3450 + $0x390] sm:$0xff]
  %v3566 = vld [vmem:[%s3450 + $0x398] sm:$0xff]
  %v3567 = vld [vmem:[%s3450 + $0x3a0] sm:$0xff]
  %v3568 = vld [vmem:[%s3450 + $0x3a8] sm:$0xff]
  %v3569 = vld [vmem:[%s3450 + $0x3b0] sm:$0xff]
  %v3570 = vld [vmem:[%s3450 + $0x3b8] sm:$0xff]
  %v3571 = vld [vmem:[%s3450 + $0x3c0] sm:$0xff]
  %v3572 = vld [vmem:[%s3450 + $0x3c8] sm:$0xff]
  %v3573 = vld [vmem:[%s3450 + $0x3d0] sm:$0xff]
  %v3574 = vld [vmem:[%s3450 + $0x3d8] sm:$0xff]
  %v3575 = vld [vmem:[%s3450 + $0x3e0] sm:$0xff]
  %v3576 = vld [vmem:[%s3450 + $0x3e8] sm:$0xff]
  %v3577 = vld [vmem:[%s3450 + $0x3f0] sm:$0xff]
  %v3578 = vld [vmem:[%s3450 + $0x3f8] sm:$0xff]
  %v3579 = vld [vmem:[%s3450 + $0x400] sm:$0xff]
  %v3580 = vld [vmem:[%s3450 + $0x408] sm:$0xff]
  %v3581 = vld [vmem:[%s3450 + $0x410] sm:$0xff]
  %v3582 = vld [vmem:[%s3450 + $0x418] sm:$0xff]
  %v3583 = vld [vmem:[%s3450 + $0x420] sm:$0xff]
  %v3584 = vld [vmem:[%s3450 + $0x428] sm:$0xff]
  %v3585 = vld [vmem:[%s3450 + $0x430] sm:$0xff]
  %v3586 = vld [vmem:[%s3450 + $0x438] sm:$0xff]
  %v3587 = vld [vmem:[%s3450 + $0x440] sm:$0xff]
  %v3588 = vld [vmem:[%s3450 + $0x448] sm:$0xff]
  %v3589 = vld [vmem:[%s3450 + $0x450] sm:$0xff]
  %v3590 = vld [vmem:[%s3450 + $0x458] sm:$0xff]
  %v3591 = vld [vmem:[%s3450 + $0x460] sm:$0xff]
  %v3592 = vld [vmem:[%s3450 + $0x468] sm:$0xff]
  %v3593 = vld [vmem:[%s3450 + $0x470] sm:$0xff]
  %v3594 = vld [vmem:[%s3450 + $0x478] sm:$0xff]
  %v3595 = vld [vmem:[%s3450 + $0x480] sm:$0xff]
  %v3596 = vld [vmem:[%s3450 + $0x488] sm:$0xff]
  %v3597 = vld [vmem:[%s3450 + $0x490] sm:$0xff]
  %v3598 = vld [vmem:[%s3450 + $0x498] sm:$0xff]
  %v3599 = vld [vmem:[%s3450 + $0x4a0] sm:$0xff]
  %v3600 = vld [vmem:[%s3450 + $0x4a8] sm:$0xff]
  %v3601 = vld [vmem:[%s3450 + $0x4b0] sm:$0xff]
  %v3602 = vld [vmem:[%s3450 + $0x4b8] sm:$0xff]
  %v3603 = vld [vmem:[%s3450 + $0x4c0] sm:$0xff]
  %v3604 = vld [vmem:[%s3450 + $0x4c8] sm:$0xff]
  %v3605 = vld [vmem:[%s3450 + $0x4d0] sm:$0xff]
  %v3606 = vld [vmem:[%s3450 + $0x4d8] sm:$0xff]
  %v3607 = vld [vmem:[%s3450 + $0x4e0] sm:$0xff]
  %v3608 = vld [vmem:[%s3450 + $0x4e8] sm:$0xff]
  %v3609 = vld [vmem:[%s3450 + $0x4f0] sm:$0xff]
  %v3610 = vld [vmem:[%s3450 + $0x4f8] sm:$0xff]
  %v3611 = vld [vmem:[%s3450 + $0x500] sm:$0xff]
  %v3612 = vld [vmem:[%s3450 + $0x508] sm:$0xff]
  %v3613 = vld [vmem:[%s3450 + $0x510] sm:$0xff]
  %v3614 = vld [vmem:[%s3450 + $0x518] sm:$0xff]
  %v3615 = vld [vmem:[%s3450 + $0x520] sm:$0xff]
  %v3616 = vld [vmem:[%s3450 + $0x528] sm:$0xff]
  %v3617 = vld [vmem:[%s3450 + $0x530] sm:$0xff]
  %v3618 = vld [vmem:[%s3450 + $0x538] sm:$0xff]
  %v3619 = vld [vmem:[%s3450 + $0x540] sm:$0xff]
  %v3620 = vld [vmem:[%s3450 + $0x548] sm:$0xff]
  %v3621 = vld [vmem:[%s3450 + $0x550] sm:$0xff]
  %v3622 = vld [vmem:[%s3450 + $0x558] sm:$0xff]
  %v3623 = vld [vmem:[%s3450 + $0x560] sm:$0xff]
  %v3624 = vld [vmem:[%s3450 + $0x568] sm:$0xff]
  %v3625 = vld [vmem:[%s3450 + $0x570] sm:$0xff]
  %v3626 = vld [vmem:[%s3450 + $0x578] sm:$0xff]
  %v3627 = vld [vmem:[%s3450 + $0x580] sm:$0xff]
  %v3628 = vld [vmem:[%s3450 + $0x588] sm:$0xff]
  %v3629 = vld [vmem:[%s3450 + $0x590] sm:$0xff]
  %v3630 = vld [vmem:[%s3450 + $0x598] sm:$0xff]
  %v3631 = vld [vmem:[%s3450 + $0x5a0] sm:$0xff]
  %v3632 = vld [vmem:[%s3450 + $0x5a8] sm:$0xff]
  %v3633 = vld [vmem:[%s3450 + $0x5b0] sm:$0xff]
  %v3634 = vld [vmem:[%s3450 + $0x5b8] sm:$0xff]
  %v3635 = vld [vmem:[%s3450 + $0x5c0] sm:$0xff]
  %v3636 = vld [vmem:[%s3450 + $0x5c8] sm:$0xff]
  %v3637 = vld [vmem:[%s3450 + $0x5d0] sm:$0xff]
  %v3638 = vld [vmem:[%s3450 + $0x5d8] sm:$0xff]
  %v3639 = vld [vmem:[%s3450 + $0x5e0] sm:$0xff]
  %v3640 = vld [vmem:[%s3450 + $0x5e8] sm:$0xff]
  %v3641 = vld [vmem:[%s3450 + $0x5f0] sm:$0xff]
  %v3642 = vld [vmem:[%s3450 + $0x5f8] sm:$0xff]
  %v3643 = vld [vmem:[%s3450 + $0x600] sm:$0xff]
  %v3644 = vld [vmem:[%s3450 + $0x608] sm:$0xff]
  %v3645 = vld [vmem:[%s3450 + $0x610] sm:$0xff]
  %v3646 = vld [vmem:[%s3450 + $0x618] sm:$0xff]
  %v3647 = vld [vmem:[%s3450 + $0x620] sm:$0xff]
  %v3648 = vld [vmem:[%s3450 + $0x628] sm:$0xff]
  %v3649 = vld [vmem:[%s3450 + $0x630] sm:$0xff]
  %v3650 = vld [vmem:[%s3450 + $0x638] sm:$0xff]
  %v3651 = vld [vmem:[%s3450 + $0x640] sm:$0xff]
  %v3652 = vld [vmem:[%s3450 + $0x648] sm:$0xff]
  %v3653 = vld [vmem:[%s3450 + $0x650] sm:$0xff]
  %v3654 = vld [vmem:[%s3450 + $0x658] sm:$0xff]
  %v3655 = vld [vmem:[%s3450 + $0x660] sm:$0xff]
  %v3656 = vld [vmem:[%s3450 + $0x668] sm:$0xff]
  %v3657 = vld [vmem:[%s3450 + $0x670] sm:$0xff]
  %v3658 = vld [vmem:[%s3450 + $0x678] sm:$0xff]
  %v3659 = vld [vmem:[%s3450 + $0x680] sm:$0xff]
  %v3660 = vld [vmem:[%s3450 + $0x688] sm:$0xff]
  %v3661 = vld [vmem:[%s3450 + $0x690] sm:$0xff]
  %v3662 = vld [vmem:[%s3450 + $0x698] sm:$0xff]
  %v3663 = vld [vmem:[%s3450 + $0x6a0] sm:$0xff]
  %v3664 = vld [vmem:[%s3450 + $0x6a8] sm:$0xff]
  %v3665 = vld [vmem:[%s3450 + $0x6b0] sm:$0xff]
  %v3666 = vld [vmem:[%s3450 + $0x6b8] sm:$0xff]
  %v3667 = vld [vmem:[%s3450 + $0x6c0] sm:$0xff]
  %v3668 = vld [vmem:[%s3450 + $0x6c8] sm:$0xff]
  %v3669 = vld [vmem:[%s3450 + $0x6d0] sm:$0xff]
  %v3670 = vld [vmem:[%s3450 + $0x6d8] sm:$0xff]
  %v3671 = vld [vmem:[%s3450 + $0x6e0] sm:$0xff]
  %v3672 = vld [vmem:[%s3450 + $0x6e8] sm:$0xff]
  %v3673 = vld [vmem:[%s3450 + $0x6f0] sm:$0xff]
  %v3674 = vld [vmem:[%s3450 + $0x6f8] sm:$0xff]
  %v3899 = vunpack.c.l.b16 %v3451
  %v3900 = vunpack.c.h.b16 %v3451
  %v3901 = vunpack.c.l.b16 %v3452
  %v3902 = vunpack.c.h.b16 %v3452
  %v3903 = vunpack.c.l.b16 %v3453
  %v3904 = vunpack.c.h.b16 %v3453
  %v3905 = vunpack.c.l.b16 %v3454
  %v3906 = vunpack.c.h.b16 %v3454
  %v3907 = vunpack.c.l.b16 %v3455
  %v3908 = vunpack.c.h.b16 %v3455
  %v3909 = vunpack.c.l.b16 %v3456
  %v3910 = vunpack.c.h.b16 %v3456
  %v3911 = vunpack.c.l.b16 %v3457
  %v3912 = vunpack.c.h.b16 %v3457
  %v3913 = vunpack.c.l.b16 %v3458
  %v3914 = vunpack.c.h.b16 %v3458
  %v3915 = vunpack.c.l.b16 %v3459
  %v3916 = vunpack.c.h.b16 %v3459
  %v3917 = vunpack.c.l.b16 %v3460
  %v3918 = vunpack.c.h.b16 %v3460
  %v3919 = vunpack.c.l.b16 %v3461
  %v3920 = vunpack.c.h.b16 %v3461
  %v3921 = vunpack.c.l.b16 %v3462
  %v3922 = vunpack.c.h.b16 %v3462
  %v3923 = vunpack.c.l.b16 %v3463
  %v3924 = vunpack.c.h.b16 %v3463
  %v3925 = vunpack.c.l.b16 %v3464
  %v3926 = vunpack.c.h.b16 %v3464
  %v3927 = vunpack.c.l.b16 %v3465
  %v3928 = vunpack.c.h.b16 %v3465
  %v3929 = vunpack.c.l.b16 %v3466
  %v3930 = vunpack.c.h.b16 %v3466
  %v3931 = vunpack.c.l.b16 %v3467
  %v3932 = vunpack.c.h.b16 %v3467
  %v3933 = vunpack.c.l.b16 %v3468
  %v3934 = vunpack.c.h.b16 %v3468
  %v3935 = vunpack.c.l.b16 %v3469
  %v3936 = vunpack.c.h.b16 %v3469
  %v3937 = vunpack.c.l.b16 %v3470
  %v3938 = vunpack.c.h.b16 %v3470
  %v3939 = vunpack.c.l.b16 %v3471
  %v3940 = vunpack.c.h.b16 %v3471
  %v3941 = vunpack.c.l.b16 %v3472
  %v3942 = vunpack.c.h.b16 %v3472
  %v3943 = vunpack.c.l.b16 %v3473
  %v3944 = vunpack.c.h.b16 %v3473
  %v3945 = vunpack.c.l.b16 %v3474
  %v3946 = vunpack.c.h.b16 %v3474
  %v3947 = vunpack.c.l.b16 %v3475
  %v3948 = vunpack.c.h.b16 %v3475
  %v3949 = vunpack.c.l.b16 %v3476
  %v3950 = vunpack.c.h.b16 %v3476
  %v3951 = vunpack.c.l.b16 %v3477
  %v3952 = vunpack.c.h.b16 %v3477
  %v3953 = vunpack.c.l.b16 %v3478
  %v3954 = vunpack.c.h.b16 %v3478
  %v3955 = vunpack.c.l.b16 %v3479
  %v3956 = vunpack.c.h.b16 %v3479
  %v3957 = vunpack.c.l.b16 %v3480
  %v3958 = vunpack.c.h.b16 %v3480
  %v3959 = vunpack.c.l.b16 %v3481
  %v3960 = vunpack.c.h.b16 %v3481
  %v3961 = vunpack.c.l.b16 %v3482
  %v3962 = vunpack.c.h.b16 %v3482
  %v3963 = vunpack.c.l.b16 %v3483
  %v3964 = vunpack.c.h.b16 %v3483
  %v3965 = vunpack.c.l.b16 %v3484
  %v3966 = vunpack.c.h.b16 %v3484
  %v3967 = vunpack.c.l.b16 %v3485
  %v3968 = vunpack.c.h.b16 %v3485
  %v3969 = vunpack.c.l.b16 %v3486
  %v3970 = vunpack.c.h.b16 %v3486
  %v3971 = vunpack.c.l.b16 %v3487
  %v3972 = vunpack.c.h.b16 %v3487
  %v3973 = vunpack.c.l.b16 %v3488
  %v3974 = vunpack.c.h.b16 %v3488
  %v3975 = vunpack.c.l.b16 %v3489
  %v3976 = vunpack.c.h.b16 %v3489
  %v3977 = vunpack.c.l.b16 %v3490
  %v3978 = vunpack.c.h.b16 %v3490
  %v3979 = vunpack.c.l.b16 %v3491
  %v3980 = vunpack.c.h.b16 %v3491
  %v3981 = vunpack.c.l.b16 %v3492
  %v3982 = vunpack.c.h.b16 %v3492
  %v3983 = vunpack.c.l.b16 %v3493
  %v3984 = vunpack.c.h.b16 %v3493
  %v3985 = vunpack.c.l.b16 %v3494
  %v3986 = vunpack.c.h.b16 %v3494
  %v3987 = vunpack.c.l.b16 %v3495
  %v3988 = vunpack.c.h.b16 %v3495
  %v3989 = vunpack.c.l.b16 %v3496
  %v3990 = vunpack.c.h.b16 %v3496
  %v3991 = vunpack.c.l.b16 %v3497
  %v3992 = vunpack.c.h.b16 %v3497
  %v3993 = vunpack.c.l.b16 %v3498
  %v3994 = vunpack.c.h.b16 %v3498
  %v3995 = vunpack.c.l.b16 %v3499
  %v3996 = vunpack.c.h.b16 %v3499
  %v3997 = vunpack.c.l.b16 %v3500
  %v3998 = vunpack.c.h.b16 %v3500
  %v3999 = vunpack.c.l.b16 %v3501
  %v4000 = vunpack.c.h.b16 %v3501
  %v4001 = vunpack.c.l.b16 %v3502
  %v4002 = vunpack.c.h.b16 %v3502
  %v4003 = vunpack.c.l.b16 %v3503
  %v4004 = vunpack.c.h.b16 %v3503
  %v4005 = vunpack.c.l.b16 %v3504
  %v4006 = vunpack.c.h.b16 %v3504
  %v4007 = vunpack.c.l.b16 %v3505
  %v4008 = vunpack.c.h.b16 %v3505
  %v4009 = vunpack.c.l.b16 %v3506
  %v4010 = vunpack.c.h.b16 %v3506
  %v4011 = vunpack.c.l.b16 %v3507
  %v4012 = vunpack.c.h.b16 %v3507
  %v4013 = vunpack.c.l.b16 %v3508
  %v4014 = vunpack.c.h.b16 %v3508
  %v4015 = vunpack.c.l.b16 %v3509
  %v4016 = vunpack.c.h.b16 %v3509
  %v4017 = vunpack.c.l.b16 %v3510
  %v4018 = vunpack.c.h.b16 %v3510
  %v4019 = vunpack.c.l.b16 %v3511
  %v4020 = vunpack.c.h.b16 %v3511
  %v4021 = vunpack.c.l.b16 %v3512
  %v4022 = vunpack.c.h.b16 %v3512
  %v4023 = vunpack.c.l.b16 %v3513
  %v4024 = vunpack.c.h.b16 %v3513
  %v4025 = vunpack.c.l.b16 %v3514
  %v4026 = vunpack.c.h.b16 %v3514
  %v4027 = vunpack.c.l.b16 %v3515
  %v4028 = vunpack.c.h.b16 %v3515
  %v4029 = vunpack.c.l.b16 %v3516
  %v4030 = vunpack.c.h.b16 %v3516
  %v4031 = vunpack.c.l.b16 %v3517
  %v4032 = vunpack.c.h.b16 %v3517
  %v4033 = vunpack.c.l.b16 %v3518
  %v4034 = vunpack.c.h.b16 %v3518
  %v4035 = vunpack.c.l.b16 %v3519
  %v4036 = vunpack.c.h.b16 %v3519
  %v4037 = vunpack.c.l.b16 %v3520
  %v4038 = vunpack.c.h.b16 %v3520
  %v4039 = vunpack.c.l.b16 %v3521
  %v4040 = vunpack.c.h.b16 %v3521
  %v4041 = vunpack.c.l.b16 %v3522
  %v4042 = vunpack.c.h.b16 %v3522
  %v4043 = vunpack.c.l.b16 %v3523
  %v4044 = vunpack.c.h.b16 %v3523
  %v4045 = vunpack.c.l.b16 %v3524
  %v4046 = vunpack.c.h.b16 %v3524
  %v4047 = vunpack.c.l.b16 %v3525
  %v4048 = vunpack.c.h.b16 %v3525
  %v4049 = vunpack.c.l.b16 %v3526
  %v4050 = vunpack.c.h.b16 %v3526
  %v4051 = vunpack.c.l.b16 %v3527
  %v4052 = vunpack.c.h.b16 %v3527
  %v4053 = vunpack.c.l.b16 %v3528
  %v4054 = vunpack.c.h.b16 %v3528
  %v4055 = vunpack.c.l.b16 %v3529
  %v4056 = vunpack.c.h.b16 %v3529
  %v4057 = vunpack.c.l.b16 %v3530
  %v4058 = vunpack.c.h.b16 %v3530
  %v4059 = vunpack.c.l.b16 %v3531
  %v4060 = vunpack.c.h.b16 %v3531
  %v4061 = vunpack.c.l.b16 %v3532
  %v4062 = vunpack.c.h.b16 %v3532
  %v4063 = vunpack.c.l.b16 %v3533
  %v4064 = vunpack.c.h.b16 %v3533
  %v4065 = vunpack.c.l.b16 %v3534
  %v4066 = vunpack.c.h.b16 %v3534
  %v4067 = vunpack.c.l.b16 %v3535
  %v4068 = vunpack.c.h.b16 %v3535
  %v4069 = vunpack.c.l.b16 %v3536
  %v4070 = vunpack.c.h.b16 %v3536
  %v4071 = vunpack.c.l.b16 %v3537
  %v4072 = vunpack.c.h.b16 %v3537
  %v4073 = vunpack.c.l.b16 %v3538
  %v4074 = vunpack.c.h.b16 %v3538
  %v4075 = vunpack.c.l.b16 %v3539
  %v4076 = vunpack.c.h.b16 %v3539
  %v4077 = vunpack.c.l.b16 %v3540
  %v4078 = vunpack.c.h.b16 %v3540
  %v4079 = vunpack.c.l.b16 %v3541
  %v4080 = vunpack.c.h.b16 %v3541
  %v4081 = vunpack.c.l.b16 %v3542
  %v4082 = vunpack.c.h.b16 %v3542
  %v4083 = vunpack.c.l.b16 %v3543
  %v4084 = vunpack.c.h.b16 %v3543
  %v4085 = vunpack.c.l.b16 %v3544
  %v4086 = vunpack.c.h.b16 %v3544
  %v4087 = vunpack.c.l.b16 %v3545
  %v4088 = vunpack.c.h.b16 %v3545
  %v4089 = vunpack.c.l.b16 %v3546
  %v4090 = vunpack.c.h.b16 %v3546
  %v4091 = vunpack.c.l.b16 %v3547
  %v4092 = vunpack.c.h.b16 %v3547
  %v4093 = vunpack.c.l.b16 %v3548
  %v4094 = vunpack.c.h.b16 %v3548
  %v4095 = vunpack.c.l.b16 %v3549
  %v4096 = vunpack.c.h.b16 %v3549
  %v4097 = vunpack.c.l.b16 %v3550
  %v4098 = vunpack.c.h.b16 %v3550
  %v4099 = vunpack.c.l.b16 %v3551
  %v4100 = vunpack.c.h.b16 %v3551
  %v4101 = vunpack.c.l.b16 %v3552
  %v4102 = vunpack.c.h.b16 %v3552
  %v4103 = vunpack.c.l.b16 %v3553
  %v4104 = vunpack.c.h.b16 %v3553
  %v4105 = vunpack.c.l.b16 %v3554
  %v4106 = vunpack.c.h.b16 %v3554
  %v4107 = vunpack.c.l.b16 %v3555
  %v4108 = vunpack.c.h.b16 %v3555
  %v4109 = vunpack.c.l.b16 %v3556
  %v4110 = vunpack.c.h.b16 %v3556
  %v4111 = vunpack.c.l.b16 %v3557
  %v4112 = vunpack.c.h.b16 %v3557
  %v4113 = vunpack.c.l.b16 %v3558
  %v4114 = vunpack.c.h.b16 %v3558
  %v4115 = vunpack.c.l.b16 %v3559
  %v4116 = vunpack.c.h.b16 %v3559
  %v4117 = vunpack.c.l.b16 %v3560
  %v4118 = vunpack.c.h.b16 %v3560
  %v4119 = vunpack.c.l.b16 %v3561
  %v4120 = vunpack.c.h.b16 %v3561
  %v4121 = vunpack.c.l.b16 %v3562
  %v4122 = vunpack.c.h.b16 %v3562
  %v4123 = vunpack.c.l.b16 %v3563
  %v4124 = vunpack.c.h.b16 %v3563
  %v4125 = vunpack.c.l.b16 %v3564
  %v4126 = vunpack.c.h.b16 %v3564
  %v4127 = vunpack.c.l.b16 %v3565
  %v4128 = vunpack.c.h.b16 %v3565
  %v4129 = vunpack.c.l.b16 %v3566
  %v4130 = vunpack.c.h.b16 %v3566
  %v4131 = vunpack.c.l.b16 %v3567
  %v4132 = vunpack.c.h.b16 %v3567
  %v4133 = vunpack.c.l.b16 %v3568
  %v4134 = vunpack.c.h.b16 %v3568
  %v4135 = vunpack.c.l.b16 %v3569
  %v4136 = vunpack.c.h.b16 %v3569
  %v4137 = vunpack.c.l.b16 %v3570
  %v4138 = vunpack.c.h.b16 %v3570
  %v4139 = vunpack.c.l.b16 %v3571
  %v4140 = vunpack.c.h.b16 %v3571
  %v4141 = vunpack.c.l.b16 %v3572
  %v4142 = vunpack.c.h.b16 %v3572
  %v4143 = vunpack.c.l.b16 %v3573
  %v4144 = vunpack.c.h.b16 %v3573
  %v4145 = vunpack.c.l.b16 %v3574
  %v4146 = vunpack.c.h.b16 %v3574
  %v4147 = vunpack.c.l.b16 %v3575
  %v4148 = vunpack.c.h.b16 %v3575
  %v4149 = vunpack.c.l.b16 %v3576
  %v4150 = vunpack.c.h.b16 %v3576
  %v4151 = vunpack.c.l.b16 %v3577
  %v4152 = vunpack.c.h.b16 %v3577
  %v4153 = vunpack.c.l.b16 %v3578
  %v4154 = vunpack.c.h.b16 %v3578
  %v4155 = vunpack.c.l.b16 %v3579
  %v4156 = vunpack.c.h.b16 %v3579
  %v4157 = vunpack.c.l.b16 %v3580
  %v4158 = vunpack.c.h.b16 %v3580
  %v4159 = vunpack.c.l.b16 %v3581
  %v4160 = vunpack.c.h.b16 %v3581
  %v4161 = vunpack.c.l.b16 %v3582
  %v4162 = vunpack.c.h.b16 %v3582
  %v4163 = vunpack.c.l.b16 %v3583
  %v4164 = vunpack.c.h.b16 %v3583
  %v4165 = vunpack.c.l.b16 %v3584
  %v4166 = vunpack.c.h.b16 %v3584
  %v4167 = vunpack.c.l.b16 %v3585
  %v4168 = vunpack.c.h.b16 %v3585
  %v4169 = vunpack.c.l.b16 %v3586
  %v4170 = vunpack.c.h.b16 %v3586
  %v4171 = vunpack.c.l.b16 %v3587
  %v4172 = vunpack.c.h.b16 %v3587
  %v4173 = vunpack.c.l.b16 %v3588
  %v4174 = vunpack.c.h.b16 %v3588
  %v4175 = vunpack.c.l.b16 %v3589
  %v4176 = vunpack.c.h.b16 %v3589
  %v4177 = vunpack.c.l.b16 %v3590
  %v4178 = vunpack.c.h.b16 %v3590
  %v4179 = vunpack.c.l.b16 %v3591
  %v4180 = vunpack.c.h.b16 %v3591
  %v4181 = vunpack.c.l.b16 %v3592
  %v4182 = vunpack.c.h.b16 %v3592
  %v4183 = vunpack.c.l.b16 %v3593
  %v4184 = vunpack.c.h.b16 %v3593
  %v4185 = vunpack.c.l.b16 %v3594
  %v4186 = vunpack.c.h.b16 %v3594
  %v4187 = vunpack.c.l.b16 %v3595
  %v4188 = vunpack.c.h.b16 %v3595
  %v4189 = vunpack.c.l.b16 %v3596
  %v4190 = vunpack.c.h.b16 %v3596
  %v4191 = vunpack.c.l.b16 %v3597
  %v4192 = vunpack.c.h.b16 %v3597
  %v4193 = vunpack.c.l.b16 %v3598
  %v4194 = vunpack.c.h.b16 %v3598
  %v4195 = vunpack.c.l.b16 %v3599
  %v4196 = vunpack.c.h.b16 %v3599
  %v4197 = vunpack.c.l.b16 %v3600
  %v4198 = vunpack.c.h.b16 %v3600
  %v4199 = vunpack.c.l.b16 %v3601
  %v4200 = vunpack.c.h.b16 %v3601
  %v4201 = vunpack.c.l.b16 %v3602
  %v4202 = vunpack.c.h.b16 %v3602
  %v4203 = vunpack.c.l.b16 %v3603
  %v4204 = vunpack.c.h.b16 %v3603
  %v4205 = vunpack.c.l.b16 %v3604
  %v4206 = vunpack.c.h.b16 %v3604
  %v4207 = vunpack.c.l.b16 %v3605
  %v4208 = vunpack.c.h.b16 %v3605
  %v4209 = vunpack.c.l.b16 %v3606
  %v4210 = vunpack.c.h.b16 %v3606
  %v4211 = vunpack.c.l.b16 %v3607
  %v4212 = vunpack.c.h.b16 %v3607
  %v4213 = vunpack.c.l.b16 %v3608
  %v4214 = vunpack.c.h.b16 %v3608
  %v4215 = vunpack.c.l.b16 %v3609
  %v4216 = vunpack.c.h.b16 %v3609
  %v4217 = vunpack.c.l.b16 %v3610
  %v4218 = vunpack.c.h.b16 %v3610
  %v4219 = vunpack.c.l.b16 %v3611
  %v4220 = vunpack.c.h.b16 %v3611
  %v4221 = vunpack.c.l.b16 %v3612
  %v4222 = vunpack.c.h.b16 %v3612
  %v4223 = vunpack.c.l.b16 %v3613
  %v4224 = vunpack.c.h.b16 %v3613
  %v4225 = vunpack.c.l.b16 %v3614
  %v4226 = vunpack.c.h.b16 %v3614
  %v4227 = vunpack.c.l.b16 %v3615
  %v4228 = vunpack.c.h.b16 %v3615
  %v4229 = vunpack.c.l.b16 %v3616
  %v4230 = vunpack.c.h.b16 %v3616
  %v4231 = vunpack.c.l.b16 %v3617
  %v4232 = vunpack.c.h.b16 %v3617
  %v4233 = vunpack.c.l.b16 %v3618
  %v4234 = vunpack.c.h.b16 %v3618
  %v4235 = vunpack.c.l.b16 %v3619
  %v4236 = vunpack.c.h.b16 %v3619
  %v4237 = vunpack.c.l.b16 %v3620
  %v4238 = vunpack.c.h.b16 %v3620
  %v4239 = vunpack.c.l.b16 %v3621
  %v4240 = vunpack.c.h.b16 %v3621
  %v4241 = vunpack.c.l.b16 %v3622
  %v4242 = vunpack.c.h.b16 %v3622
  %v4243 = vunpack.c.l.b16 %v3623
  %v4244 = vunpack.c.h.b16 %v3623
  %v4245 = vunpack.c.l.b16 %v3624
  %v4246 = vunpack.c.h.b16 %v3624
  %v4247 = vunpack.c.l.b16 %v3625
  %v4248 = vunpack.c.h.b16 %v3625
  %v4249 = vunpack.c.l.b16 %v3626
  %v4250 = vunpack.c.h.b16 %v3626
  %v4251 = vunpack.c.l.b16 %v3627
  %v4252 = vunpack.c.h.b16 %v3627
  %v4253 = vunpack.c.l.b16 %v3628
  %v4254 = vunpack.c.h.b16 %v3628
  %v4255 = vunpack.c.l.b16 %v3629
  %v4256 = vunpack.c.h.b16 %v3629
  %v4257 = vunpack.c.l.b16 %v3630
  %v4258 = vunpack.c.h.b16 %v3630
  %v4259 = vunpack.c.l.b16 %v3631
  %v4260 = vunpack.c.h.b16 %v3631
  %v4261 = vunpack.c.l.b16 %v3632
  %v4262 = vunpack.c.h.b16 %v3632
  %v4263 = vunpack.c.l.b16 %v3633
  %v4264 = vunpack.c.h.b16 %v3633
  %v4265 = vunpack.c.l.b16 %v3634
  %v4266 = vunpack.c.h.b16 %v3634
  %v4267 = vunpack.c.l.b16 %v3635
  %v4268 = vunpack.c.h.b16 %v3635
  %v4269 = vunpack.c.l.b16 %v3636
  %v4270 = vunpack.c.h.b16 %v3636
  %v4271 = vunpack.c.l.b16 %v3637
  %v4272 = vunpack.c.h.b16 %v3637
  %v4273 = vunpack.c.l.b16 %v3638
  %v4274 = vunpack.c.h.b16 %v3638
  %v4275 = vunpack.c.l.b16 %v3639
  %v4276 = vunpack.c.h.b16 %v3639
  %v4277 = vunpack.c.l.b16 %v3640
  %v4278 = vunpack.c.h.b16 %v3640
  %v4279 = vunpack.c.l.b16 %v3641
  %v4280 = vunpack.c.h.b16 %v3641
  %v4281 = vunpack.c.l.b16 %v3642
  %v4282 = vunpack.c.h.b16 %v3642
  %v4283 = vunpack.c.l.b16 %v3643
  %v4284 = vunpack.c.h.b16 %v3643
  %v4285 = vunpack.c.l.b16 %v3644
  %v4286 = vunpack.c.h.b16 %v3644
  %v4287 = vunpack.c.l.b16 %v3645
  %v4288 = vunpack.c.h.b16 %v3645
  %v4289 = vunpack.c.l.b16 %v3646
  %v4290 = vunpack.c.h.b16 %v3646
  %v4291 = vunpack.c.l.b16 %v3647
  %v4292 = vunpack.c.h.b16 %v3647
  %v4293 = vunpack.c.l.b16 %v3648
  %v4294 = vunpack.c.h.b16 %v3648
  %v4295 = vunpack.c.l.b16 %v3649
  %v4296 = vunpack.c.h.b16 %v3649
  %v4297 = vunpack.c.l.b16 %v3650
  %v4298 = vunpack.c.h.b16 %v3650
  %v4299 = vunpack.c.l.b16 %v3651
  %v4300 = vunpack.c.h.b16 %v3651
  %v4301 = vunpack.c.l.b16 %v3652
  %v4302 = vunpack.c.h.b16 %v3652
  %v4303 = vunpack.c.l.b16 %v3653
  %v4304 = vunpack.c.h.b16 %v3653
  %v4305 = vunpack.c.l.b16 %v3654
  %v4306 = vunpack.c.h.b16 %v3654
  %v4307 = vunpack.c.l.b16 %v3655
  %v4308 = vunpack.c.h.b16 %v3655
  %v4309 = vunpack.c.l.b16 %v3656
  %v4310 = vunpack.c.h.b16 %v3656
  %v4311 = vunpack.c.l.b16 %v3657
  %v4312 = vunpack.c.h.b16 %v3657
  %v4313 = vunpack.c.l.b16 %v3658
  %v4314 = vunpack.c.h.b16 %v3658
  %v4315 = vunpack.c.l.b16 %v3659
  %v4316 = vunpack.c.h.b16 %v3659
  %v4317 = vunpack.c.l.b16 %v3660
  %v4318 = vunpack.c.h.b16 %v3660
  %v4319 = vunpack.c.l.b16 %v3661
  %v4320 = vunpack.c.h.b16 %v3661
  %v4321 = vunpack.c.l.b16 %v3662
  %v4322 = vunpack.c.h.b16 %v3662
  %v4323 = vunpack.c.l.b16 %v3663
  %v4324 = vunpack.c.h.b16 %v3663
  %v4325 = vunpack.c.l.b16 %v3664
  %v4326 = vunpack.c.h.b16 %v3664
  %v4327 = vunpack.c.l.b16 %v3665
  %v4328 = vunpack.c.h.b16 %v3665
  %v4329 = vunpack.c.l.b16 %v3666
  %v4330 = vunpack.c.h.b16 %v3666
  %v4331 = vunpack.c.l.b16 %v3667
  %v4332 = vunpack.c.h.b16 %v3667
  %v4333 = vunpack.c.l.b16 %v3668
  %v4334 = vunpack.c.h.b16 %v3668
  %v4335 = vunpack.c.l.b16 %v3669
  %v4336 = vunpack.c.h.b16 %v3669
  %v4337 = vunpack.c.l.b16 %v3670
  %v4338 = vunpack.c.h.b16 %v3670
  %v4339 = vunpack.c.l.b16 %v3671
  %v4340 = vunpack.c.h.b16 %v3671
  %v4341 = vunpack.c.l.b16 %v3672
  %v4342 = vunpack.c.h.b16 %v3672
  %v4343 = vunpack.c.l.b16 %v3673
  %v4344 = vunpack.c.h.b16 %v3673
  %v4345 = vunpack.c.l.b16 %v3674
  %v4346 = vunpack.c.h.b16 %v3674
  %v4347 = vpack.c.b16 %v3903, %v3899
  %v4348 = vpack.c.b16 %v3904, %v3900
  %v4349 = vpack.c.b16 %v3905, %v3901
  %v4350 = vpack.c.b16 %v3906, %v3902
  %v4351 = vpack.c.b16 %v3911, %v3907
  %v4352 = vpack.c.b16 %v3912, %v3908
  %v4353 = vpack.c.b16 %v3913, %v3909
  %v4354 = vpack.c.b16 %v3914, %v3910
  %v4355 = vpack.c.b16 %v3919, %v3915
  %v4356 = vpack.c.b16 %v3920, %v3916
  %v4357 = vpack.c.b16 %v3921, %v3917
  %v4358 = vpack.c.b16 %v3922, %v3918
  %v4359 = vpack.c.b16 %v3927, %v3923
  %v4360 = vpack.c.b16 %v3928, %v3924
  %v4361 = vpack.c.b16 %v3929, %v3925
  %v4362 = vpack.c.b16 %v3930, %v3926
  %v4363 = vpack.c.b16 %v3935, %v3931
  %v4364 = vpack.c.b16 %v3936, %v3932
  %v4365 = vpack.c.b16 %v3937, %v3933
  %v4366 = vpack.c.b16 %v3938, %v3934
  %v4367 = vpack.c.b16 %v3943, %v3939
  %v4368 = vpack.c.b16 %v3944, %v3940
  %v4369 = vpack.c.b16 %v3945, %v3941
  %v4370 = vpack.c.b16 %v3946, %v3942
  %v4371 = vpack.c.b16 %v3951, %v3947
  %v4372 = vpack.c.b16 %v3952, %v3948
  %v4373 = vpack.c.b16 %v3953, %v3949
  %v4374 = vpack.c.b16 %v3954, %v3950
  %v4375 = vpack.c.b16 %v3959, %v3955
  %v4376 = vpack.c.b16 %v3960, %v3956
  %v4377 = vpack.c.b16 %v3961, %v3957
  %v4378 = vpack.c.b16 %v3962, %v3958
  %v4379 = vpack.c.b16 %v3967, %v3963
  %v4380 = vpack.c.b16 %v3968, %v3964
  %v4381 = vpack.c.b16 %v3969, %v3965
  %v4382 = vpack.c.b16 %v3970, %v3966
  %v4383 = vpack.c.b16 %v3975, %v3971
  %v4384 = vpack.c.b16 %v3976, %v3972
  %v4385 = vpack.c.b16 %v3977, %v3973
  %v4386 = vpack.c.b16 %v3978, %v3974
  %v4387 = vpack.c.b16 %v3983, %v3979
  %v4388 = vpack.c.b16 %v3984, %v3980
  %v4389 = vpack.c.b16 %v3985, %v3981
  %v4390 = vpack.c.b16 %v3986, %v3982
  %v4391 = vpack.c.b16 %v3991, %v3987
  %v4392 = vpack.c.b16 %v3992, %v3988
  %v4393 = vpack.c.b16 %v3993, %v3989
  %v4394 = vpack.c.b16 %v3994, %v3990
  %v4395 = vpack.c.b16 %v3999, %v3995
  %v4396 = vpack.c.b16 %v4000, %v3996
  %v4397 = vpack.c.b16 %v4001, %v3997
  %v4398 = vpack.c.b16 %v4002, %v3998
  %v4399 = vpack.c.b16 %v4007, %v4003
  %v4400 = vpack.c.b16 %v4008, %v4004
  %v4401 = vpack.c.b16 %v4009, %v4005
  %v4402 = vpack.c.b16 %v4010, %v4006
  %v4403 = vpack.c.b16 %v4015, %v4011
  %v4404 = vpack.c.b16 %v4016, %v4012
  %v4405 = vpack.c.b16 %v4017, %v4013
  %v4406 = vpack.c.b16 %v4018, %v4014
  %v4407 = vpack.c.b16 %v4023, %v4019
  %v4408 = vpack.c.b16 %v4024, %v4020
  %v4409 = vpack.c.b16 %v4025, %v4021
  %v4410 = vpack.c.b16 %v4026, %v4022
  %v4411 = vpack.c.b16 %v4031, %v4027
  %v4412 = vpack.c.b16 %v4032, %v4028
  %v4413 = vpack.c.b16 %v4033, %v4029
  %v4414 = vpack.c.b16 %v4034, %v4030
  %v4415 = vpack.c.b16 %v4039, %v4035
  %v4416 = vpack.c.b16 %v4040, %v4036
  %v4417 = vpack.c.b16 %v4041, %v4037
  %v4418 = vpack.c.b16 %v4042, %v4038
  %v4419 = vpack.c.b16 %v4047, %v4043
  %v4420 = vpack.c.b16 %v4048, %v4044
  %v4421 = vpack.c.b16 %v4049, %v4045
  %v4422 = vpack.c.b16 %v4050, %v4046
  %v4423 = vpack.c.b16 %v4055, %v4051
  %v4424 = vpack.c.b16 %v4056, %v4052
  %v4425 = vpack.c.b16 %v4057, %v4053
  %v4426 = vpack.c.b16 %v4058, %v4054
  %v4427 = vpack.c.b16 %v4063, %v4059
  %v4428 = vpack.c.b16 %v4064, %v4060
  %v4429 = vpack.c.b16 %v4065, %v4061
  %v4430 = vpack.c.b16 %v4066, %v4062
  %v4431 = vpack.c.b16 %v4071, %v4067
  %v4432 = vpack.c.b16 %v4072, %v4068
  %v4433 = vpack.c.b16 %v4073, %v4069
  %v4434 = vpack.c.b16 %v4074, %v4070
  %v4435 = vpack.c.b16 %v4079, %v4075
  %v4436 = vpack.c.b16 %v4080, %v4076
  %v4437 = vpack.c.b16 %v4081, %v4077
  %v4438 = vpack.c.b16 %v4082, %v4078
  %v4439 = vpack.c.b16 %v4087, %v4083
  %v4440 = vpack.c.b16 %v4088, %v4084
  %v4441 = vpack.c.b16 %v4089, %v4085
  %v4442 = vpack.c.b16 %v4090, %v4086
  %v4443 = vpack.c.b16 %v4095, %v4091
  %v4444 = vpack.c.b16 %v4096, %v4092
  %v4445 = vpack.c.b16 %v4097, %v4093
  %v4446 = vpack.c.b16 %v4098, %v4094
  %v4447 = vpack.c.b16 %v4103, %v4099
  %v4448 = vpack.c.b16 %v4104, %v4100
  %v4449 = vpack.c.b16 %v4105, %v4101
  %v4450 = vpack.c.b16 %v4106, %v4102
  %v4451 = vpack.c.b16 %v4111, %v4107
  %v4452 = vpack.c.b16 %v4112, %v4108
  %v4453 = vpack.c.b16 %v4113, %v4109
  %v4454 = vpack.c.b16 %v4114, %v4110
  %v4455 = vpack.c.b16 %v4119, %v4115
  %v4456 = vpack.c.b16 %v4120, %v4116
  %v4457 = vpack.c.b16 %v4121, %v4117
  %v4458 = vpack.c.b16 %v4122, %v4118
  %v4459 = vpack.c.b16 %v4127, %v4123
  %v4460 = vpack.c.b16 %v4128, %v4124
  %v4461 = vpack.c.b16 %v4129, %v4125
  %v4462 = vpack.c.b16 %v4130, %v4126
  %v4463 = vpack.c.b16 %v4135, %v4131
  %v4464 = vpack.c.b16 %v4136, %v4132
  %v4465 = vpack.c.b16 %v4137, %v4133
  %v4466 = vpack.c.b16 %v4138, %v4134
  %v4467 = vpack.c.b16 %v4143, %v4139
  %v4468 = vpack.c.b16 %v4144, %v4140
  %v4469 = vpack.c.b16 %v4145, %v4141
  %v4470 = vpack.c.b16 %v4146, %v4142
  %v4471 = vpack.c.b16 %v4151, %v4147
  %v4472 = vpack.c.b16 %v4152, %v4148
  %v4473 = vpack.c.b16 %v4153, %v4149
  %v4474 = vpack.c.b16 %v4154, %v4150
  %v4475 = vpack.c.b16 %v4159, %v4155
  %v4476 = vpack.c.b16 %v4160, %v4156
  %v4477 = vpack.c.b16 %v4161, %v4157
  %v4478 = vpack.c.b16 %v4162, %v4158
  %v4479 = vpack.c.b16 %v4167, %v4163
  %v4480 = vpack.c.b16 %v4168, %v4164
  %v4481 = vpack.c.b16 %v4169, %v4165
  %v4482 = vpack.c.b16 %v4170, %v4166
  %v4483 = vpack.c.b16 %v4175, %v4171
  %v4484 = vpack.c.b16 %v4176, %v4172
  %v4485 = vpack.c.b16 %v4177, %v4173
  %v4486 = vpack.c.b16 %v4178, %v4174
  %v4487 = vpack.c.b16 %v4183, %v4179
  %v4488 = vpack.c.b16 %v4184, %v4180
  %v4489 = vpack.c.b16 %v4185, %v4181
  %v4490 = vpack.c.b16 %v4186, %v4182
  %v4491 = vpack.c.b16 %v4191, %v4187
  %v4492 = vpack.c.b16 %v4192, %v4188
  %v4493 = vpack.c.b16 %v4193, %v4189
  %v4494 = vpack.c.b16 %v4194, %v4190
  %v4495 = vpack.c.b16 %v4199, %v4195
  %v4496 = vpack.c.b16 %v4200, %v4196
  %v4497 = vpack.c.b16 %v4201, %v4197
  %v4498 = vpack.c.b16 %v4202, %v4198
  %v4499 = vpack.c.b16 %v4207, %v4203
  %v4500 = vpack.c.b16 %v4208, %v4204
  %v4501 = vpack.c.b16 %v4209, %v4205
  %v4502 = vpack.c.b16 %v4210, %v4206
  %v4503 = vpack.c.b16 %v4215, %v4211
  %v4504 = vpack.c.b16 %v4216, %v4212
  %v4505 = vpack.c.b16 %v4217, %v4213
  %v4506 = vpack.c.b16 %v4218, %v4214
  %v4507 = vpack.c.b16 %v4223, %v4219
  %v4508 = vpack.c.b16 %v4224, %v4220
  %v4509 = vpack.c.b16 %v4225, %v4221
  %v4510 = vpack.c.b16 %v4226, %v4222
  %v4511 = vpack.c.b16 %v4231, %v4227
  %v4512 = vpack.c.b16 %v4232, %v4228
  %v4513 = vpack.c.b16 %v4233, %v4229
  %v4514 = vpack.c.b16 %v4234, %v4230
  %v4515 = vpack.c.b16 %v4239, %v4235
  %v4516 = vpack.c.b16 %v4240, %v4236
  %v4517 = vpack.c.b16 %v4241, %v4237
  %v4518 = vpack.c.b16 %v4242, %v4238
  %v4519 = vpack.c.b16 %v4247, %v4243
  %v4520 = vpack.c.b16 %v4248, %v4244
  %v4521 = vpack.c.b16 %v4249, %v4245
  %v4522 = vpack.c.b16 %v4250, %v4246
  %v4523 = vpack.c.b16 %v4255, %v4251
  %v4524 = vpack.c.b16 %v4256, %v4252
  %v4525 = vpack.c.b16 %v4257, %v4253
  %v4526 = vpack.c.b16 %v4258, %v4254
  %v4527 = vpack.c.b16 %v4263, %v4259
  %v4528 = vpack.c.b16 %v4264, %v4260
  %v4529 = vpack.c.b16 %v4265, %v4261
  %v4530 = vpack.c.b16 %v4266, %v4262
  %v4531 = vpack.c.b16 %v4271, %v4267
  %v4532 = vpack.c.b16 %v4272, %v4268
  %v4533 = vpack.c.b16 %v4273, %v4269
  %v4534 = vpack.c.b16 %v4274, %v4270
  %v4535 = vpack.c.b16 %v4279, %v4275
  %v4536 = vpack.c.b16 %v4280, %v4276
  %v4537 = vpack.c.b16 %v4281, %v4277
  %v4538 = vpack.c.b16 %v4282, %v4278
  %v4539 = vpack.c.b16 %v4287, %v4283
  %v4540 = vpack.c.b16 %v4288, %v4284
  %v4541 = vpack.c.b16 %v4289, %v4285
  %v4542 = vpack.c.b16 %v4290, %v4286
  %v4543 = vpack.c.b16 %v4295, %v4291
  %v4544 = vpack.c.b16 %v4296, %v4292
  %v4545 = vpack.c.b16 %v4297, %v4293
  %v4546 = vpack.c.b16 %v4298, %v4294
  %v4547 = vpack.c.b16 %v4303, %v4299
  %v4548 = vpack.c.b16 %v4304, %v4300
  %v4549 = vpack.c.b16 %v4305, %v4301
  %v4550 = vpack.c.b16 %v4306, %v4302
  %v4551 = vpack.c.b16 %v4311, %v4307
  %v4552 = vpack.c.b16 %v4312, %v4308
  %v4553 = vpack.c.b16 %v4313, %v4309
  %v4554 = vpack.c.b16 %v4314, %v4310
  %v4555 = vpack.c.b16 %v4319, %v4315
  %v4556 = vpack.c.b16 %v4320, %v4316
  %v4557 = vpack.c.b16 %v4321, %v4317
  %v4558 = vpack.c.b16 %v4322, %v4318
  %v4559 = vpack.c.b16 %v4327, %v4323
  %v4560 = vpack.c.b16 %v4328, %v4324
  %v4561 = vpack.c.b16 %v4329, %v4325
  %v4562 = vpack.c.b16 %v4330, %v4326
  %v4563 = vpack.c.b16 %v4335, %v4331
  %v4564 = vpack.c.b16 %v4336, %v4332
  %v4565 = vpack.c.b16 %v4337, %v4333
  %v4566 = vpack.c.b16 %v4338, %v4334
  %v4567 = vpack.c.b16 %v4343, %v4339
  %v4568 = vpack.c.b16 %v4344, %v4340
  %v4569 = vpack.c.b16 %v4345, %v4341
  %v4570 = vpack.c.b16 %v4346, %v4342
  %4795 = vmatprep.subr.bf16.mxu0 %v4348
  %4796 = vmatpush1.bf16.msra.mxu0 %v4347
  %4797 = vmatprep.subr.bf16.mxu0 %v4352
  %4798 = vmatpush1.bf16.msra.mxu0 %v4351
  %4799 = vmatprep.subr.bf16.mxu0 %v4356
  %4800 = vmatpush1.bf16.msra.mxu0 %v4355
  %4801 = vmatprep.subr.bf16.mxu0 %v4360
  %4802 = vmatpush1.bf16.msra.mxu0 %v4359
  %4803 = vmatprep.subr.bf16.mxu0 %v4364
  %4804 = vmatpush1.bf16.msra.mxu0 %v4363
  %4805 = vmatprep.subr.bf16.mxu0 %v4368
  %4806 = vmatpush1.bf16.msra.mxu0 %v4367
  %4807 = vmatprep.subr.bf16.mxu0 %v4372
  %4808 = vmatpush1.bf16.msra.mxu0 %v4371
  %4809 = vmatprep.subr.bf16.mxu0 %v4376
  %4810 = vmatpush1.bf16.msra.mxu0 %v4375
  %4811 = vmatprep.subr.bf16.mxu0 %v4380
  %4812 = vmatpush1.bf16.msra.mxu0 %v4379
  %4813 = vmatprep.subr.bf16.mxu0 %v4384
  %4814 = vmatpush1.bf16.msra.mxu0 %v4383
  %4815 = vmatprep.subr.bf16.mxu0 %v4388
  %4816 = vmatpush1.bf16.msra.mxu0 %v4387
  %4817 = vmatprep.subr.bf16.mxu0 %v4392
  %4818 = vmatpush1.bf16.msra.mxu0 %v4391
  %4819 = vmatprep.subr.bf16.mxu0 %v4396
  %4820 = vmatpush1.bf16.msra.mxu0 %v4395
  %4821 = vmatprep.subr.bf16.mxu0 %v4400
  %4822 = vmatpush1.bf16.msra.mxu0 %v4399
  %4823 = vmatprep.subr.bf16.mxu0 %v4404
  %4824 = vmatpush1.bf16.msra.mxu0 %v4403
  %4825 = vmatprep.subr.bf16.mxu0 %v4408
  %4826 = vmatpush1.bf16.msra.mxu0 %v4407
  %4827 = vmatprep.mubr.bf16.mxu0 %v276
  %4828 = vmatmul.mubr.bf16.gmra.mrb[0].mxu0 %v275
  %v4829 = vpop.f32.mrb[0].mxu0
  %v4830 = vadd.f32 0.0, %v4829
  %v4831 = vpop.f32.mrb[0].mxu0
  %v4832 = vadd.f32 0.0, %v4831
  %v4833 = vpop.f32.mrb[0].mxu0
  %v4834 = vadd.f32 0.0, %v4833
  %v4835 = vpop.f32.mrb[0].mxu0
  %v4836 = vadd.f32 0.0, %v4835
  %4837 = vdwg.mxu0
  %4838 = vmatprep.subr.bf16.mxu0 %v4412
  %4839 = vmatpush1.bf16.msra.mxu0 %v4411
  %4840 = vmatprep.subr.bf16.mxu0 %v4416
  %4841 = vmatpush1.bf16.msra.mxu0 %v4415
  %4842 = vmatprep.subr.bf16.mxu0 %v4420
  %4843 = vmatpush1.bf16.msra.mxu0 %v4419
  %4844 = vmatprep.subr.bf16.mxu0 %v4424
  %4845 = vmatpush1.bf16.msra.mxu0 %v4423
  %4846 = vmatprep.subr.bf16.mxu0 %v4428
  %4847 = vmatpush1.bf16.msra.mxu0 %v4427
  %4848 = vmatprep.subr.bf16.mxu0 %v4432
  %4849 = vmatpush1.bf16.msra.mxu0 %v4431
  %4850 = vmatprep.subr.bf16.mxu0 %v4436
  %4851 = vmatpush1.bf16.msra.mxu0 %v4435
  %4852 = vmatprep.subr.bf16.mxu0 %v4440
  %4853 = vmatpush1.bf16.msra.mxu0 %v4439
  %4854 = vmatprep.subr.bf16.mxu0 %v4444
  %4855 = vmatpush1.bf16.msra.mxu0 %v4443
  %4856 = vmatprep.subr.bf16.mxu0 %v4448
  %4857 = vmatpush1.bf16.msra.mxu0 %v4447
  %4858 = vmatprep.subr.bf16.mxu0 %v4452
  %4859 = vmatpush1.bf16.msra.mxu0 %v4451
  %4860 = vmatprep.subr.bf16.mxu0 %v4456
  %4861 = vmatpush1.bf16.msra.mxu0 %v4455
  %4862 = vmatprep.subr.bf16.mxu0 %v4460
  %4863 = vmatpush1.bf16.msra.mxu0 %v4459
  %4864 = vmatprep.subr.bf16.mxu0 %v4464
  %4865 = vmatpush1.bf16.msra.mxu0 %v4463
  %4866 = vmatprep.subr.bf16.mxu0 %v4468
  %4867 = vmatpush1.bf16.msra.mxu0 %v4467
  %4868 = vmatprep.subr.bf16.mxu0 %v4472
  %4869 = vmatpush1.bf16.msra.mxu0 %v4471
  %4870 = vmatprep.mubr.bf16.mxu0 %v278
  %4871 = vmatmul.mubr.bf16.gmra.mrb[0].mxu0 %v277
  %v4872 = vpop.f32.mrb[0].mxu0
  %v4873 = vadd.f32 %v4830, %v4872
  %v4874 = vpop.f32.mrb[0].mxu0
  %v4875 = vadd.f32 %v4832, %v4874
  %v4876 = vpop.f32.mrb[0].mxu0
  %v4877 = vadd.f32 %v4834, %v4876
  %v4878 = vpop.f32.mrb[0].mxu0
  %v4879 = vadd.f32 %v4836, %v4878
  %4880 = vdwg.mxu0
  %4881 = vmatprep.subr.bf16.mxu0 %v4476
  %4882 = vmatpush1.bf16.msra.mxu0 %v4475
  %4883 = vmatprep.subr.bf16.mxu0 %v4480
  %4884 = vmatpush1.bf16.msra.mxu0 %v4479
  %4885 = vmatprep.subr.bf16.mxu0 %v4484
  %4886 = vmatpush1.bf16.msra.mxu0 %v4483
  %4887 = vmatprep.subr.bf16.mxu0 %v4488
  %4888 = vmatpush1.bf16.msra.mxu0 %v4487
  %4889 = vmatprep.subr.bf16.mxu0 %v4492
  %4890 = vmatpush1.bf16.msra.mxu0 %v4491
  %4891 = vmatprep.subr.bf16.mxu0 %v4496
  %4892 = vmatpush1.bf16.msra.mxu0 %v4495
  %4893 = vmatprep.subr.bf16.mxu0 %v4500
  %4894 = vmatpush1.bf16.msra.mxu0 %v4499
  %4895 = vmatprep.subr.bf16.mxu0 %v4504
  %4896 = vmatpush1.bf16.msra.mxu0 %v4503
  %4897 = vmatprep.subr.bf16.mxu0 %v4508
  %4898 = vmatpush1.bf16.msra.mxu0 %v4507
  %4899 = vmatprep.subr.bf16.mxu0 %v4512
  %4900 = vmatpush1.bf16.msra.mxu0 %v4511
  %4901 = vmatprep.subr.bf16.mxu0 %v4516
  %4902 = vmatpush1.bf16.msra.mxu0 %v4515
  %4903 = vmatprep.subr.bf16.mxu0 %v4520
  %4904 = vmatpush1.bf16.msra.mxu0 %v4519
  %4905 = vmatprep.subr.bf16.mxu0 %v4524
  %4906 = vmatpush1.bf16.msra.mxu0 %v4523
  %4907 = vmatprep.subr.bf16.mxu0 %v4528
  %4908 = vmatpush1.bf16.msra.mxu0 %v4527
  %4909 = vmatprep.subr.bf16.mxu0 %v4532
  %4910 = vmatpush1.bf16.msra.mxu0 %v4531
  %4911 = vmatprep.subr.bf16.mxu0 %v4536
  %4912 = vmatpush1.bf16.msra.mxu0 %v4535
  %4913 = vmatprep.mubr.bf16.mxu0 %v280
  %4914 = vmatmul.mubr.bf16.gmra.mrb[0].mxu0 %v279
  %v4915 = vpop.f32.mrb[0].mxu0
  %v4916 = vadd.f32 %v4873, %v4915
  %v4917 = vpop.f32.mrb[0].mxu0
  %v4918 = vadd.f32 %v4875, %v4917
  %v4919 = vpop.f32.mrb[0].mxu0
  %v4920 = vadd.f32 %v4877, %v4919
  %v4921 = vpop.f32.mrb[0].mxu0
  %v4922 = vadd.f32 %v4879, %v4921
  %4923 = vdwg.mxu0
  %4924 = vmatprep.subr.bf16.mxu0 %v4540
  %4925 = vmatpush1.bf16.msra.mxu0 %v4539
  %4926 = vmatprep.subr.bf16.mxu0 %v4544
  %4927 = vmatpush1.bf16.msra.mxu0 %v4543
  %4928 = vmatprep.subr.bf16.mxu0 %v4548
  %4929 = vmatpush1.bf16.msra.mxu0 %v4547
  %4930 = vmatprep.subr.bf16.mxu0 %v4552
  %4931 = vmatpush1.bf16.msra.mxu0 %v4551
  %4932 = vmatprep.subr.bf16.mxu0 %v4556
  %4933 = vmatpush1.bf16.msra.mxu0 %v4555
  %4934 = vmatprep.subr.bf16.mxu0 %v4560
  %4935 = vmatpush1.bf16.msra.mxu0 %v4559
  %4936 = vmatprep.subr.bf16.mxu0 %v4564
  %4937 = vmatpush1.bf16.msra.mxu0 %v4563
  %4938 = vmatprep.subr.bf16.mxu0 %v4568
  %4939 = vmatpush1.bf16.msra.mxu0 %v4567
  %4940 = vmatprep.subr.bf16.mxu0 0
  %4941 = vmatpush1.bf16.msra.mxu0 0
  %4942 = vmatprep.subr.bf16.mxu0 0
  %4943 = vmatpush1.bf16.msra.mxu0 0
  %4944 = vmatprep.subr.bf16.mxu0 0
  %4945 = vmatpush1.bf16.msra.mxu0 0
  %4946 = vmatprep.subr.bf16.mxu0 0
  %4947 = vmatpush1.bf16.msra.mxu0 0
  %4948 = vmatprep.subr.bf16.mxu0 0
  %4949 = vmatpush1.bf16.msra.mxu0 0
  %4950 = vmatprep.subr.bf16.mxu0 0
  %4951 = vmatpush1.bf16.msra.mxu0 0
  %4952 = vmatprep.subr.bf16.mxu0 0
  %4953 = vmatpush1.bf16.msra.mxu0 0
  %4954 = vmatprep.subr.bf16.mxu0 0
  %4955 = vmatpush1.bf16.msra.mxu0 0
  %4956 = vmatprep.mubr.bf16.mxu0 0
  %4957 = vmatmul.mubr.bf16.gmra.mrb[0].mxu0 %v281
  %v4958 = vpop.f32.mrb[0].mxu0
  %v4959 = vadd.f32 %v4916, %v4958
  %v4960 = vpop.f32.mrb[0].mxu0
  %v4961 = vadd.f32 %v4918, %v4960
  %v4962 = vpop.f32.mrb[0].mxu0
  %v4963 = vadd.f32 %v4920, %v4962
  %v4964 = vpop.f32.mrb[0].mxu0
  %v4965 = vadd.f32 %v4922, %v4964
  %4966 = vdwg.mxu0
  %4967 = vmatprep.subr.bf16.mxu0 %v4350
  %4968 = vmatpush1.bf16.msra.mxu0 %v4349
  %4969 = vmatprep.subr.bf16.mxu0 %v4354
  %4970 = vmatpush1.bf16.msra.mxu0 %v4353
  %4971 = vmatprep.subr.bf16.mxu0 %v4358
  %4972 = vmatpush1.bf16.msra.mxu0 %v4357
  %4973 = vmatprep.subr.bf16.mxu0 %v4362
  %4974 = vmatpush1.bf16.msra.mxu0 %v4361
  %4975 = vmatprep.subr.bf16.mxu0 %v4366
  %4976 = vmatpush1.bf16.msra.mxu0 %v4365
  %4977 = vmatprep.subr.bf16.mxu0 %v4370
  %4978 = vmatpush1.bf16.msra.mxu0 %v4369
  %4979 = vmatprep.subr.bf16.mxu0 %v4374
  %4980 = vmatpush1.bf16.msra.mxu0 %v4373
  %4981 = vmatprep.subr.bf16.mxu0 %v4378
  %4982 = vmatpush1.bf16.msra.mxu0 %v4377
  %4983 = vmatprep.subr.bf16.mxu0 %v4382
  %4984 = vmatpush1.bf16.msra.mxu0 %v4381
  %4985 = vmatprep.subr.bf16.mxu0 %v4386
  %4986 = vmatpush1.bf16.msra.mxu0 %v4385
  %4987 = vmatprep.subr.bf16.mxu0 %v4390
  %4988 = vmatpush1.bf16.msra.mxu0 %v4389
  %4989 = vmatprep.subr.bf16.mxu0 %v4394
  %4990 = vmatpush1.bf16.msra.mxu0 %v4393
  %4991 = vmatprep.subr.bf16.mxu0 %v4398
  %4992 = vmatpush1.bf16.msra.mxu0 %v4397
  %4993 = vmatprep.subr.bf16.mxu0 %v4402
  %4994 = vmatpush1.bf16.msra.mxu0 %v4401
  %4995 = vmatprep.subr.bf16.mxu0 %v4406
  %4996 = vmatpush1.bf16.msra.mxu0 %v4405
  %4997 = vmatprep.subr.bf16.mxu0 %v4410
  %4998 = vmatpush1.bf16.msra.mxu0 %v4409
  %4999 = vmatprep.mubr.bf16.mxu0 %v276
  %5000 = vmatmul.mubr.bf16.gmra.mrb[0].mxu0 %v275
  %v5001 = vpop.f32.mrb[0].mxu0
  %v5002 = vadd.f32 0.0, %v5001
  %v5003 = vpop.f32.mrb[0].mxu0
  %v5004 = vadd.f32 0.0, %v5003
  %v5005 = vpop.f32.mrb[0].mxu0
  %v5006 = vadd.f32 0.0, %v5005
  %v5007 = vpop.f32.mrb[0].mxu0
  %v5008 = vadd.f32 0.0, %v5007
  %5009 = vdwg.mxu0
  %5010 = vmatprep.subr.bf16.mxu0 %v4414
  %5011 = vmatpush1.bf16.msra.mxu0 %v4413
  %5012 = vmatprep.subr.bf16.mxu0 %v4418
  %5013 = vmatpush1.bf16.msra.mxu0 %v4417
  %5014 = vmatprep.subr.bf16.mxu0 %v4422
  %5015 = vmatpush1.bf16.msra.mxu0 %v4421
  %5016 = vmatprep.subr.bf16.mxu0 %v4426
  %5017 = vmatpush1.bf16.msra.mxu0 %v4425
  %5018 = vmatprep.subr.bf16.mxu0 %v4430
  %5019 = vmatpush1.bf16.msra.mxu0 %v4429
  %5020 = vmatprep.subr.bf16.mxu0 %v4434
  %5021 = vmatpush1.bf16.msra.mxu0 %v4433
  %5022 = vmatprep.subr.bf16.mxu0 %v4438
  %5023 = vmatpush1.bf16.msra.mxu0 %v4437
  %5024 = vmatprep.subr.bf16.mxu0 %v4442
  %5025 = vmatpush1.bf16.msra.mxu0 %v4441
  %5026 = vmatprep.subr.bf16.mxu0 %v4446
  %5027 = vmatpush1.bf16.msra.mxu0 %v4445
  %5028 = vmatprep.subr.bf16.mxu0 %v4450
  %5029 = vmatpush1.bf16.msra.mxu0 %v4449
  %5030 = vmatprep.subr.bf16.mxu0 %v4454
  %5031 = vmatpush1.bf16.msra.mxu0 %v4453
  %5032 = vmatprep.subr.bf16.mxu0 %v4458
  %5033 = vmatpush1.bf16.msra.mxu0 %v4457
  %5034 = vmatprep.subr.bf16.mxu0 %v4462
  %5035 = vmatpush1.bf16.msra.mxu0 %v4461
  %5036 = vmatprep.subr.bf16.mxu0 %v4466
  %5037 = vmatpush1.bf16.msra.mxu0 %v4465
  %5038 = vmatprep.subr.bf16.mxu0 %v4470
  %5039 = vmatpush1.bf16.msra.mxu0 %v4469
  %5040 = vmatprep.subr.bf16.mxu0 %v4474
  %5041 = vmatpush1.bf16.msra.mxu0 %v4473
  %5042 = vmatprep.mubr.bf16.mxu0 %v278
  %5043 = vmatmul.mubr.bf16.gmra.mrb[0].mxu0 %v277
  %v5044 = vpop.f32.mrb[0].mxu0
  %v5045 = vadd.f32 %v5002, %v5044
  %v5046 = vpop.f32.mrb[0].mxu0
  %v5047 = vadd.f32 %v5004, %v5046
  %v5048 = vpop.f32.mrb[0].mxu0
  %v5049 = vadd.f32 %v5006, %v5048
  %v5050 = vpop.f32.mrb[0].mxu0
  %v5051 = vadd.f32 %v5008, %v5050
  %5052 = vdwg.mxu0
  %5053 = vmatprep.subr.bf16.mxu0 %v4478
  %5054 = vmatpush1.bf16.msra.mxu0 %v4477
  %5055 = vmatprep.subr.bf16.mxu0 %v4482
  %5056 = vmatpush1.bf16.msra.mxu0 %v4481
  %5057 = vmatprep.subr.bf16.mxu0 %v4486
  %5058 = vmatpush1.bf16.msra.mxu0 %v4485
  %5059 = vmatprep.subr.bf16.mxu0 %v4490
  %5060 = vmatpush1.bf16.msra.mxu0 %v4489
  %5061 = vmatprep.subr.bf16.mxu0 %v4494
  %5062 = vmatpush1.bf16.msra.mxu0 %v4493
  %5063 = vmatprep.subr.bf16.mxu0 %v4498
  %5064 = vmatpush1.bf16.msra.mxu0 %v4497
  %5065 = vmatprep.subr.bf16.mxu0 %v4502
  %5066 = vmatpush1.bf16.msra.mxu0 %v4501
  %5067 = vmatprep.subr.bf16.mxu0 %v4506
  %5068 = vmatpush1.bf16.msra.mxu0 %v4505
  %5069 = vmatprep.subr.bf16.mxu0 %v4510
  %5070 = vmatpush1.bf16.msra.mxu0 %v4509
  %5071 = vmatprep.subr.bf16.mxu0 %v4514
  %5072 = vmatpush1.bf16.msra.mxu0 %v4513
  %5073 = vmatprep.subr.bf16.mxu0 %v4518
  %5074 = vmatpush1.bf16.msra.mxu0 %v4517
  %5075 = vmatprep.subr.bf16.mxu0 %v4522
  %5076 = vmatpush1.bf16.msra.mxu0 %v4521
  %5077 = vmatprep.subr.bf16.mxu0 %v4526
  %5078 = vmatpush1.bf16.msra.mxu0 %v4525
  %5079 = vmatprep.subr.bf16.mxu0 %v4530
  %5080 = vmatpush1.bf16.msra.mxu0 %v4529
  %5081 = vmatprep.subr.bf16.mxu0 %v4534
  %5082 = vmatpush1.bf16.msra.mxu0 %v4533
  %5083 = vmatprep.subr.bf16.mxu0 %v4538
  %5084 = vmatpush1.bf16.msra.mxu0 %v4537
  %5085 = vmatprep.mubr.bf16.mxu0 %v280
  %5086 = vmatmul.mubr.bf16.gmra.mrb[0].mxu0 %v279
  %v5087 = vpop.f32.mrb[0].mxu0
  %v5088 = vadd.f32 %v5045, %v5087
  %v5089 = vpop.f32.mrb[0].mxu0
  %v5090 = vadd.f32 %v5047, %v5089
  %v5091 = vpop.f32.mrb[0].mxu0
  %v5092 = vadd.f32 %v5049, %v5091
  %v5093 = vpop.f32.mrb[0].mxu0
  %v5094 = vadd.f32 %v5051, %v5093
  %5095 = vdwg.mxu0
  %5096 = vmatprep.subr.bf16.mxu0 %v4542
  %5097 = vmatpush1.bf16.msra.mxu0 %v4541
  %5098 = vmatprep.subr.bf16.mxu0 %v4546
  %5099 = vmatpush1.bf16.msra.mxu0 %v4545
  %5100 = vmatprep.subr.bf16.mxu0 %v4550
  %5101 = vmatpush1.bf16.msra.mxu0 %v4549
  %5102 = vmatprep.subr.bf16.mxu0 %v4554
  %5103 = vmatpush1.bf16.msra.mxu0 %v4553
  %5104 = vmatprep.subr.bf16.mxu0 %v4558
  %5105 = vmatpush1.bf16.msra.mxu0 %v4557
  %5106 = vmatprep.subr.bf16.mxu0 %v4562
  %5107 = vmatpush1.bf16.msra.mxu0 %v4561
  %5108 = vmatprep.subr.bf16.mxu0 %v4566
  %5109 = vmatpush1.bf16.msra.mxu0 %v4565
  %5110 = vmatprep.subr.bf16.mxu0 %v4570
  %5111 = vmatpush1.bf16.msra.mxu0 %v4569
  %5112 = vmatprep.subr.bf16.mxu0 0
  %5113 = vmatpush1.bf16.msra.mxu0 0
  %5114 = vmatprep.subr.bf16.mxu0 0
  %5115 = vmatpush1.bf16.msra.mxu0 0
  %5116 = vmatprep.subr.bf16.mxu0 0
  %5117 = vmatpush1.bf16.msra.mxu0 0
  %5118 = vmatprep.subr.bf16.mxu0 0
  %5119 = vmatpush1.bf16.msra.mxu0 0
  %5120 = vmatprep.subr.bf16.mxu0 0
  %5121 = vmatpush1.bf16.msra.mxu0 0
  %5122 = vmatprep.subr.bf16.mxu0 0
  %5123 = vmatpush1.bf16.msra.mxu0 0
  %5124 = vmatprep.subr.bf16.mxu0 0
  %5125 = vmatpush1.bf16.msra.mxu0 0
  %5126 = vmatprep.subr.bf16.mxu0 0
  %5127 = vmatpush1.bf16.msra.mxu0 0
  %5128 = vmatprep.mubr.bf16.mxu0 0
  %5129 = vmatmul.mubr.bf16.gmra.mrb[0].mxu0 %v281
  %v5130 = vpop.f32.mrb[0].mxu0
  %v5131 = vadd.f32 %v5088, %v5130
  %v5132 = vpop.f32.mrb[0].mxu0
  %v5133 = vadd.f32 %v5090, %v5132
  %v5134 = vpop.f32.mrb[0].mxu0
  %v5135 = vadd.f32 %v5092, %v5134
  %v5136 = vpop.f32.mrb[0].mxu0
  %v5137 = vadd.f32 %v5094, %v5136
  %5138 = vdwg.mxu0
  %v5139 = vmax.f32 %v3442, %v4959
  %v5140 = vmax.f32 %v3443, %v4961
  %v5141 = vmax.f32 %v3444, %v5131
  %v5142 = vmax.f32 %v3445, %v5133
  %v5143 = vmax.f32 %v3446, %v4963
  %v5144 = vmax.f32 %v3447, %v4965
  %v5145 = vmax.f32 %v3448, %v5135
  %v5146 = vmax.f32 %v3449, %v5137
  %s5147 = scalar_lea.vmem %s1, 5376
  %v5148 = vld [vmem:[%s5147] sm:$0xff]
  %v5149 = vld [vmem:[%s5147 + $0x8] sm:$0xff]
  %v5150 = vld [vmem:[%s5147 + $0x10] sm:$0xff]
  %v5151 = vld [vmem:[%s5147 + $0x18] sm:$0xff]
  %v5152 = vld [vmem:[%s5147 + $0x20] sm:$0xff]
  %v5153 = vld [vmem:[%s5147 + $0x28] sm:$0xff]
  %v5154 = vld [vmem:[%s5147 + $0x30] sm:$0xff]
  %v5155 = vld [vmem:[%s5147 + $0x38] sm:$0xff]
  %v5156 = vld [vmem:[%s5147 + $0x40] sm:$0xff]
  %v5157 = vld [vmem:[%s5147 + $0x48] sm:$0xff]
  %v5158 = vld [vmem:[%s5147 + $0x50] sm:$0xff]
  %v5159 = vld [vmem:[%s5147 + $0x58] sm:$0xff]
  %v5160 = vld [vmem:[%s5147 + $0x60] sm:$0xff]
  %v5161 = vld [vmem:[%s5147 + $0x68] sm:$0xff]
  %v5162 = vld [vmem:[%s5147 + $0x70] sm:$0xff]
  %v5163 = vld [vmem:[%s5147 + $0x78] sm:$0xff]
  %v5164 = vld [vmem:[%s5147 + $0x80] sm:$0xff]
  %v5165 = vld [vmem:[%s5147 + $0x88] sm:$0xff]
  %v5166 = vld [vmem:[%s5147 + $0x90] sm:$0xff]
  %v5167 = vld [vmem:[%s5147 + $0x98] sm:$0xff]
  %v5168 = vld [vmem:[%s5147 + $0xa0] sm:$0xff]
  %v5169 = vld [vmem:[%s5147 + $0xa8] sm:$0xff]
  %v5170 = vld [vmem:[%s5147 + $0xb0] sm:$0xff]
  %v5171 = vld [vmem:[%s5147 + $0xb8] sm:$0xff]
  %v5172 = vld [vmem:[%s5147 + $0xc0] sm:$0xff]
  %v5173 = vld [vmem:[%s5147 + $0xc8] sm:$0xff]
  %v5174 = vld [vmem:[%s5147 + $0xd0] sm:$0xff]
  %v5175 = vld [vmem:[%s5147 + $0xd8] sm:$0xff]
  %v5176 = vld [vmem:[%s5147 + $0xe0] sm:$0xff]
  %v5177 = vld [vmem:[%s5147 + $0xe8] sm:$0xff]
  %v5178 = vld [vmem:[%s5147 + $0xf0] sm:$0xff]
  %v5179 = vld [vmem:[%s5147 + $0xf8] sm:$0xff]
  %v5180 = vld [vmem:[%s5147 + $0x100] sm:$0xff]
  %v5181 = vld [vmem:[%s5147 + $0x108] sm:$0xff]
  %v5182 = vld [vmem:[%s5147 + $0x110] sm:$0xff]
  %v5183 = vld [vmem:[%s5147 + $0x118] sm:$0xff]
  %v5184 = vld [vmem:[%s5147 + $0x120] sm:$0xff]
  %v5185 = vld [vmem:[%s5147 + $0x128] sm:$0xff]
  %v5186 = vld [vmem:[%s5147 + $0x130] sm:$0xff]
  %v5187 = vld [vmem:[%s5147 + $0x138] sm:$0xff]
  %v5188 = vld [vmem:[%s5147 + $0x140] sm:$0xff]
  %v5189 = vld [vmem:[%s5147 + $0x148] sm:$0xff]
  %v5190 = vld [vmem:[%s5147 + $0x150] sm:$0xff]
  %v5191 = vld [vmem:[%s5147 + $0x158] sm:$0xff]
  %v5192 = vld [vmem:[%s5147 + $0x160] sm:$0xff]
  %v5193 = vld [vmem:[%s5147 + $0x168] sm:$0xff]
  %v5194 = vld [vmem:[%s5147 + $0x170] sm:$0xff]
  %v5195 = vld [vmem:[%s5147 + $0x178] sm:$0xff]
  %v5196 = vld [vmem:[%s5147 + $0x180] sm:$0xff]
  %v5197 = vld [vmem:[%s5147 + $0x188] sm:$0xff]
  %v5198 = vld [vmem:[%s5147 + $0x190] sm:$0xff]
  %v5199 = vld [vmem:[%s5147 + $0x198] sm:$0xff]
  %v5200 = vld [vmem:[%s5147 + $0x1a0] sm:$0xff]
  %v5201 = vld [vmem:[%s5147 + $0x1a8] sm:$0xff]
  %v5202 = vld [vmem:[%s5147 + $0x1b0] sm:$0xff]
  %v5203 = vld [vmem:[%s5147 + $0x1b8] sm:$0xff]
  %v5204 = vld [vmem:[%s5147 + $0x1c0] sm:$0xff]
  %v5205 = vld [vmem:[%s5147 + $0x1c8] sm:$0xff]
  %v5206 = vld [vmem:[%s5147 + $0x1d0] sm:$0xff]
  %v5207 = vld [vmem:[%s5147 + $0x1d8] sm:$0xff]
  %v5208 = vld [vmem:[%s5147 + $0x1e0] sm:$0xff]
  %v5209 = vld [vmem:[%s5147 + $0x1e8] sm:$0xff]
  %v5210 = vld [vmem:[%s5147 + $0x1f0] sm:$0xff]
  %v5211 = vld [vmem:[%s5147 + $0x1f8] sm:$0xff]
  %v5212 = vld [vmem:[%s5147 + $0x200] sm:$0xff]
  %v5213 = vld [vmem:[%s5147 + $0x208] sm:$0xff]
  %v5214 = vld [vmem:[%s5147 + $0x210] sm:$0xff]
  %v5215 = vld [vmem:[%s5147 + $0x218] sm:$0xff]
  %v5216 = vld [vmem:[%s5147 + $0x220] sm:$0xff]
  %v5217 = vld [vmem:[%s5147 + $0x228] sm:$0xff]
  %v5218 = vld [vmem:[%s5147 + $0x230] sm:$0xff]
  %v5219 = vld [vmem:[%s5147 + $0x238] sm:$0xff]
  %v5220 = vld [vmem:[%s5147 + $0x240] sm:$0xff]
  %v5221 = vld [vmem:[%s5147 + $0x248] sm:$0xff]
  %v5222 = vld [vmem:[%s5147 + $0x250] sm:$0xff]
  %v5223 = vld [vmem:[%s5147 + $0x258] sm:$0xff]
  %v5224 = vld [vmem:[%s5147 + $0x260] sm:$0xff]
  %v5225 = vld [vmem:[%s5147 + $0x268] sm:$0xff]
  %v5226 = vld [vmem:[%s5147 + $0x270] sm:$0xff]
  %v5227 = vld [vmem:[%s5147 + $0x278] sm:$0xff]
  %v5228 = vld [vmem:[%s5147 + $0x280] sm:$0xff]
  %v5229 = vld [vmem:[%s5147 + $0x288] sm:$0xff]
  %v5230 = vld [vmem:[%s5147 + $0x290] sm:$0xff]
  %v5231 = vld [vmem:[%s5147 + $0x298] sm:$0xff]
  %v5232 = vld [vmem:[%s5147 + $0x2a0] sm:$0xff]
  %v5233 = vld [vmem:[%s5147 + $0x2a8] sm:$0xff]
  %v5234 = vld [vmem:[%s5147 + $0x2b0] sm:$0xff]
  %v5235 = vld [vmem:[%s5147 + $0x2b8] sm:$0xff]
  %v5236 = vld [vmem:[%s5147 + $0x2c0] sm:$0xff]
  %v5237 = vld [vmem:[%s5147 + $0x2c8] sm:$0xff]
  %v5238 = vld [vmem:[%s5147 + $0x2d0] sm:$0xff]
  %v5239 = vld [vmem:[%s5147 + $0x2d8] sm:$0xff]
  %v5240 = vld [vmem:[%s5147 + $0x2e0] sm:$0xff]
  %v5241 = vld [vmem:[%s5147 + $0x2e8] sm:$0xff]
  %v5242 = vld [vmem:[%s5147 + $0x2f0] sm:$0xff]
  %v5243 = vld [vmem:[%s5147 + $0x2f8] sm:$0xff]
  %v5244 = vld [vmem:[%s5147 + $0x300] sm:$0xff]
  %v5245 = vld [vmem:[%s5147 + $0x308] sm:$0xff]
  %v5246 = vld [vmem:[%s5147 + $0x310] sm:$0xff]
  %v5247 = vld [vmem:[%s5147 + $0x318] sm:$0xff]
  %v5248 = vld [vmem:[%s5147 + $0x320] sm:$0xff]
  %v5249 = vld [vmem:[%s5147 + $0x328] sm:$0xff]
  %v5250 = vld [vmem:[%s5147 + $0x330] sm:$0xff]
  %v5251 = vld [vmem:[%s5147 + $0x338] sm:$0xff]
  %v5252 = vld [vmem:[%s5147 + $0x340] sm:$0xff]
  %v5253 = vld [vmem:[%s5147 + $0x348] sm:$0xff]
  %v5254 = vld [vmem:[%s5147 + $0x350] sm:$0xff]
  %v5255 = vld [vmem:[%s5147 + $0x358] sm:$0xff]
  %v5256 = vld [vmem:[%s5147 + $0x360] sm:$0xff]
  %v5257 = vld [vmem:[%s5147 + $0x368] sm:$0xff]
  %v5258 = vld [vmem:[%s5147 + $0x370] sm:$0xff]
  %v5259 = vld [vmem:[%s5147 + $0x378] sm:$0xff]
  %v5260 = vld [vmem:[%s5147 + $0x380] sm:$0xff]
  %v5261 = vld [vmem:[%s5147 + $0x388] sm:$0xff]
  %v5262 = vld [vmem:[%s5147 + $0x390] sm:$0xff]
  %v5263 = vld [vmem:[%s5147 + $0x398] sm:$0xff]
  %v5264 = vld [vmem:[%s5147 + $0x3a0] sm:$0xff]
  %v5265 = vld [vmem:[%s5147 + $0x3a8] sm:$0xff]
  %v5266 = vld [vmem:[%s5147 + $0x3b0] sm:$0xff]
  %v5267 = vld [vmem:[%s5147 + $0x3b8] sm:$0xff]
  %v5268 = vld [vmem:[%s5147 + $0x3c0] sm:$0xff]
  %v5269 = vld [vmem:[%s5147 + $0x3c8] sm:$0xff]
  %v5270 = vld [vmem:[%s5147 + $0x3d0] sm:$0xff]
  %v5271 = vld [vmem:[%s5147 + $0x3d8] sm:$0xff]
  %v5272 = vld [vmem:[%s5147 + $0x3e0] sm:$0xff]
  %v5273 = vld [vmem:[%s5147 + $0x3e8] sm:$0xff]
  %v5274 = vld [vmem:[%s5147 + $0x3f0] sm:$0xff]
  %v5275 = vld [vmem:[%s5147 + $0x3f8] sm:$0xff]
  %v5276 = vld [vmem:[%s5147 + $0x400] sm:$0xff]
  %v5277 = vld [vmem:[%s5147 + $0x408] sm:$0xff]
  %v5278 = vld [vmem:[%s5147 + $0x410] sm:$0xff]
  %v5279 = vld [vmem:[%s5147 + $0x418] sm:$0xff]
  %v5280 = vld [vmem:[%s5147 + $0x420] sm:$0xff]
  %v5281 = vld [vmem:[%s5147 + $0x428] sm:$0xff]
  %v5282 = vld [vmem:[%s5147 + $0x430] sm:$0xff]
  %v5283 = vld [vmem:[%s5147 + $0x438] sm:$0xff]
  %v5284 = vld [vmem:[%s5147 + $0x440] sm:$0xff]
  %v5285 = vld [vmem:[%s5147 + $0x448] sm:$0xff]
  %v5286 = vld [vmem:[%s5147 + $0x450] sm:$0xff]
  %v5287 = vld [vmem:[%s5147 + $0x458] sm:$0xff]
  %v5288 = vld [vmem:[%s5147 + $0x460] sm:$0xff]
  %v5289 = vld [vmem:[%s5147 + $0x468] sm:$0xff]
  %v5290 = vld [vmem:[%s5147 + $0x470] sm:$0xff]
  %v5291 = vld [vmem:[%s5147 + $0x478] sm:$0xff]
  %v5292 = vld [vmem:[%s5147 + $0x480] sm:$0xff]
  %v5293 = vld [vmem:[%s5147 + $0x488] sm:$0xff]
  %v5294 = vld [vmem:[%s5147 + $0x490] sm:$0xff]
  %v5295 = vld [vmem:[%s5147 + $0x498] sm:$0xff]
  %v5296 = vld [vmem:[%s5147 + $0x4a0] sm:$0xff]
  %v5297 = vld [vmem:[%s5147 + $0x4a8] sm:$0xff]
  %v5298 = vld [vmem:[%s5147 + $0x4b0] sm:$0xff]
  %v5299 = vld [vmem:[%s5147 + $0x4b8] sm:$0xff]
  %v5300 = vld [vmem:[%s5147 + $0x4c0] sm:$0xff]
  %v5301 = vld [vmem:[%s5147 + $0x4c8] sm:$0xff]
  %v5302 = vld [vmem:[%s5147 + $0x4d0] sm:$0xff]
  %v5303 = vld [vmem:[%s5147 + $0x4d8] sm:$0xff]
  %v5304 = vld [vmem:[%s5147 + $0x4e0] sm:$0xff]
  %v5305 = vld [vmem:[%s5147 + $0x4e8] sm:$0xff]
  %v5306 = vld [vmem:[%s5147 + $0x4f0] sm:$0xff]
  %v5307 = vld [vmem:[%s5147 + $0x4f8] sm:$0xff]
  %v5308 = vld [vmem:[%s5147 + $0x500] sm:$0xff]
  %v5309 = vld [vmem:[%s5147 + $0x508] sm:$0xff]
  %v5310 = vld [vmem:[%s5147 + $0x510] sm:$0xff]
  %v5311 = vld [vmem:[%s5147 + $0x518] sm:$0xff]
  %v5312 = vld [vmem:[%s5147 + $0x520] sm:$0xff]
  %v5313 = vld [vmem:[%s5147 + $0x528] sm:$0xff]
  %v5314 = vld [vmem:[%s5147 + $0x530] sm:$0xff]
  %v5315 = vld [vmem:[%s5147 + $0x538] sm:$0xff]
  %v5316 = vld [vmem:[%s5147 + $0x540] sm:$0xff]
  %v5317 = vld [vmem:[%s5147 + $0x548] sm:$0xff]
  %v5318 = vld [vmem:[%s5147 + $0x550] sm:$0xff]
  %v5319 = vld [vmem:[%s5147 + $0x558] sm:$0xff]
  %v5320 = vld [vmem:[%s5147 + $0x560] sm:$0xff]
  %v5321 = vld [vmem:[%s5147 + $0x568] sm:$0xff]
  %v5322 = vld [vmem:[%s5147 + $0x570] sm:$0xff]
  %v5323 = vld [vmem:[%s5147 + $0x578] sm:$0xff]
  %v5324 = vld [vmem:[%s5147 + $0x580] sm:$0xff]
  %v5325 = vld [vmem:[%s5147 + $0x588] sm:$0xff]
  %v5326 = vld [vmem:[%s5147 + $0x590] sm:$0xff]
  %v5327 = vld [vmem:[%s5147 + $0x598] sm:$0xff]
  %v5328 = vld [vmem:[%s5147 + $0x5a0] sm:$0xff]
  %v5329 = vld [vmem:[%s5147 + $0x5a8] sm:$0xff]
  %v5330 = vld [vmem:[%s5147 + $0x5b0] sm:$0xff]
  %v5331 = vld [vmem:[%s5147 + $0x5b8] sm:$0xff]
  %v5332 = vld [vmem:[%s5147 + $0x5c0] sm:$0xff]
  %v5333 = vld [vmem:[%s5147 + $0x5c8] sm:$0xff]
  %v5334 = vld [vmem:[%s5147 + $0x5d0] sm:$0xff]
  %v5335 = vld [vmem:[%s5147 + $0x5d8] sm:$0xff]
  %v5336 = vld [vmem:[%s5147 + $0x5e0] sm:$0xff]
  %v5337 = vld [vmem:[%s5147 + $0x5e8] sm:$0xff]
  %v5338 = vld [vmem:[%s5147 + $0x5f0] sm:$0xff]
  %v5339 = vld [vmem:[%s5147 + $0x5f8] sm:$0xff]
  %v5340 = vld [vmem:[%s5147 + $0x600] sm:$0xff]
  %v5341 = vld [vmem:[%s5147 + $0x608] sm:$0xff]
  %v5342 = vld [vmem:[%s5147 + $0x610] sm:$0xff]
  %v5343 = vld [vmem:[%s5147 + $0x618] sm:$0xff]
  %v5344 = vld [vmem:[%s5147 + $0x620] sm:$0xff]
  %v5345 = vld [vmem:[%s5147 + $0x628] sm:$0xff]
  %v5346 = vld [vmem:[%s5147 + $0x630] sm:$0xff]
  %v5347 = vld [vmem:[%s5147 + $0x638] sm:$0xff]
  %v5348 = vld [vmem:[%s5147 + $0x640] sm:$0xff]
  %v5349 = vld [vmem:[%s5147 + $0x648] sm:$0xff]
  %v5350 = vld [vmem:[%s5147 + $0x650] sm:$0xff]
  %v5351 = vld [vmem:[%s5147 + $0x658] sm:$0xff]
  %v5352 = vld [vmem:[%s5147 + $0x660] sm:$0xff]
  %v5353 = vld [vmem:[%s5147 + $0x668] sm:$0xff]
  %v5354 = vld [vmem:[%s5147 + $0x670] sm:$0xff]
  %v5355 = vld [vmem:[%s5147 + $0x678] sm:$0xff]
  %v5356 = vld [vmem:[%s5147 + $0x680] sm:$0xff]
  %v5357 = vld [vmem:[%s5147 + $0x688] sm:$0xff]
  %v5358 = vld [vmem:[%s5147 + $0x690] sm:$0xff]
  %v5359 = vld [vmem:[%s5147 + $0x698] sm:$0xff]
  %v5360 = vld [vmem:[%s5147 + $0x6a0] sm:$0xff]
  %v5361 = vld [vmem:[%s5147 + $0x6a8] sm:$0xff]
  %v5362 = vld [vmem:[%s5147 + $0x6b0] sm:$0xff]
  %v5363 = vld [vmem:[%s5147 + $0x6b8] sm:$0xff]
  %v5364 = vld [vmem:[%s5147 + $0x6c0] sm:$0xff]
  %v5365 = vld [vmem:[%s5147 + $0x6c8] sm:$0xff]
  %v5366 = vld [vmem:[%s5147 + $0x6d0] sm:$0xff]
  %v5367 = vld [vmem:[%s5147 + $0x6d8] sm:$0xff]
  %v5368 = vld [vmem:[%s5147 + $0x6e0] sm:$0xff]
  %v5369 = vld [vmem:[%s5147 + $0x6e8] sm:$0xff]
  %v5370 = vld [vmem:[%s5147 + $0x6f0] sm:$0xff]
  %v5371 = vld [vmem:[%s5147 + $0x6f8] sm:$0xff]
  %v5596 = vunpack.c.l.b16 %v5148
  %v5597 = vunpack.c.h.b16 %v5148
  %v5598 = vunpack.c.l.b16 %v5149
  %v5599 = vunpack.c.h.b16 %v5149
  %v5600 = vunpack.c.l.b16 %v5150
  %v5601 = vunpack.c.h.b16 %v5150
  %v5602 = vunpack.c.l.b16 %v5151
  %v5603 = vunpack.c.h.b16 %v5151
  %v5604 = vunpack.c.l.b16 %v5152
  %v5605 = vunpack.c.h.b16 %v5152
  %v5606 = vunpack.c.l.b16 %v5153
  %v5607 = vunpack.c.h.b16 %v5153
  %v5608 = vunpack.c.l.b16 %v5154
  %v5609 = vunpack.c.h.b16 %v5154
  %v5610 = vunpack.c.l.b16 %v5155
  %v5611 = vunpack.c.h.b16 %v5155
  %v5612 = vunpack.c.l.b16 %v5156
  %v5613 = vunpack.c.h.b16 %v5156
  %v5614 = vunpack.c.l.b16 %v5157
  %v5615 = vunpack.c.h.b16 %v5157
  %v5616 = vunpack.c.l.b16 %v5158
  %v5617 = vunpack.c.h.b16 %v5158
  %v5618 = vunpack.c.l.b16 %v5159
  %v5619 = vunpack.c.h.b16 %v5159
  %v5620 = vunpack.c.l.b16 %v5160
  %v5621 = vunpack.c.h.b16 %v5160
  %v5622 = vunpack.c.l.b16 %v5161
  %v5623 = vunpack.c.h.b16 %v5161
  %v5624 = vunpack.c.l.b16 %v5162
  %v5625 = vunpack.c.h.b16 %v5162
  %v5626 = vunpack.c.l.b16 %v5163
  %v5627 = vunpack.c.h.b16 %v5163
  %v5628 = vunpack.c.l.b16 %v5164
  %v5629 = vunpack.c.h.b16 %v5164
  %v5630 = vunpack.c.l.b16 %v5165
  %v5631 = vunpack.c.h.b16 %v5165
  %v5632 = vunpack.c.l.b16 %v5166
  %v5633 = vunpack.c.h.b16 %v5166
  %v5634 = vunpack.c.l.b16 %v5167
  %v5635 = vunpack.c.h.b16 %v5167
  %v5636 = vunpack.c.l.b16 %v5168
  %v5637 = vunpack.c.h.b16 %v5168
  %v5638 = vunpack.c.l.b16 %v5169
  %v5639 = vunpack.c.h.b16 %v5169
  %v5640 = vunpack.c.l.b16 %v5170
  %v5641 = vunpack.c.h.b16 %v5170
  %v5642 = vunpack.c.l.b16 %v5171
  %v5643 = vunpack.c.h.b16 %v5171
  %v5644 = vunpack.c.l.b16 %v5172
  %v5645 = vunpack.c.h.b16 %v5172
  %v5646 = vunpack.c.l.b16 %v5173
  %v5647 = vunpack.c.h.b16 %v5173
  %v5648 = vunpack.c.l.b16 %v5174
  %v5649 = vunpack.c.h.b16 %v5174
  %v5650 = vunpack.c.l.b16 %v5175
  %v5651 = vunpack.c.h.b16 %v5175
  %v5652 = vunpack.c.l.b16 %v5176
  %v5653 = vunpack.c.h.b16 %v5176
  %v5654 = vunpack.c.l.b16 %v5177
  %v5655 = vunpack.c.h.b16 %v5177
  %v5656 = vunpack.c.l.b16 %v5178
  %v5657 = vunpack.c.h.b16 %v5178
  %v5658 = vunpack.c.l.b16 %v5179
  %v5659 = vunpack.c.h.b16 %v5179
  %v5660 = vunpack.c.l.b16 %v5180
  %v5661 = vunpack.c.h.b16 %v5180
  %v5662 = vunpack.c.l.b16 %v5181
  %v5663 = vunpack.c.h.b16 %v5181
  %v5664 = vunpack.c.l.b16 %v5182
  %v5665 = vunpack.c.h.b16 %v5182
  %v5666 = vunpack.c.l.b16 %v5183
  %v5667 = vunpack.c.h.b16 %v5183
  %v5668 = vunpack.c.l.b16 %v5184
  %v5669 = vunpack.c.h.b16 %v5184
  %v5670 = vunpack.c.l.b16 %v5185
  %v5671 = vunpack.c.h.b16 %v5185
  %v5672 = vunpack.c.l.b16 %v5186
  %v5673 = vunpack.c.h.b16 %v5186
  %v5674 = vunpack.c.l.b16 %v5187
  %v5675 = vunpack.c.h.b16 %v5187
  %v5676 = vunpack.c.l.b16 %v5188
  %v5677 = vunpack.c.h.b16 %v5188
  %v5678 = vunpack.c.l.b16 %v5189
  %v5679 = vunpack.c.h.b16 %v5189
  %v5680 = vunpack.c.l.b16 %v5190
  %v5681 = vunpack.c.h.b16 %v5190
  %v5682 = vunpack.c.l.b16 %v5191
  %v5683 = vunpack.c.h.b16 %v5191
  %v5684 = vunpack.c.l.b16 %v5192
  %v5685 = vunpack.c.h.b16 %v5192
  %v5686 = vunpack.c.l.b16 %v5193
  %v5687 = vunpack.c.h.b16 %v5193
  %v5688 = vunpack.c.l.b16 %v5194
  %v5689 = vunpack.c.h.b16 %v5194
  %v5690 = vunpack.c.l.b16 %v5195
  %v5691 = vunpack.c.h.b16 %v5195
  %v5692 = vunpack.c.l.b16 %v5196
  %v5693 = vunpack.c.h.b16 %v5196
  %v5694 = vunpack.c.l.b16 %v5197
  %v5695 = vunpack.c.h.b16 %v5197
  %v5696 = vunpack.c.l.b16 %v5198
  %v5697 = vunpack.c.h.b16 %v5198
  %v5698 = vunpack.c.l.b16 %v5199
  %v5699 = vunpack.c.h.b16 %v5199
  %v5700 = vunpack.c.l.b16 %v5200
  %v5701 = vunpack.c.h.b16 %v5200
  %v5702 = vunpack.c.l.b16 %v5201
  %v5703 = vunpack.c.h.b16 %v5201
  %v5704 = vunpack.c.l.b16 %v5202
  %v5705 = vunpack.c.h.b16 %v5202
  %v5706 = vunpack.c.l.b16 %v5203
  %v5707 = vunpack.c.h.b16 %v5203
  %v5708 = vunpack.c.l.b16 %v5204
  %v5709 = vunpack.c.h.b16 %v5204
  %v5710 = vunpack.c.l.b16 %v5205
  %v5711 = vunpack.c.h.b16 %v5205
  %v5712 = vunpack.c.l.b16 %v5206
  %v5713 = vunpack.c.h.b16 %v5206
  %v5714 = vunpack.c.l.b16 %v5207
  %v5715 = vunpack.c.h.b16 %v5207
  %v5716 = vunpack.c.l.b16 %v5208
  %v5717 = vunpack.c.h.b16 %v5208
  %v5718 = vunpack.c.l.b16 %v5209
  %v5719 = vunpack.c.h.b16 %v5209
  %v5720 = vunpack.c.l.b16 %v5210
  %v5721 = vunpack.c.h.b16 %v5210
  %v5722 = vunpack.c.l.b16 %v5211
  %v5723 = vunpack.c.h.b16 %v5211
  %v5724 = vunpack.c.l.b16 %v5212
  %v5725 = vunpack.c.h.b16 %v5212
  %v5726 = vunpack.c.l.b16 %v5213
  %v5727 = vunpack.c.h.b16 %v5213
  %v5728 = vunpack.c.l.b16 %v5214
  %v5729 = vunpack.c.h.b16 %v5214
  %v5730 = vunpack.c.l.b16 %v5215
  %v5731 = vunpack.c.h.b16 %v5215
  %v5732 = vunpack.c.l.b16 %v5216
  %v5733 = vunpack.c.h.b16 %v5216
  %v5734 = vunpack.c.l.b16 %v5217
  %v5735 = vunpack.c.h.b16 %v5217
  %v5736 = vunpack.c.l.b16 %v5218
  %v5737 = vunpack.c.h.b16 %v5218
  %v5738 = vunpack.c.l.b16 %v5219
  %v5739 = vunpack.c.h.b16 %v5219
  %v5740 = vunpack.c.l.b16 %v5220
  %v5741 = vunpack.c.h.b16 %v5220
  %v5742 = vunpack.c.l.b16 %v5221
  %v5743 = vunpack.c.h.b16 %v5221
  %v5744 = vunpack.c.l.b16 %v5222
  %v5745 = vunpack.c.h.b16 %v5222
  %v5746 = vunpack.c.l.b16 %v5223
  %v5747 = vunpack.c.h.b16 %v5223
  %v5748 = vunpack.c.l.b16 %v5224
  %v5749 = vunpack.c.h.b16 %v5224
  %v5750 = vunpack.c.l.b16 %v5225
  %v5751 = vunpack.c.h.b16 %v5225
  %v5752 = vunpack.c.l.b16 %v5226
  %v5753 = vunpack.c.h.b16 %v5226
  %v5754 = vunpack.c.l.b16 %v5227
  %v5755 = vunpack.c.h.b16 %v5227
  %v5756 = vunpack.c.l.b16 %v5228
  %v5757 = vunpack.c.h.b16 %v5228
  %v5758 = vunpack.c.l.b16 %v5229
  %v5759 = vunpack.c.h.b16 %v5229
  %v5760 = vunpack.c.l.b16 %v5230
  %v5761 = vunpack.c.h.b16 %v5230
  %v5762 = vunpack.c.l.b16 %v5231
  %v5763 = vunpack.c.h.b16 %v5231
  %v5764 = vunpack.c.l.b16 %v5232
  %v5765 = vunpack.c.h.b16 %v5232
  %v5766 = vunpack.c.l.b16 %v5233
  %v5767 = vunpack.c.h.b16 %v5233
  %v5768 = vunpack.c.l.b16 %v5234
  %v5769 = vunpack.c.h.b16 %v5234
  %v5770 = vunpack.c.l.b16 %v5235
  %v5771 = vunpack.c.h.b16 %v5235
  %v5772 = vunpack.c.l.b16 %v5236
  %v5773 = vunpack.c.h.b16 %v5236
  %v5774 = vunpack.c.l.b16 %v5237
  %v5775 = vunpack.c.h.b16 %v5237
  %v5776 = vunpack.c.l.b16 %v5238
  %v5777 = vunpack.c.h.b16 %v5238
  %v5778 = vunpack.c.l.b16 %v5239
  %v5779 = vunpack.c.h.b16 %v5239
  %v5780 = vunpack.c.l.b16 %v5240
  %v5781 = vunpack.c.h.b16 %v5240
  %v5782 = vunpack.c.l.b16 %v5241
  %v5783 = vunpack.c.h.b16 %v5241
  %v5784 = vunpack.c.l.b16 %v5242
  %v5785 = vunpack.c.h.b16 %v5242
  %v5786 = vunpack.c.l.b16 %v5243
  %v5787 = vunpack.c.h.b16 %v5243
  %v5788 = vunpack.c.l.b16 %v5244
  %v5789 = vunpack.c.h.b16 %v5244
  %v5790 = vunpack.c.l.b16 %v5245
  %v5791 = vunpack.c.h.b16 %v5245
  %v5792 = vunpack.c.l.b16 %v5246
  %v5793 = vunpack.c.h.b16 %v5246
  %v5794 = vunpack.c.l.b16 %v5247
  %v5795 = vunpack.c.h.b16 %v5247
  %v5796 = vunpack.c.l.b16 %v5248
  %v5797 = vunpack.c.h.b16 %v5248
  %v5798 = vunpack.c.l.b16 %v5249
  %v5799 = vunpack.c.h.b16 %v5249
  %v5800 = vunpack.c.l.b16 %v5250
  %v5801 = vunpack.c.h.b16 %v5250
  %v5802 = vunpack.c.l.b16 %v5251
  %v5803 = vunpack.c.h.b16 %v5251
  %v5804 = vunpack.c.l.b16 %v5252
  %v5805 = vunpack.c.h.b16 %v5252
  %v5806 = vunpack.c.l.b16 %v5253
  %v5807 = vunpack.c.h.b16 %v5253
  %v5808 = vunpack.c.l.b16 %v5254
  %v5809 = vunpack.c.h.b16 %v5254
  %v5810 = vunpack.c.l.b16 %v5255
  %v5811 = vunpack.c.h.b16 %v5255
  %v5812 = vunpack.c.l.b16 %v5256
  %v5813 = vunpack.c.h.b16 %v5256
  %v5814 = vunpack.c.l.b16 %v5257
  %v5815 = vunpack.c.h.b16 %v5257
  %v5816 = vunpack.c.l.b16 %v5258
  %v5817 = vunpack.c.h.b16 %v5258
  %v5818 = vunpack.c.l.b16 %v5259
  %v5819 = vunpack.c.h.b16 %v5259
  %v5820 = vunpack.c.l.b16 %v5260
  %v5821 = vunpack.c.h.b16 %v5260
  %v5822 = vunpack.c.l.b16 %v5261
  %v5823 = vunpack.c.h.b16 %v5261
  %v5824 = vunpack.c.l.b16 %v5262
  %v5825 = vunpack.c.h.b16 %v5262
  %v5826 = vunpack.c.l.b16 %v5263
  %v5827 = vunpack.c.h.b16 %v5263
  %v5828 = vunpack.c.l.b16 %v5264
  %v5829 = vunpack.c.h.b16 %v5264
  %v5830 = vunpack.c.l.b16 %v5265
  %v5831 = vunpack.c.h.b16 %v5265
  %v5832 = vunpack.c.l.b16 %v5266
  %v5833 = vunpack.c.h.b16 %v5266
  %v5834 = vunpack.c.l.b16 %v5267
  %v5835 = vunpack.c.h.b16 %v5267
  %v5836 = vunpack.c.l.b16 %v5268
  %v5837 = vunpack.c.h.b16 %v5268
  %v5838 = vunpack.c.l.b16 %v5269
  %v5839 = vunpack.c.h.b16 %v5269
  %v5840 = vunpack.c.l.b16 %v5270
  %v5841 = vunpack.c.h.b16 %v5270
  %v5842 = vunpack.c.l.b16 %v5271
  %v5843 = vunpack.c.h.b16 %v5271
  %v5844 = vunpack.c.l.b16 %v5272
  %v5845 = vunpack.c.h.b16 %v5272
  %v5846 = vunpack.c.l.b16 %v5273
  %v5847 = vunpack.c.h.b16 %v5273
  %v5848 = vunpack.c.l.b16 %v5274
  %v5849 = vunpack.c.h.b16 %v5274
  %v5850 = vunpack.c.l.b16 %v5275
  %v5851 = vunpack.c.h.b16 %v5275
  %v5852 = vunpack.c.l.b16 %v5276
  %v5853 = vunpack.c.h.b16 %v5276
  %v5854 = vunpack.c.l.b16 %v5277
  %v5855 = vunpack.c.h.b16 %v5277
  %v5856 = vunpack.c.l.b16 %v5278
  %v5857 = vunpack.c.h.b16 %v5278
  %v5858 = vunpack.c.l.b16 %v5279
  %v5859 = vunpack.c.h.b16 %v5279
  %v5860 = vunpack.c.l.b16 %v5280
  %v5861 = vunpack.c.h.b16 %v5280
  %v5862 = vunpack.c.l.b16 %v5281
  %v5863 = vunpack.c.h.b16 %v5281
  %v5864 = vunpack.c.l.b16 %v5282
  %v5865 = vunpack.c.h.b16 %v5282
  %v5866 = vunpack.c.l.b16 %v5283
  %v5867 = vunpack.c.h.b16 %v5283
  %v5868 = vunpack.c.l.b16 %v5284
  %v5869 = vunpack.c.h.b16 %v5284
  %v5870 = vunpack.c.l.b16 %v5285
  %v5871 = vunpack.c.h.b16 %v5285
  %v5872 = vunpack.c.l.b16 %v5286
  %v5873 = vunpack.c.h.b16 %v5286
  %v5874 = vunpack.c.l.b16 %v5287
  %v5875 = vunpack.c.h.b16 %v5287
  %v5876 = vunpack.c.l.b16 %v5288
  %v5877 = vunpack.c.h.b16 %v5288
  %v5878 = vunpack.c.l.b16 %v5289
  %v5879 = vunpack.c.h.b16 %v5289
  %v5880 = vunpack.c.l.b16 %v5290
  %v5881 = vunpack.c.h.b16 %v5290
  %v5882 = vunpack.c.l.b16 %v5291
  %v5883 = vunpack.c.h.b16 %v5291
  %v5884 = vunpack.c.l.b16 %v5292
  %v5885 = vunpack.c.h.b16 %v5292
  %v5886 = vunpack.c.l.b16 %v5293
  %v5887 = vunpack.c.h.b16 %v5293
  %v5888 = vunpack.c.l.b16 %v5294
  %v5889 = vunpack.c.h.b16 %v5294
  %v5890 = vunpack.c.l.b16 %v5295
  %v5891 = vunpack.c.h.b16 %v5295
  %v5892 = vunpack.c.l.b16 %v5296
  %v5893 = vunpack.c.h.b16 %v5296
  %v5894 = vunpack.c.l.b16 %v5297
  %v5895 = vunpack.c.h.b16 %v5297
  %v5896 = vunpack.c.l.b16 %v5298
  %v5897 = vunpack.c.h.b16 %v5298
  %v5898 = vunpack.c.l.b16 %v5299
  %v5899 = vunpack.c.h.b16 %v5299
  %v5900 = vunpack.c.l.b16 %v5300
  %v5901 = vunpack.c.h.b16 %v5300
  %v5902 = vunpack.c.l.b16 %v5301
  %v5903 = vunpack.c.h.b16 %v5301
  %v5904 = vunpack.c.l.b16 %v5302
  %v5905 = vunpack.c.h.b16 %v5302
  %v5906 = vunpack.c.l.b16 %v5303
  %v5907 = vunpack.c.h.b16 %v5303
  %v5908 = vunpack.c.l.b16 %v5304
  %v5909 = vunpack.c.h.b16 %v5304
  %v5910 = vunpack.c.l.b16 %v5305
  %v5911 = vunpack.c.h.b16 %v5305
  %v5912 = vunpack.c.l.b16 %v5306
  %v5913 = vunpack.c.h.b16 %v5306
  %v5914 = vunpack.c.l.b16 %v5307
  %v5915 = vunpack.c.h.b16 %v5307
  %v5916 = vunpack.c.l.b16 %v5308
  %v5917 = vunpack.c.h.b16 %v5308
  %v5918 = vunpack.c.l.b16 %v5309
  %v5919 = vunpack.c.h.b16 %v5309
  %v5920 = vunpack.c.l.b16 %v5310
  %v5921 = vunpack.c.h.b16 %v5310
  %v5922 = vunpack.c.l.b16 %v5311
  %v5923 = vunpack.c.h.b16 %v5311
  %v5924 = vunpack.c.l.b16 %v5312
  %v5925 = vunpack.c.h.b16 %v5312
  %v5926 = vunpack.c.l.b16 %v5313
  %v5927 = vunpack.c.h.b16 %v5313
  %v5928 = vunpack.c.l.b16 %v5314
  %v5929 = vunpack.c.h.b16 %v5314
  %v5930 = vunpack.c.l.b16 %v5315
  %v5931 = vunpack.c.h.b16 %v5315
  %v5932 = vunpack.c.l.b16 %v5316
  %v5933 = vunpack.c.h.b16 %v5316
  %v5934 = vunpack.c.l.b16 %v5317
  %v5935 = vunpack.c.h.b16 %v5317
  %v5936 = vunpack.c.l.b16 %v5318
  %v5937 = vunpack.c.h.b16 %v5318
  %v5938 = vunpack.c.l.b16 %v5319
  %v5939 = vunpack.c.h.b16 %v5319
  %v5940 = vunpack.c.l.b16 %v5320
  %v5941 = vunpack.c.h.b16 %v5320
  %v5942 = vunpack.c.l.b16 %v5321
  %v5943 = vunpack.c.h.b16 %v5321
  %v5944 = vunpack.c.l.b16 %v5322
  %v5945 = vunpack.c.h.b16 %v5322
  %v5946 = vunpack.c.l.b16 %v5323
  %v5947 = vunpack.c.h.b16 %v5323
  %v5948 = vunpack.c.l.b16 %v5324
  %v5949 = vunpack.c.h.b16 %v5324
  %v5950 = vunpack.c.l.b16 %v5325
  %v5951 = vunpack.c.h.b16 %v5325
  %v5952 = vunpack.c.l.b16 %v5326
  %v5953 = vunpack.c.h.b16 %v5326
  %v5954 = vunpack.c.l.b16 %v5327
  %v5955 = vunpack.c.h.b16 %v5327
  %v5956 = vunpack.c.l.b16 %v5328
  %v5957 = vunpack.c.h.b16 %v5328
  %v5958 = vunpack.c.l.b16 %v5329
  %v5959 = vunpack.c.h.b16 %v5329
  %v5960 = vunpack.c.l.b16 %v5330
  %v5961 = vunpack.c.h.b16 %v5330
  %v5962 = vunpack.c.l.b16 %v5331
  %v5963 = vunpack.c.h.b16 %v5331
  %v5964 = vunpack.c.l.b16 %v5332
  %v5965 = vunpack.c.h.b16 %v5332
  %v5966 = vunpack.c.l.b16 %v5333
  %v5967 = vunpack.c.h.b16 %v5333
  %v5968 = vunpack.c.l.b16 %v5334
  %v5969 = vunpack.c.h.b16 %v5334
  %v5970 = vunpack.c.l.b16 %v5335
  %v5971 = vunpack.c.h.b16 %v5335
  %v5972 = vunpack.c.l.b16 %v5336
  %v5973 = vunpack.c.h.b16 %v5336
  %v5974 = vunpack.c.l.b16 %v5337
  %v5975 = vunpack.c.h.b16 %v5337
  %v5976 = vunpack.c.l.b16 %v5338
  %v5977 = vunpack.c.h.b16 %v5338
  %v5978 = vunpack.c.l.b16 %v5339
  %v5979 = vunpack.c.h.b16 %v5339
  %v5980 = vunpack.c.l.b16 %v5340
  %v5981 = vunpack.c.h.b16 %v5340
  %v5982 = vunpack.c.l.b16 %v5341
  %v5983 = vunpack.c.h.b16 %v5341
  %v5984 = vunpack.c.l.b16 %v5342
  %v5985 = vunpack.c.h.b16 %v5342
  %v5986 = vunpack.c.l.b16 %v5343
  %v5987 = vunpack.c.h.b16 %v5343
  %v5988 = vunpack.c.l.b16 %v5344
  %v5989 = vunpack.c.h.b16 %v5344
  %v5990 = vunpack.c.l.b16 %v5345
  %v5991 = vunpack.c.h.b16 %v5345
  %v5992 = vunpack.c.l.b16 %v5346
  %v5993 = vunpack.c.h.b16 %v5346
  %v5994 = vunpack.c.l.b16 %v5347
  %v5995 = vunpack.c.h.b16 %v5347
  %v5996 = vunpack.c.l.b16 %v5348
  %v5997 = vunpack.c.h.b16 %v5348
  %v5998 = vunpack.c.l.b16 %v5349
  %v5999 = vunpack.c.h.b16 %v5349
  %v6000 = vunpack.c.l.b16 %v5350
  %v6001 = vunpack.c.h.b16 %v5350
  %v6002 = vunpack.c.l.b16 %v5351
  %v6003 = vunpack.c.h.b16 %v5351
  %v6004 = vunpack.c.l.b16 %v5352
  %v6005 = vunpack.c.h.b16 %v5352
  %v6006 = vunpack.c.l.b16 %v5353
  %v6007 = vunpack.c.h.b16 %v5353
  %v6008 = vunpack.c.l.b16 %v5354
  %v6009 = vunpack.c.h.b16 %v5354
  %v6010 = vunpack.c.l.b16 %v5355
  %v6011 = vunpack.c.h.b16 %v5355
  %v6012 = vunpack.c.l.b16 %v5356
  %v6013 = vunpack.c.h.b16 %v5356
  %v6014 = vunpack.c.l.b16 %v5357
  %v6015 = vunpack.c.h.b16 %v5357
  %v6016 = vunpack.c.l.b16 %v5358
  %v6017 = vunpack.c.h.b16 %v5358
  %v6018 = vunpack.c.l.b16 %v5359
  %v6019 = vunpack.c.h.b16 %v5359
  %v6020 = vunpack.c.l.b16 %v5360
  %v6021 = vunpack.c.h.b16 %v5360
  %v6022 = vunpack.c.l.b16 %v5361
  %v6023 = vunpack.c.h.b16 %v5361
  %v6024 = vunpack.c.l.b16 %v5362
  %v6025 = vunpack.c.h.b16 %v5362
  %v6026 = vunpack.c.l.b16 %v5363
  %v6027 = vunpack.c.h.b16 %v5363
  %v6028 = vunpack.c.l.b16 %v5364
  %v6029 = vunpack.c.h.b16 %v5364
  %v6030 = vunpack.c.l.b16 %v5365
  %v6031 = vunpack.c.h.b16 %v5365
  %v6032 = vunpack.c.l.b16 %v5366
  %v6033 = vunpack.c.h.b16 %v5366
  %v6034 = vunpack.c.l.b16 %v5367
  %v6035 = vunpack.c.h.b16 %v5367
  %v6036 = vunpack.c.l.b16 %v5368
  %v6037 = vunpack.c.h.b16 %v5368
  %v6038 = vunpack.c.l.b16 %v5369
  %v6039 = vunpack.c.h.b16 %v5369
  %v6040 = vunpack.c.l.b16 %v5370
  %v6041 = vunpack.c.h.b16 %v5370
  %v6042 = vunpack.c.l.b16 %v5371
  %v6043 = vunpack.c.h.b16 %v5371
  %v6044 = vpack.c.b16 %v5600, %v5596
  %v6045 = vpack.c.b16 %v5601, %v5597
  %v6046 = vpack.c.b16 %v5602, %v5598
  %v6047 = vpack.c.b16 %v5603, %v5599
  %v6048 = vpack.c.b16 %v5608, %v5604
  %v6049 = vpack.c.b16 %v5609, %v5605
  %v6050 = vpack.c.b16 %v5610, %v5606
  %v6051 = vpack.c.b16 %v5611, %v5607
  %v6052 = vpack.c.b16 %v5616, %v5612
  %v6053 = vpack.c.b16 %v5617, %v5613
  %v6054 = vpack.c.b16 %v5618, %v5614
  %v6055 = vpack.c.b16 %v5619, %v5615
  %v6056 = vpack.c.b16 %v5624, %v5620
  %v6057 = vpack.c.b16 %v5625, %v5621
  %v6058 = vpack.c.b16 %v5626, %v5622
  %v6059 = vpack.c.b16 %v5627, %v5623
  %v6060 = vpack.c.b16 %v5632, %v5628
  %v6061 = vpack.c.b16 %v5633, %v5629
  %v6062 = vpack.c.b16 %v5634, %v5630
  %v6063 = vpack.c.b16 %v5635, %v5631
  %v6064 = vpack.c.b16 %v5640, %v5636
  %v6065 = vpack.c.b16 %v5641, %v5637
  %v6066 = vpack.c.b16 %v5642, %v5638
  %v6067 = vpack.c.b16 %v5643, %v5639
  %v6068 = vpack.c.b16 %v5648, %v5644
  %v6069 = vpack.c.b16 %v5649, %v5645
  %v6070 = vpack.c.b16 %v5650, %v5646
  %v6071 = vpack.c.b16 %v5651, %v5647
  %v6072 = vpack.c.b16 %v5656, %v5652
  %v6073 = vpack.c.b16 %v5657, %v5653
  %v6074 = vpack.c.b16 %v5658, %v5654
  %v6075 = vpack.c.b16 %v5659, %v5655
  %v6076 = vpack.c.b16 %v5664, %v5660
  %v6077 = vpack.c.b16 %v5665, %v5661
  %v6078 = vpack.c.b16 %v5666, %v5662
  %v6079 = vpack.c.b16 %v5667, %v5663
  %v6080 = vpack.c.b16 %v5672, %v5668
  %v6081 = vpack.c.b16 %v5673, %v5669
  %v6082 = vpack.c.b16 %v5674, %v5670
  %v6083 = vpack.c.b16 %v5675, %v5671
  %v6084 = vpack.c.b16 %v5680, %v5676
  %v6085 = vpack.c.b16 %v5681, %v5677
  %v6086 = vpack.c.b16 %v5682, %v5678
  %v6087 = vpack.c.b16 %v5683, %v5679
  %v6088 = vpack.c.b16 %v5688, %v5684
  %v6089 = vpack.c.b16 %v5689, %v5685
  %v6090 = vpack.c.b16 %v5690, %v5686
  %v6091 = vpack.c.b16 %v5691, %v5687
  %v6092 = vpack.c.b16 %v5696, %v5692
  %v6093 = vpack.c.b16 %v5697, %v5693
  %v6094 = vpack.c.b16 %v5698, %v5694
  %v6095 = vpack.c.b16 %v5699, %v5695
  %v6096 = vpack.c.b16 %v5704, %v5700
  %v6097 = vpack.c.b16 %v5705, %v5701
  %v6098 = vpack.c.b16 %v5706, %v5702
  %v6099 = vpack.c.b16 %v5707, %v5703
  %v6100 = vpack.c.b16 %v5712, %v5708
  %v6101 = vpack.c.b16 %v5713, %v5709
  %v6102 = vpack.c.b16 %v5714, %v5710
  %v6103 = vpack.c.b16 %v5715, %v5711
  %v6104 = vpack.c.b16 %v5720, %v5716
  %v6105 = vpack.c.b16 %v5721, %v5717
  %v6106 = vpack.c.b16 %v5722, %v5718
  %v6107 = vpack.c.b16 %v5723, %v5719
  %v6108 = vpack.c.b16 %v5728, %v5724
  %v6109 = vpack.c.b16 %v5729, %v5725
  %v6110 = vpack.c.b16 %v5730, %v5726
  %v6111 = vpack.c.b16 %v5731, %v5727
  %v6112 = vpack.c.b16 %v5736, %v5732
  %v6113 = vpack.c.b16 %v5737, %v5733
  %v6114 = vpack.c.b16 %v5738, %v5734
  %v6115 = vpack.c.b16 %v5739, %v5735
  %v6116 = vpack.c.b16 %v5744, %v5740
  %v6117 = vpack.c.b16 %v5745, %v5741
  %v6118 = vpack.c.b16 %v5746, %v5742
  %v6119 = vpack.c.b16 %v5747, %v5743
  %v6120 = vpack.c.b16 %v5752, %v5748
  %v6121 = vpack.c.b16 %v5753, %v5749
  %v6122 = vpack.c.b16 %v5754, %v5750
  %v6123 = vpack.c.b16 %v5755, %v5751
  %v6124 = vpack.c.b16 %v5760, %v5756
  %v6125 = vpack.c.b16 %v5761, %v5757
  %v6126 = vpack.c.b16 %v5762, %v5758
  %v6127 = vpack.c.b16 %v5763, %v5759
  %v6128 = vpack.c.b16 %v5768, %v5764
  %v6129 = vpack.c.b16 %v5769, %v5765
  %v6130 = vpack.c.b16 %v5770, %v5766
  %v6131 = vpack.c.b16 %v5771, %v5767
  %v6132 = vpack.c.b16 %v5776, %v5772
  %v6133 = vpack.c.b16 %v5777, %v5773
  %v6134 = vpack.c.b16 %v5778, %v5774
  %v6135 = vpack.c.b16 %v5779, %v5775
  %v6136 = vpack.c.b16 %v5784, %v5780
  %v6137 = vpack.c.b16 %v5785, %v5781
  %v6138 = vpack.c.b16 %v5786, %v5782
  %v6139 = vpack.c.b16 %v5787, %v5783
  %v6140 = vpack.c.b16 %v5792, %v5788
  %v6141 = vpack.c.b16 %v5793, %v5789
  %v6142 = vpack.c.b16 %v5794, %v5790
  %v6143 = vpack.c.b16 %v5795, %v5791
  %v6144 = vpack.c.b16 %v5800, %v5796
  %v6145 = vpack.c.b16 %v5801, %v5797
  %v6146 = vpack.c.b16 %v5802, %v5798
  %v6147 = vpack.c.b16 %v5803, %v5799
  %v6148 = vpack.c.b16 %v5808, %v5804
  %v6149 = vpack.c.b16 %v5809, %v5805
  %v6150 = vpack.c.b16 %v5810, %v5806
  %v6151 = vpack.c.b16 %v5811, %v5807
  %v6152 = vpack.c.b16 %v5816, %v5812
  %v6153 = vpack.c.b16 %v5817, %v5813
  %v6154 = vpack.c.b16 %v5818, %v5814
  %v6155 = vpack.c.b16 %v5819, %v5815
  %v6156 = vpack.c.b16 %v5824, %v5820
  %v6157 = vpack.c.b16 %v5825, %v5821
  %v6158 = vpack.c.b16 %v5826, %v5822
  %v6159 = vpack.c.b16 %v5827, %v5823
  %v6160 = vpack.c.b16 %v5832, %v5828
  %v6161 = vpack.c.b16 %v5833, %v5829
  %v6162 = vpack.c.b16 %v5834, %v5830
  %v6163 = vpack.c.b16 %v5835, %v5831
  %v6164 = vpack.c.b16 %v5840, %v5836
  %v6165 = vpack.c.b16 %v5841, %v5837
  %v6166 = vpack.c.b16 %v5842, %v5838
  %v6167 = vpack.c.b16 %v5843, %v5839
  %v6168 = vpack.c.b16 %v5848, %v5844
  %v6169 = vpack.c.b16 %v5849, %v5845
  %v6170 = vpack.c.b16 %v5850, %v5846
  %v6171 = vpack.c.b16 %v5851, %v5847
  %v6172 = vpack.c.b16 %v5856, %v5852
  %v6173 = vpack.c.b16 %v5857, %v5853
  %v6174 = vpack.c.b16 %v5858, %v5854
  %v6175 = vpack.c.b16 %v5859, %v5855
  %v6176 = vpack.c.b16 %v5864, %v5860
  %v6177 = vpack.c.b16 %v5865, %v5861
  %v6178 = vpack.c.b16 %v5866, %v5862
  %v6179 = vpack.c.b16 %v5867, %v5863
  %v6180 = vpack.c.b16 %v5872, %v5868
  %v6181 = vpack.c.b16 %v5873, %v5869
  %v6182 = vpack.c.b16 %v5874, %v5870
  %v6183 = vpack.c.b16 %v5875, %v5871
  %v6184 = vpack.c.b16 %v5880, %v5876
  %v6185 = vpack.c.b16 %v5881, %v5877
  %v6186 = vpack.c.b16 %v5882, %v5878
  %v6187 = vpack.c.b16 %v5883, %v5879
  %v6188 = vpack.c.b16 %v5888, %v5884
  %v6189 = vpack.c.b16 %v5889, %v5885
  %v6190 = vpack.c.b16 %v5890, %v5886
  %v6191 = vpack.c.b16 %v5891, %v5887
  %v6192 = vpack.c.b16 %v5896, %v5892
  %v6193 = vpack.c.b16 %v5897, %v5893
  %v6194 = vpack.c.b16 %v5898, %v5894
  %v6195 = vpack.c.b16 %v5899, %v5895
  %v6196 = vpack.c.b16 %v5904, %v5900
  %v6197 = vpack.c.b16 %v5905, %v5901
  %v6198 = vpack.c.b16 %v5906, %v5902
  %v6199 = vpack.c.b16 %v5907, %v5903
  %v6200 = vpack.c.b16 %v5912, %v5908
  %v6201 = vpack.c.b16 %v5913, %v5909
  %v6202 = vpack.c.b16 %v5914, %v5910
  %v6203 = vpack.c.b16 %v5915, %v5911
  %v6204 = vpack.c.b16 %v5920, %v5916
  %v6205 = vpack.c.b16 %v5921, %v5917
  %v6206 = vpack.c.b16 %v5922, %v5918
  %v6207 = vpack.c.b16 %v5923, %v5919
  %v6208 = vpack.c.b16 %v5928, %v5924
  %v6209 = vpack.c.b16 %v5929, %v5925
  %v6210 = vpack.c.b16 %v5930, %v5926
  %v6211 = vpack.c.b16 %v5931, %v5927
  %v6212 = vpack.c.b16 %v5936, %v5932
  %v6213 = vpack.c.b16 %v5937, %v5933
  %v6214 = vpack.c.b16 %v5938, %v5934
  %v6215 = vpack.c.b16 %v5939, %v5935
  %v6216 = vpack.c.b16 %v5944, %v5940
  %v6217 = vpack.c.b16 %v5945, %v5941
  %v6218 = vpack.c.b16 %v5946, %v5942
  %v6219 = vpack.c.b16 %v5947, %v5943
  %v6220 = vpack.c.b16 %v5952, %v5948
  %v6221 = vpack.c.b16 %v5953, %v5949
  %v6222 = vpack.c.b16 %v5954, %v5950
  %v6223 = vpack.c.b16 %v5955, %v5951
  %v6224 = vpack.c.b16 %v5960, %v5956
  %v6225 = vpack.c.b16 %v5961, %v5957
  %v6226 = vpack.c.b16 %v5962, %v5958
  %v6227 = vpack.c.b16 %v5963, %v5959
  %v6228 = vpack.c.b16 %v5968, %v5964
  %v6229 = vpack.c.b16 %v5969, %v5965
  %v6230 = vpack.c.b16 %v5970, %v5966
  %v6231 = vpack.c.b16 %v5971, %v5967
  %v6232 = vpack.c.b16 %v5976, %v5972
  %v6233 = vpack.c.b16 %v5977, %v5973
  %v6234 = vpack.c.b16 %v5978, %v5974
  %v6235 = vpack.c.b16 %v5979, %v5975
  %v6236 = vpack.c.b16 %v5984, %v5980
  %v6237 = vpack.c.b16 %v5985, %v5981
  %v6238 = vpack.c.b16 %v5986, %v5982
  %v6239 = vpack.c.b16 %v5987, %v5983
  %v6240 = vpack.c.b16 %v5992, %v5988
  %v6241 = vpack.c.b16 %v5993, %v5989
  %v6242 = vpack.c.b16 %v5994, %v5990
  %v6243 = vpack.c.b16 %v5995, %v5991
  %v6244 = vpack.c.b16 %v6000, %v5996
  %v6245 = vpack.c.b16 %v6001, %v5997
  %v6246 = vpack.c.b16 %v6002, %v5998
  %v6247 = vpack.c.b16 %v6003, %v5999
  %v6248 = vpack.c.b16 %v6008, %v6004
  %v6249 = vpack.c.b16 %v6009, %v6005
  %v6250 = vpack.c.b16 %v6010, %v6006
  %v6251 = vpack.c.b16 %v6011, %v6007
  %v6252 = vpack.c.b16 %v6016, %v6012
  %v6253 = vpack.c.b16 %v6017, %v6013
  %v6254 = vpack.c.b16 %v6018, %v6014
  %v6255 = vpack.c.b16 %v6019, %v6015
  %v6256 = vpack.c.b16 %v6024, %v6020
  %v6257 = vpack.c.b16 %v6025, %v6021
  %v6258 = vpack.c.b16 %v6026, %v6022
  %v6259 = vpack.c.b16 %v6027, %v6023
  %v6260 = vpack.c.b16 %v6032, %v6028
  %v6261 = vpack.c.b16 %v6033, %v6029
  %v6262 = vpack.c.b16 %v6034, %v6030
  %v6263 = vpack.c.b16 %v6035, %v6031
  %v6264 = vpack.c.b16 %v6040, %v6036
  %v6265 = vpack.c.b16 %v6041, %v6037
  %v6266 = vpack.c.b16 %v6042, %v6038
  %v6267 = vpack.c.b16 %v6043, %v6039
  %6492 = vmatprep.subr.bf16.mxu0 %v6045
  %6493 = vmatpush1.bf16.msra.mxu0 %v6044
  %6494 = vmatprep.subr.bf16.mxu0 %v6049
  %6495 = vmatpush1.bf16.msra.mxu0 %v6048
  %6496 = vmatprep.subr.bf16.mxu0 %v6053
  %6497 = vmatpush1.bf16.msra.mxu0 %v6052
  %6498 = vmatprep.subr.bf16.mxu0 %v6057
  %6499 = vmatpush1.bf16.msra.mxu0 %v6056
  %6500 = vmatprep.subr.bf16.mxu0 %v6061
  %6501 = vmatpush1.bf16.msra.mxu0 %v6060
  %6502 = vmatprep.subr.bf16.mxu0 %v6065
  %6503 = vmatpush1.bf16.msra.mxu0 %v6064
  %6504 = vmatprep.subr.bf16.mxu0 %v6069
  %6505 = vmatpush1.bf16.msra.mxu0 %v6068
  %6506 = vmatprep.subr.bf16.mxu0 %v6073
  %6507 = vmatpush1.bf16.msra.mxu0 %v6072
  %6508 = vmatprep.subr.bf16.mxu0 %v6077
  %6509 = vmatpush1.bf16.msra.mxu0 %v6076
  %6510 = vmatprep.subr.bf16.mxu0 %v6081
  %6511 = vmatpush1.bf16.msra.mxu0 %v6080
  %6512 = vmatprep.subr.bf16.mxu0 %v6085
  %6513 = vmatpush1.bf16.msra.mxu0 %v6084
  %6514 = vmatprep.subr.bf16.mxu0 %v6089
  %6515 = vmatpush1.bf16.msra.mxu0 %v6088
  %6516 = vmatprep.subr.bf16.mxu0 %v6093
  %6517 = vmatpush1.bf16.msra.mxu0 %v6092
  %6518 = vmatprep.subr.bf16.mxu0 %v6097
  %6519 = vmatpush1.bf16.msra.mxu0 %v6096
  %6520 = vmatprep.subr.bf16.mxu0 %v6101
  %6521 = vmatpush1.bf16.msra.mxu0 %v6100
  %6522 = vmatprep.subr.bf16.mxu0 %v6105
  %6523 = vmatpush1.bf16.msra.mxu0 %v6104
  %6524 = vmatprep.mubr.bf16.mxu0 %v276
  %6525 = vmatmul.mubr.bf16.gmra.mrb[0].mxu0 %v275
  %v6526 = vpop.f32.mrb[0].mxu0
  %v6527 = vadd.f32 0.0, %v6526
  %v6528 = vpop.f32.mrb[0].mxu0
  %v6529 = vadd.f32 0.0, %v6528
  %v6530 = vpop.f32.mrb[0].mxu0
  %v6531 = vadd.f32 0.0, %v6530
  %v6532 = vpop.f32.mrb[0].mxu0
  %v6533 = vadd.f32 0.0, %v6532
  %6534 = vdwg.mxu0
  %6535 = vmatprep.subr.bf16.mxu0 %v6109
  %6536 = vmatpush1.bf16.msra.mxu0 %v6108
  %6537 = vmatprep.subr.bf16.mxu0 %v6113
  %6538 = vmatpush1.bf16.msra.mxu0 %v6112
  %6539 = vmatprep.subr.bf16.mxu0 %v6117
  %6540 = vmatpush1.bf16.msra.mxu0 %v6116
  %6541 = vmatprep.subr.bf16.mxu0 %v6121
  %6542 = vmatpush1.bf16.msra.mxu0 %v6120
  %6543 = vmatprep.subr.bf16.mxu0 %v6125
  %6544 = vmatpush1.bf16.msra.mxu0 %v6124
  %6545 = vmatprep.subr.bf16.mxu0 %v6129
  %6546 = vmatpush1.bf16.msra.mxu0 %v6128
  %6547 = vmatprep.subr.bf16.mxu0 %v6133
  %6548 = vmatpush1.bf16.msra.mxu0 %v6132
  %6549 = vmatprep.subr.bf16.mxu0 %v6137
  %6550 = vmatpush1.bf16.msra.mxu0 %v6136
  %6551 = vmatprep.subr.bf16.mxu0 %v6141
  %6552 = vmatpush1.bf16.msra.mxu0 %v6140
  %6553 = vmatprep.subr.bf16.mxu0 %v6145
  %6554 = vmatpush1.bf16.msra.mxu0 %v6144
  %6555 = vmatprep.subr.bf16.mxu0 %v6149
  %6556 = vmatpush1.bf16.msra.mxu0 %v6148
  %6557 = vmatprep.subr.bf16.mxu0 %v6153
  %6558 = vmatpush1.bf16.msra.mxu0 %v6152
  %6559 = vmatprep.subr.bf16.mxu0 %v6157
  %6560 = vmatpush1.bf16.msra.mxu0 %v6156
  %6561 = vmatprep.subr.bf16.mxu0 %v6161
  %6562 = vmatpush1.bf16.msra.mxu0 %v6160
  %6563 = vmatprep.subr.bf16.mxu0 %v6165
  %6564 = vmatpush1.bf16.msra.mxu0 %v6164
  %6565 = vmatprep.subr.bf16.mxu0 %v6169
  %6566 = vmatpush1.bf16.msra.mxu0 %v6168
  %6567 = vmatprep.mubr.bf16.mxu0 %v278
  %6568 = vmatmul.mubr.bf16.gmra.mrb[0].mxu0 %v277
  %v6569 = vpop.f32.mrb[0].mxu0
  %v6570 = vadd.f32 %v6527, %v6569
  %v6571 = vpop.f32.mrb[0].mxu0
  %v6572 = vadd.f32 %v6529, %v6571
  %v6573 = vpop.f32.mrb[0].mxu0
  %v6574 = vadd.f32 %v6531, %v6573
  %v6575 = vpop.f32.mrb[0].mxu0
  %v6576 = vadd.f32 %v6533, %v6575
  %6577 = vdwg.mxu0
  %6578 = vmatprep.subr.bf16.mxu0 %v6173
  %6579 = vmatpush1.bf16.msra.mxu0 %v6172
  %6580 = vmatprep.subr.bf16.mxu0 %v6177
  %6581 = vmatpush1.bf16.msra.mxu0 %v6176
  %6582 = vmatprep.subr.bf16.mxu0 %v6181
  %6583 = vmatpush1.bf16.msra.mxu0 %v6180
  %6584 = vmatprep.subr.bf16.mxu0 %v6185
  %6585 = vmatpush1.bf16.msra.mxu0 %v6184
  %6586 = vmatprep.subr.bf16.mxu0 %v6189
  %6587 = vmatpush1.bf16.msra.mxu0 %v6188
  %6588 = vmatprep.subr.bf16.mxu0 %v6193
  %6589 = vmatpush1.bf16.msra.mxu0 %v6192
  %6590 = vmatprep.subr.bf16.mxu0 %v6197
  %6591 = vmatpush1.bf16.msra.mxu0 %v6196
  %6592 = vmatprep.subr.bf16.mxu0 %v6201
  %6593 = vmatpush1.bf16.msra.mxu0 %v6200
  %6594 = vmatprep.subr.bf16.mxu0 %v6205
  %6595 = vmatpush1.bf16.msra.mxu0 %v6204
  %6596 = vmatprep.subr.bf16.mxu0 %v6209
  %6597 = vmatpush1.bf16.msra.mxu0 %v6208
  %6598 = vmatprep.subr.bf16.mxu0 %v6213
  %6599 = vmatpush1.bf16.msra.mxu0 %v6212
  %6600 = vmatprep.subr.bf16.mxu0 %v6217
  %6601 = vmatpush1.bf16.msra.mxu0 %v6216
  %6602 = vmatprep.subr.bf16.mxu0 %v6221
  %6603 = vmatpush1.bf16.msra.mxu0 %v6220
  %6604 = vmatprep.subr.bf16.mxu0 %v6225
  %6605 = vmatpush1.bf16.msra.mxu0 %v6224
  %6606 = vmatprep.subr.bf16.mxu0 %v6229
  %6607 = vmatpush1.bf16.msra.mxu0 %v6228
  %6608 = vmatprep.subr.bf16.mxu0 %v6233
  %6609 = vmatpush1.bf16.msra.mxu0 %v6232
  %6610 = vmatprep.mubr.bf16.mxu0 %v280
  %6611 = vmatmul.mubr.bf16.gmra.mrb[0].mxu0 %v279
  %v6612 = vpop.f32.mrb[0].mxu0
  %v6613 = vadd.f32 %v6570, %v6612
  %v6614 = vpop.f32.mrb[0].mxu0
  %v6615 = vadd.f32 %v6572, %v6614
  %v6616 = vpop.f32.mrb[0].mxu0
  %v6617 = vadd.f32 %v6574, %v6616
  %v6618 = vpop.f32.mrb[0].mxu0
  %v6619 = vadd.f32 %v6576, %v6618
  %6620 = vdwg.mxu0
  %6621 = vmatprep.subr.bf16.mxu0 %v6237
  %6622 = vmatpush1.bf16.msra.mxu0 %v6236
  %6623 = vmatprep.subr.bf16.mxu0 %v6241
  %6624 = vmatpush1.bf16.msra.mxu0 %v6240
  %6625 = vmatprep.subr.bf16.mxu0 %v6245
  %6626 = vmatpush1.bf16.msra.mxu0 %v6244
  %6627 = vmatprep.subr.bf16.mxu0 %v6249
  %6628 = vmatpush1.bf16.msra.mxu0 %v6248
  %6629 = vmatprep.subr.bf16.mxu0 %v6253
  %6630 = vmatpush1.bf16.msra.mxu0 %v6252
  %6631 = vmatprep.subr.bf16.mxu0 %v6257
  %6632 = vmatpush1.bf16.msra.mxu0 %v6256
  %6633 = vmatprep.subr.bf16.mxu0 %v6261
  %6634 = vmatpush1.bf16.msra.mxu0 %v6260
  %6635 = vmatprep.subr.bf16.mxu0 %v6265
  %6636 = vmatpush1.bf16.msra.mxu0 %v6264
  %6637 = vmatprep.subr.bf16.mxu0 0
  %6638 = vmatpush1.bf16.msra.mxu0 0
  %6639 = vmatprep.subr.bf16.mxu0 0
  %6640 = vmatpush1.bf16.msra.mxu0 0
  %6641 = vmatprep.subr.bf16.mxu0 0
  %6642 = vmatpush1.bf16.msra.mxu0 0
  %6643 = vmatprep.subr.bf16.mxu0 0
  %6644 = vmatpush1.bf16.msra.mxu0 0
  %6645 = vmatprep.subr.bf16.mxu0 0
  %6646 = vmatpush1.bf16.msra.mxu0 0
  %6647 = vmatprep.subr.bf16.mxu0 0
  %6648 = vmatpush1.bf16.msra.mxu0 0
  %6649 = vmatprep.subr.bf16.mxu0 0
  %6650 = vmatpush1.bf16.msra.mxu0 0
  %6651 = vmatprep.subr.bf16.mxu0 0
  %6652 = vmatpush1.bf16.msra.mxu0 0
  %6653 = vmatprep.mubr.bf16.mxu0 0
  %6654 = vmatmul.mubr.bf16.gmra.mrb[0].mxu0 %v281
  %v6655 = vpop.f32.mrb[0].mxu0
  %v6656 = vadd.f32 %v6613, %v6655
  %v6657 = vpop.f32.mrb[0].mxu0
  %v6658 = vadd.f32 %v6615, %v6657
  %v6659 = vpop.f32.mrb[0].mxu0
  %v6660 = vadd.f32 %v6617, %v6659
  %v6661 = vpop.f32.mrb[0].mxu0
  %v6662 = vadd.f32 %v6619, %v6661
  %6663 = vdwg.mxu0
  %6664 = vmatprep.subr.bf16.mxu0 %v6047
  %6665 = vmatpush1.bf16.msra.mxu0 %v6046
  %6666 = vmatprep.subr.bf16.mxu0 %v6051
  %6667 = vmatpush1.bf16.msra.mxu0 %v6050
  %6668 = vmatprep.subr.bf16.mxu0 %v6055
  %6669 = vmatpush1.bf16.msra.mxu0 %v6054
  %6670 = vmatprep.subr.bf16.mxu0 %v6059
  %6671 = vmatpush1.bf16.msra.mxu0 %v6058
  %6672 = vmatprep.subr.bf16.mxu0 %v6063
  %6673 = vmatpush1.bf16.msra.mxu0 %v6062
  %6674 = vmatprep.subr.bf16.mxu0 %v6067
  %6675 = vmatpush1.bf16.msra.mxu0 %v6066
  %6676 = vmatprep.subr.bf16.mxu0 %v6071
  %6677 = vmatpush1.bf16.msra.mxu0 %v6070
  %6678 = vmatprep.subr.bf16.mxu0 %v6075
  %6679 = vmatpush1.bf16.msra.mxu0 %v6074
  %6680 = vmatprep.subr.bf16.mxu0 %v6079
  %6681 = vmatpush1.bf16.msra.mxu0 %v6078
  %6682 = vmatprep.subr.bf16.mxu0 %v6083
  %6683 = vmatpush1.bf16.msra.mxu0 %v6082
  %6684 = vmatprep.subr.bf16.mxu0 %v6087
  %6685 = vmatpush1.bf16.msra.mxu0 %v6086
  %6686 = vmatprep.subr.bf16.mxu0 %v6091
  %6687 = vmatpush1.bf16.msra.mxu0 %v6090
  %6688 = vmatprep.subr.bf16.mxu0 %v6095
  %6689 = vmatpush1.bf16.msra.mxu0 %v6094
  %6690 = vmatprep.subr.bf16.mxu0 %v6099
  %6691 = vmatpush1.bf16.msra.mxu0 %v6098
  %6692 = vmatprep.subr.bf16.mxu0 %v6103
  %6693 = vmatpush1.bf16.msra.mxu0 %v6102
  %6694 = vmatprep.subr.bf16.mxu0 %v6107
  %6695 = vmatpush1.bf16.msra.mxu0 %v6106
  %6696 = vmatprep.mubr.bf16.mxu0 %v276
  %6697 = vmatmul.mubr.bf16.gmra.mrb[0].mxu0 %v275
  %v6698 = vpop.f32.mrb[0].mxu0
  %v6699 = vadd.f32 0.0, %v6698
  %v6700 = vpop.f32.mrb[0].mxu0
  %v6701 = vadd.f32 0.0, %v6700
  %v6702 = vpop.f32.mrb[0].mxu0
  %v6703 = vadd.f32 0.0, %v6702
  %v6704 = vpop.f32.mrb[0].mxu0
  %v6705 = vadd.f32 0.0, %v6704
  %6706 = vdwg.mxu0
  %6707 = vmatprep.subr.bf16.mxu0 %v6111
  %6708 = vmatpush1.bf16.msra.mxu0 %v6110
  %6709 = vmatprep.subr.bf16.mxu0 %v6115
  %6710 = vmatpush1.bf16.msra.mxu0 %v6114
  %6711 = vmatprep.subr.bf16.mxu0 %v6119
  %6712 = vmatpush1.bf16.msra.mxu0 %v6118
  %6713 = vmatprep.subr.bf16.mxu0 %v6123
  %6714 = vmatpush1.bf16.msra.mxu0 %v6122
  %6715 = vmatprep.subr.bf16.mxu0 %v6127
  %6716 = vmatpush1.bf16.msra.mxu0 %v6126
  %6717 = vmatprep.subr.bf16.mxu0 %v6131
  %6718 = vmatpush1.bf16.msra.mxu0 %v6130
  %6719 = vmatprep.subr.bf16.mxu0 %v6135
  %6720 = vmatpush1.bf16.msra.mxu0 %v6134
  %6721 = vmatprep.subr.bf16.mxu0 %v6139
  %6722 = vmatpush1.bf16.msra.mxu0 %v6138
  %6723 = vmatprep.subr.bf16.mxu0 %v6143
  %6724 = vmatpush1.bf16.msra.mxu0 %v6142
  %6725 = vmatprep.subr.bf16.mxu0 %v6147
  %6726 = vmatpush1.bf16.msra.mxu0 %v6146
  %6727 = vmatprep.subr.bf16.mxu0 %v6151
  %6728 = vmatpush1.bf16.msra.mxu0 %v6150
  %6729 = vmatprep.subr.bf16.mxu0 %v6155
  %6730 = vmatpush1.bf16.msra.mxu0 %v6154
  %6731 = vmatprep.subr.bf16.mxu0 %v6159
  %6732 = vmatpush1.bf16.msra.mxu0 %v6158
  %6733 = vmatprep.subr.bf16.mxu0 %v6163
  %6734 = vmatpush1.bf16.msra.mxu0 %v6162
  %6735 = vmatprep.subr.bf16.mxu0 %v6167
  %6736 = vmatpush1.bf16.msra.mxu0 %v6166
  %6737 = vmatprep.subr.bf16.mxu0 %v6171
  %6738 = vmatpush1.bf16.msra.mxu0 %v6170
  %6739 = vmatprep.mubr.bf16.mxu0 %v278
  %6740 = vmatmul.mubr.bf16.gmra.mrb[0].mxu0 %v277
  %v6741 = vpop.f32.mrb[0].mxu0
  %v6742 = vadd.f32 %v6699, %v6741
  %v6743 = vpop.f32.mrb[0].mxu0
  %v6744 = vadd.f32 %v6701, %v6743
  %v6745 = vpop.f32.mrb[0].mxu0
  %v6746 = vadd.f32 %v6703, %v6745
  %v6747 = vpop.f32.mrb[0].mxu0
  %v6748 = vadd.f32 %v6705, %v6747
  %6749 = vdwg.mxu0
  %6750 = vmatprep.subr.bf16.mxu0 %v6175
  %6751 = vmatpush1.bf16.msra.mxu0 %v6174
  %6752 = vmatprep.subr.bf16.mxu0 %v6179
  %6753 = vmatpush1.bf16.msra.mxu0 %v6178
  %6754 = vmatprep.subr.bf16.mxu0 %v6183
  %6755 = vmatpush1.bf16.msra.mxu0 %v6182
  %6756 = vmatprep.subr.bf16.mxu0 %v6187
  %6757 = vmatpush1.bf16.msra.mxu0 %v6186
  %6758 = vmatprep.subr.bf16.mxu0 %v6191
  %6759 = vmatpush1.bf16.msra.mxu0 %v6190
  %6760 = vmatprep.subr.bf16.mxu0 %v6195
  %6761 = vmatpush1.bf16.msra.mxu0 %v6194
  %6762 = vmatprep.subr.bf16.mxu0 %v6199
  %6763 = vmatpush1.bf16.msra.mxu0 %v6198
  %6764 = vmatprep.subr.bf16.mxu0 %v6203
  %6765 = vmatpush1.bf16.msra.mxu0 %v6202
  %6766 = vmatprep.subr.bf16.mxu0 %v6207
  %6767 = vmatpush1.bf16.msra.mxu0 %v6206
  %6768 = vmatprep.subr.bf16.mxu0 %v6211
  %6769 = vmatpush1.bf16.msra.mxu0 %v6210
  %6770 = vmatprep.subr.bf16.mxu0 %v6215
  %6771 = vmatpush1.bf16.msra.mxu0 %v6214
  %6772 = vmatprep.subr.bf16.mxu0 %v6219
  %6773 = vmatpush1.bf16.msra.mxu0 %v6218
  %6774 = vmatprep.subr.bf16.mxu0 %v6223
  %6775 = vmatpush1.bf16.msra.mxu0 %v6222
  %6776 = vmatprep.subr.bf16.mxu0 %v6227
  %6777 = vmatpush1.bf16.msra.mxu0 %v6226
  %6778 = vmatprep.subr.bf16.mxu0 %v6231
  %6779 = vmatpush1.bf16.msra.mxu0 %v6230
  %6780 = vmatprep.subr.bf16.mxu0 %v6235
  %6781 = vmatpush1.bf16.msra.mxu0 %v6234
  %6782 = vmatprep.mubr.bf16.mxu0 %v280
  %6783 = vmatmul.mubr.bf16.gmra.mrb[0].mxu0 %v279
  %v6784 = vpop.f32.mrb[0].mxu0
  %v6785 = vadd.f32 %v6742, %v6784
  %v6786 = vpop.f32.mrb[0].mxu0
  %v6787 = vadd.f32 %v6744, %v6786
  %v6788 = vpop.f32.mrb[0].mxu0
  %v6789 = vadd.f32 %v6746, %v6788
  %v6790 = vpop.f32.mrb[0].mxu0
  %v6791 = vadd.f32 %v6748, %v6790
  %6792 = vdwg.mxu0
  %6793 = vmatprep.subr.bf16.mxu0 %v6239
  %6794 = vmatpush1.bf16.msra.mxu0 %v6238
  %6795 = vmatprep.subr.bf16.mxu0 %v6243
  %6796 = vmatpush1.bf16.msra.mxu0 %v6242
  %6797 = vmatprep.subr.bf16.mxu0 %v6247
  %6798 = vmatpush1.bf16.msra.mxu0 %v6246
  %6799 = vmatprep.subr.bf16.mxu0 %v6251
  %6800 = vmatpush1.bf16.msra.mxu0 %v6250
  %6801 = vmatprep.subr.bf16.mxu0 %v6255
  %6802 = vmatpush1.bf16.msra.mxu0 %v6254
  %6803 = vmatprep.subr.bf16.mxu0 %v6259
  %6804 = vmatpush1.bf16.msra.mxu0 %v6258
  %6805 = vmatprep.subr.bf16.mxu0 %v6263
  %6806 = vmatpush1.bf16.msra.mxu0 %v6262
  %6807 = vmatprep.subr.bf16.mxu0 %v6267
  %6808 = vmatpush1.bf16.msra.mxu0 %v6266
  %6809 = vmatprep.subr.bf16.mxu0 0
  %6810 = vmatpush1.bf16.msra.mxu0 0
  %6811 = vmatprep.subr.bf16.mxu0 0
  %6812 = vmatpush1.bf16.msra.mxu0 0
  %6813 = vmatprep.subr.bf16.mxu0 0
  %6814 = vmatpush1.bf16.msra.mxu0 0
  %6815 = vmatprep.subr.bf16.mxu0 0
  %6816 = vmatpush1.bf16.msra.mxu0 0
  %6817 = vmatprep.subr.bf16.mxu0 0
  %6818 = vmatpush1.bf16.msra.mxu0 0
  %6819 = vmatprep.subr.bf16.mxu0 0
  %6820 = vmatpush1.bf16.msra.mxu0 0
  %6821 = vmatprep.subr.bf16.mxu0 0
  %6822 = vmatpush1.bf16.msra.mxu0 0
  %6823 = vmatprep.subr.bf16.mxu0 0
  %6824 = vmatpush1.bf16.msra.mxu0 0
  %6825 = vmatprep.mubr.bf16.mxu0 0
  %6826 = vmatmul.mubr.bf16.gmra.mrb[0].mxu0 %v281
  %v6827 = vpop.f32.mrb[0].mxu0
  %v6828 = vadd.f32 %v6785, %v6827
  %v6829 = vpop.f32.mrb[0].mxu0
  %v6830 = vadd.f32 %v6787, %v6829
  %v6831 = vpop.f32.mrb[0].mxu0
  %v6832 = vadd.f32 %v6789, %v6831
  %v6833 = vpop.f32.mrb[0].mxu0
  %v6834 = vadd.f32 %v6791, %v6833
  %6835 = vdwg.mxu0
  %v6836 = vmax.f32 %v5139, %v6656
  %v6837 = vmax.f32 %v5140, %v6658
  %v6838 = vmax.f32 %v5141, %v6828
  %v6839 = vmax.f32 %v5142, %v6830
  %v6840 = vmax.f32 %v5143, %v6660
  %v6841 = vmax.f32 %v5144, %v6662
  %v6842 = vmax.f32 %v5145, %v6832
  %v6843 = vmax.f32 %v5146, %v6834
  %v6844 = vld [vmem:[%s2] sm:$0xf]
  %v6846 = vlaneseq
  %v6847 = vshrl.u32 %v6846, 7
  %v6848 = vsub.s32 0, %v6847
  %v6849 = vrot.slane %v6844, %v6848
  %v6850 = vlaneseq
  %v6851 = vshrl.u32 %v6850, 7
  %v6852 = vsub.s32 1, %v6851
  %v6853 = vrot.slane %v6844, %v6852
  %v6854 = vlaneseq
  %v6855 = vshrl.u32 %v6854, 7
  %v6856 = vsub.s32 2, %v6855
  %v6857 = vrot.slane %v6844, %v6856
  %v6858 = vlaneseq
  %v6859 = vshrl.u32 %v6858, 7
  %v6860 = vsub.s32 3, %v6859
  %v6861 = vrot.slane %v6844, %v6860
  %v6866 = vadd.f32 %v6836, %v6849
  %v6867 = vadd.f32 %v6837, %v6853
  %v6868 = vadd.f32 %v6838, %v6857
  %v6869 = vadd.f32 %v6839, %v6861
  %v6870 = vadd.f32 %v6840, %v6849
  %v6871 = vadd.f32 %v6841, %v6853
  %v6872 = vadd.f32 %v6842, %v6857
  %v6873 = vadd.f32 %v6843, %v6861
  %v6874 = vmax.f32 %v6866, 0.0
  %v6875 = vmax.f32 %v6867, 0.0
  %v6876 = vmax.f32 %v6868, 0.0
  %v6877 = vmax.f32 %v6869, 0.0
  %v6878 = vmax.f32 %v6870, 0.0
  %v6879 = vmax.f32 %v6871, 0.0
  %v6880 = vmax.f32 %v6872, 0.0
  %v6881 = vmax.f32 %v6873, 0.0
  %v6882 = vpack.c.bf16 %v6878, %v6874
  %v6883 = vpack.c.bf16 %v6879, %v6875
  %v6884 = vpack.c.bf16 %v6880, %v6876
  %v6885 = vpack.c.bf16 %v6881, %v6877
  %v6886 = vld [vmem:[%s3] sm:$0xf]
  %v6887 = vld [vmem:[%s3 + $0x4] sm:$0xf]
  %v6888 = vld [vmem:[%s3 + $0x8] sm:$0xf]
  %v6889 = vld [vmem:[%s3 + $0xc] sm:$0xf]
  %v6890 = vld [vmem:[%s3 + $0x10] sm:$0xf]
  %v6891 = vld [vmem:[%s3 + $0x14] sm:$0xf]
  %v6892 = vld [vmem:[%s3 + $0x18] sm:$0xf]
  %v6893 = vld [vmem:[%s3 + $0x1c] sm:$0xf]
  %v6894 = vld [vmem:[%s3 + $0x20] sm:$0xf]
  %v6895 = vld [vmem:[%s3 + $0x24] sm:$0xf]
  %v6896 = vld [vmem:[%s3 + $0x28] sm:$0xf]
  %v6897 = vld [vmem:[%s3 + $0x2c] sm:$0xf]
  %v6898 = vld [vmem:[%s3 + $0x30] sm:$0xf]
  %v6899 = vld [vmem:[%s3 + $0x34] sm:$0xf]
  %v6900 = vld [vmem:[%s3 + $0x38] sm:$0xf]
  %v6901 = vld [vmem:[%s3 + $0x3c] sm:$0xf]
  %v6902 = vld [vmem:[%s3 + $0x40] sm:$0xf]
  %v6903 = vld [vmem:[%s3 + $0x44] sm:$0xf]
  %v6904 = vld [vmem:[%s3 + $0x48] sm:$0xf]
  %v6905 = vld [vmem:[%s3 + $0x4c] sm:$0xf]
  %v6906 = vld [vmem:[%s3 + $0x50] sm:$0xf]
  %v6907 = vld [vmem:[%s3 + $0x54] sm:$0xf]
  %v6908 = vld [vmem:[%s3 + $0x58] sm:$0xf]
  %v6909 = vld [vmem:[%s3 + $0x5c] sm:$0xf]
  %v6910 = vld [vmem:[%s3 + $0x60] sm:$0xf]
  %v6911 = vld [vmem:[%s3 + $0x64] sm:$0xf]
  %v6912 = vld [vmem:[%s3 + $0x68] sm:$0xf]
  %v6913 = vld [vmem:[%s3 + $0x6c] sm:$0xf]
  %v6914 = vld [vmem:[%s3 + $0x70] sm:$0xf]
  %v6915 = vld [vmem:[%s3 + $0x74] sm:$0xf]
  %v6916 = vld [vmem:[%s3 + $0x78] sm:$0xf]
  %v6917 = vld [vmem:[%s3 + $0x7c] sm:$0xf]
  %v6918 = vld [vmem:[%s3 + $0x80] sm:$0xf]
  %v6919 = vld [vmem:[%s3 + $0x84] sm:$0xf]
  %v6920 = vld [vmem:[%s3 + $0x88] sm:$0xf]
  %v6921 = vld [vmem:[%s3 + $0x8c] sm:$0xf]
  %v6922 = vld [vmem:[%s3 + $0x90] sm:$0xf]
  %v6923 = vld [vmem:[%s3 + $0x94] sm:$0xf]
  %v6924 = vld [vmem:[%s3 + $0x98] sm:$0xf]
  %v6925 = vld [vmem:[%s3 + $0x9c] sm:$0xf]
  %v6926 = vld [vmem:[%s3 + $0xa0] sm:$0xf]
  %v6927 = vld [vmem:[%s3 + $0xa4] sm:$0xf]
  %v6928 = vld [vmem:[%s3 + $0xa8] sm:$0xf]
  %v6929 = vld [vmem:[%s3 + $0xac] sm:$0xf]
  %v6930 = vld [vmem:[%s3 + $0xb0] sm:$0xf]
  %v6931 = vld [vmem:[%s3 + $0xb4] sm:$0xf]
  %v6932 = vld [vmem:[%s3 + $0xb8] sm:$0xf]
  %v6933 = vld [vmem:[%s3 + $0xbc] sm:$0xf]
  %v6934 = vld [vmem:[%s3 + $0xc0] sm:$0xf]
  %v6935 = vld [vmem:[%s3 + $0xc4] sm:$0xf]
  %v6936 = vld [vmem:[%s3 + $0xc8] sm:$0xf]
  %v6937 = vld [vmem:[%s3 + $0xcc] sm:$0xf]
  %v6938 = vld [vmem:[%s3 + $0xd0] sm:$0xf]
  %v6939 = vld [vmem:[%s3 + $0xd4] sm:$0xf]
  %v6940 = vld [vmem:[%s3 + $0xd8] sm:$0xf]
  %v6941 = vld [vmem:[%s3 + $0xdc] sm:$0xf]
  %v6942 = vld [vmem:[%s3 + $0xe0] sm:$0xf]
  %v6943 = vld [vmem:[%s3 + $0xe4] sm:$0xf]
  %v6944 = vld [vmem:[%s3 + $0xe8] sm:$0xf]
  %v6945 = vld [vmem:[%s3 + $0xec] sm:$0xf]
  %v6946 = vld [vmem:[%s3 + $0xf0] sm:$0xf]
  %v6947 = vld [vmem:[%s3 + $0xf4] sm:$0xf]
  %v6948 = vld [vmem:[%s3 + $0xf8] sm:$0xf]
  %v6949 = vld [vmem:[%s3 + $0xfc] sm:$0xf]
  %v6950 = vld [vmem:[%s4] sm:$0x1]
  %v6952 = vlaneseq
  %v6953 = vshrl.u32 %v6952, 7
  %v6954 = vsub.s32 0, %v6953
  %v6955 = vrot.slane %v6950, %v6954
  %v7021 = vunpack.c.l.b16 %v6886
  %v7022 = vunpack.c.l.b16 %v6887
  %v7023 = vunpack.c.l.b16 %v6888
  %v7024 = vunpack.c.l.b16 %v6889
  %v7025 = vunpack.c.l.b16 %v6890
  %v7026 = vunpack.c.l.b16 %v6891
  %v7027 = vunpack.c.l.b16 %v6892
  %v7028 = vunpack.c.l.b16 %v6893
  %v7029 = vunpack.c.l.b16 %v6894
  %v7030 = vunpack.c.l.b16 %v6895
  %v7031 = vunpack.c.l.b16 %v6896
  %v7032 = vunpack.c.l.b16 %v6897
  %v7033 = vunpack.c.l.b16 %v6898
  %v7034 = vunpack.c.l.b16 %v6899
  %v7035 = vunpack.c.l.b16 %v6900
  %v7036 = vunpack.c.l.b16 %v6901
  %v7037 = vunpack.c.l.b16 %v6902
  %v7038 = vunpack.c.l.b16 %v6903
  %v7039 = vunpack.c.l.b16 %v6904
  %v7040 = vunpack.c.l.b16 %v6905
  %v7041 = vunpack.c.l.b16 %v6906
  %v7042 = vunpack.c.l.b16 %v6907
  %v7043 = vunpack.c.l.b16 %v6908
  %v7044 = vunpack.c.l.b16 %v6909
  %v7045 = vunpack.c.l.b16 %v6910
  %v7046 = vunpack.c.l.b16 %v6911
  %v7047 = vunpack.c.l.b16 %v6912
  %v7048 = vunpack.c.l.b16 %v6913
  %v7049 = vunpack.c.l.b16 %v6914
  %v7050 = vunpack.c.l.b16 %v6915
  %v7051 = vunpack.c.l.b16 %v6916
  %v7052 = vunpack.c.l.b16 %v6917
  %v7053 = vunpack.c.l.b16 %v6918
  %v7054 = vunpack.c.l.b16 %v6919
  %v7055 = vunpack.c.l.b16 %v6920
  %v7056 = vunpack.c.l.b16 %v6921
  %v7057 = vunpack.c.l.b16 %v6922
  %v7058 = vunpack.c.l.b16 %v6923
  %v7059 = vunpack.c.l.b16 %v6924
  %v7060 = vunpack.c.l.b16 %v6925
  %v7061 = vunpack.c.l.b16 %v6926
  %v7062 = vunpack.c.l.b16 %v6927
  %v7063 = vunpack.c.l.b16 %v6928
  %v7064 = vunpack.c.l.b16 %v6929
  %v7065 = vunpack.c.l.b16 %v6930
  %v7066 = vunpack.c.l.b16 %v6931
  %v7067 = vunpack.c.l.b16 %v6932
  %v7068 = vunpack.c.l.b16 %v6933
  %v7069 = vunpack.c.l.b16 %v6934
  %v7070 = vunpack.c.l.b16 %v6935
  %v7071 = vunpack.c.l.b16 %v6936
  %v7072 = vunpack.c.l.b16 %v6937
  %v7073 = vunpack.c.l.b16 %v6938
  %v7074 = vunpack.c.l.b16 %v6939
  %v7075 = vunpack.c.l.b16 %v6940
  %v7076 = vunpack.c.l.b16 %v6941
  %v7077 = vunpack.c.l.b16 %v6942
  %v7078 = vunpack.c.l.b16 %v6943
  %v7079 = vunpack.c.l.b16 %v6944
  %v7080 = vunpack.c.l.b16 %v6945
  %v7081 = vunpack.c.l.b16 %v6946
  %v7082 = vunpack.c.l.b16 %v6947
  %v7083 = vunpack.c.l.b16 %v6948
  %v7084 = vunpack.c.l.b16 %v6949
  %v7085 = vpack.c.b16 %v7022, %v7021
  %v7086 = vpack.c.b16 %v7024, %v7023
  %v7087 = vpack.c.b16 %v7026, %v7025
  %v7088 = vpack.c.b16 %v7028, %v7027
  %v7089 = vpack.c.b16 %v7030, %v7029
  %v7090 = vpack.c.b16 %v7032, %v7031
  %v7091 = vpack.c.b16 %v7034, %v7033
  %v7092 = vpack.c.b16 %v7036, %v7035
  %v7093 = vpack.c.b16 %v7038, %v7037
  %v7094 = vpack.c.b16 %v7040, %v7039
  %v7095 = vpack.c.b16 %v7042, %v7041
  %v7096 = vpack.c.b16 %v7044, %v7043
  %v7097 = vpack.c.b16 %v7046, %v7045
  %v7098 = vpack.c.b16 %v7048, %v7047
  %v7099 = vpack.c.b16 %v7050, %v7049
  %v7100 = vpack.c.b16 %v7052, %v7051
  %v7101 = vpack.c.b16 %v7054, %v7053
  %v7102 = vpack.c.b16 %v7056, %v7055
  %v7103 = vpack.c.b16 %v7058, %v7057
  %v7104 = vpack.c.b16 %v7060, %v7059
  %v7105 = vpack.c.b16 %v7062, %v7061
  %v7106 = vpack.c.b16 %v7064, %v7063
  %v7107 = vpack.c.b16 %v7066, %v7065
  %v7108 = vpack.c.b16 %v7068, %v7067
  %v7109 = vpack.c.b16 %v7070, %v7069
  %v7110 = vpack.c.b16 %v7072, %v7071
  %v7111 = vpack.c.b16 %v7074, %v7073
  %v7112 = vpack.c.b16 %v7076, %v7075
  %v7113 = vpack.c.b16 %v7078, %v7077
  %v7114 = vpack.c.b16 %v7080, %v7079
  %v7115 = vpack.c.b16 %v7082, %v7081
  %v7116 = vpack.c.b16 %v7084, %v7083
  %7149 = vmatprep.subr.bf16.mxu0 0
  %7150 = vmatpush1.bf16.msra.mxu0 %v7085
  %7151 = vmatprep.subr.bf16.mxu0 0
  %7152 = vmatpush1.bf16.msra.mxu0 %v7086
  %7153 = vmatprep.subr.bf16.mxu0 0
  %7154 = vmatpush1.bf16.msra.mxu0 %v7087
  %7155 = vmatprep.subr.bf16.mxu0 0
  %7156 = vmatpush1.bf16.msra.mxu0 %v7088
  %7157 = vmatprep.subr.bf16.mxu0 0
  %7158 = vmatpush1.bf16.msra.mxu0 %v7089
  %7159 = vmatprep.subr.bf16.mxu0 0
  %7160 = vmatpush1.bf16.msra.mxu0 %v7090
  %7161 = vmatprep.subr.bf16.mxu0 0
  %7162 = vmatpush1.bf16.msra.mxu0 %v7091
  %7163 = vmatprep.subr.bf16.mxu0 0
  %7164 = vmatpush1.bf16.msra.mxu0 %v7092
  %7165 = vmatprep.subr.bf16.mxu0 0
  %7166 = vmatpush1.bf16.msra.mxu0 %v7093
  %7167 = vmatprep.subr.bf16.mxu0 0
  %7168 = vmatpush1.bf16.msra.mxu0 %v7094
  %7169 = vmatprep.subr.bf16.mxu0 0
  %7170 = vmatpush1.bf16.msra.mxu0 %v7095
  %7171 = vmatprep.subr.bf16.mxu0 0
  %7172 = vmatpush1.bf16.msra.mxu0 %v7096
  %7173 = vmatprep.subr.bf16.mxu0 0
  %7174 = vmatpush1.bf16.msra.mxu0 %v7097
  %7175 = vmatprep.subr.bf16.mxu0 0
  %7176 = vmatpush1.bf16.msra.mxu0 %v7098
  %7177 = vmatprep.subr.bf16.mxu0 0
  %7178 = vmatpush1.bf16.msra.mxu0 %v7099
  %7179 = vmatprep.subr.bf16.mxu0 0
  %7180 = vmatpush1.bf16.msra.mxu0 %v7100
  %7181 = vmatprep.mubr.bf16.mxu0 %v6883
  %7182 = vmatmul.mubr.bf16.gmra.mrb[0].mxu0 %v6882
  %v7183 = vpop.f32.mrb[0].mxu0
  %v7184 = vadd.f32 %v6955, %v7183
  %v7185 = vpop.f32.mrb[0].mxu0
  %v7186 = vpop.f32.mrb[0].mxu0
  %v7187 = vadd.f32 %v6955, %v7186
  %v7188 = vpop.f32.mrb[0].mxu0
  %7189 = vdwg.mxu0
  %7190 = vmatprep.subr.bf16.mxu0 0
  %7191 = vmatpush1.bf16.msra.mxu0 %v7101
  %7192 = vmatprep.subr.bf16.mxu0 0
  %7193 = vmatpush1.bf16.msra.mxu0 %v7102
  %7194 = vmatprep.subr.bf16.mxu0 0
  %7195 = vmatpush1.bf16.msra.mxu0 %v7103
  %7196 = vmatprep.subr.bf16.mxu0 0
  %7197 = vmatpush1.bf16.msra.mxu0 %v7104
  %7198 = vmatprep.subr.bf16.mxu0 0
  %7199 = vmatpush1.bf16.msra.mxu0 %v7105
  %7200 = vmatprep.subr.bf16.mxu0 0
  %7201 = vmatpush1.bf16.msra.mxu0 %v7106
  %7202 = vmatprep.subr.bf16.mxu0 0
  %7203 = vmatpush1.bf16.msra.mxu0 %v7107
  %7204 = vmatprep.subr.bf16.mxu0 0
  %7205 = vmatpush1.bf16.msra.mxu0 %v7108
  %7206 = vmatprep.subr.bf16.mxu0 0
  %7207 = vmatpush1.bf16.msra.mxu0 %v7109
  %7208 = vmatprep.subr.bf16.mxu0 0
  %7209 = vmatpush1.bf16.msra.mxu0 %v7110
  %7210 = vmatprep.subr.bf16.mxu0 0
  %7211 = vmatpush1.bf16.msra.mxu0 %v7111
  %7212 = vmatprep.subr.bf16.mxu0 0
  %7213 = vmatpush1.bf16.msra.mxu0 %v7112
  %7214 = vmatprep.subr.bf16.mxu0 0
  %7215 = vmatpush1.bf16.msra.mxu0 %v7113
  %7216 = vmatprep.subr.bf16.mxu0 0
  %7217 = vmatpush1.bf16.msra.mxu0 %v7114
  %7218 = vmatprep.subr.bf16.mxu0 0
  %7219 = vmatpush1.bf16.msra.mxu0 %v7115
  %7220 = vmatprep.subr.bf16.mxu0 0
  %7221 = vmatpush1.bf16.msra.mxu0 %v7116
  %7222 = vmatprep.mubr.bf16.mxu0 %v6885
  %7223 = vmatmul.mubr.bf16.gmra.mrb[0].mxu0 %v6884
  %v7224 = vpop.f32.mrb[0].mxu0
  %v7225 = vadd.f32 %v7184, %v7224
  %v7226 = vpop.f32.mrb[0].mxu0
  %v7227 = vpop.f32.mrb[0].mxu0
  %v7228 = vadd.f32 %v7187, %v7227
  %v7229 = vpop.f32.mrb[0].mxu0
  %7230 = vdwg.mxu0
  %v7231 = vmax.f32 %v7225, 0.0
  %v7232 = vmax.f32 %v7228, 0.0
  %7233 = vst [vmem:[%s5] sm:$0xff] %v7231
  %7234 = vst [vmem:[%s5 + $0x8] sm:$0xff] %v7232
  // Predicated region
  $region22: #{lenet_forward.1} parent=0 // pred_check
    _
  $region23: #{lenet_forward.1} parent=0 // pred_check_branch
    %7236 = sbr.rel (0) target = $region25
  $region24: #{lenet_forward.1} parent=0 // pred_region
    _
  $region25: #{lenet_forward.1} parent=0 // pred_fallthru
    _
  // Predicated region
  $region26: #{lenet_forward.1} parent=0 // pred_check
    _
  $region27: #{lenet_forward.1} parent=0 // pred_check_branch
    %7238 = sbr.rel (0) target = $region29
  $region28: #{lenet_forward.1} parent=0 // pred_region
    _
  $region29: #{lenet_forward.1} parent=0 // pred_fallthru
    _

</llo_original>
